<compile_context>
chip_gen: v6e
topology: v6e:2x2x1
jax: 0.10.0
libtpu: 0.0.40
codegen_flags: <defaults>
</compile_context>

<pallas_src>
import functools
import math

import numpy as np
import jax
import jax.numpy as jnp
from jax.experimental import pallas as pl
from jax.experimental.pallas import tpu as pltpu


# ----------------------------------------------------------------------------
# Fused kernel
# ----------------------------------------------------------------------------

def _luv_kernel(x_ref, encw_ref, encb_ref, padmat_ref, qmat_ref, abias_ref,
                emat_ref, tilemat_ref, segsum_ref, bcast_ref, shift_ref,
                convw_ref, bnscale_ref, bnshift_ref,
                fc1w_ref, fc1b_ref, fc2w_ref, fc2b_ref,
                out1w_ref, out1b_ref, out2w_ref, out2b_ref,
                out_ref, attn_ref,
                hvid_ref, convh_ref, acc_ref,
                *, K, BT, F, inv_T):
    j = pl.program_id(0)

    @pl.when(j == 0)
    def _frontend():
        # ---- encoder (Linear stand-in) ----------------------------------
        h = (jnp.dot(x_ref[...], encw_ref[...],
                     preferred_element_type=jnp.float32) + encb_ref[...])

        # ---- pad(h, num_frames): one selection matmul, zeros past length -
        hpad = jnp.dot(padmat_ref[...], h,
                       preferred_element_type=jnp.float32)          # (BT, F)

        # ---- multi-head attention pooling --------------------------------
        # All num_out*H scores with a single matmul against the
        # block-diagonal, pre-scaled query matrix; padded frames get an
        # additive -50 (matches the reference's alpha[n:, ix] = -50).
        alpha = (jnp.dot(hpad, qmat_ref[...],
                         preferred_element_type=jnp.float32) + abias_ref[...])
        m = jnp.max(alpha, axis=0, keepdims=True)      # per-column shift (exact)
        e = jnp.exp(alpha - m)
        seg = jnp.dot(segsum_ref[...], e,
                      preferred_element_type=jnp.float32)           # (B, noh)
        denom = jnp.dot(bcast_ref[...], seg,
                        preferred_element_type=jnp.float32)         # (BT, noh)
        attn = e / denom                                             # segmented softmax
        attn_ref[...] = attn

        w_full = jnp.dot(attn, emat_ref[...],
                         preferred_element_type=jnp.float32)        # (BT, num_out*F)
        h_rep = jnp.dot(hpad, tilemat_ref[...],
                        preferred_element_type=jnp.float32)         # (BT, num_out*F)
        hvid_ref[...] = jnp.dot(segsum_ref[...], w_full * h_rep,
                                preferred_element_type=jnp.float32)  # (B, num_out*F)

        # ---- Conv1d(same, no bias) -> BN(eval folded) -> ReLU -> GAP -----
        conv = jnp.zeros((BT, F), jnp.float32)
        for k in range(K):                                           # static, K small
            shifted = jnp.dot(shift_ref[k * BT:(k + 1) * BT, :], hpad,
                              preferred_element_type=jnp.float32)    # (BT, F)
            conv += jnp.dot(shifted, convw_ref[k * F:(k + 1) * F, :],
                            preferred_element_type=jnp.float32)
        y = jnp.maximum(conv * bnscale_ref[...] + bnshift_ref[...], 0.0)
        convh_ref[...] = jnp.dot(segsum_ref[...], y,
                                 preferred_element_type=jnp.float32) * inv_T

        acc_ref[...] = jnp.zeros_like(acc_ref)

    # ---- attn_fc: Linear(d_in,4096) -> ReLU -> Linear(4096,F), tiled -----
    # One N-tile of fc1 contracted immediately into fc2, so the (B, 4096)
    # activation never leaves vregs/VMEM and the weight tiles stream
    # (double-buffered by BlockSpec) behind the matmuls.
    a1 = jnp.maximum(
        jnp.dot(hvid_ref[...], fc1w_ref[...],
                preferred_element_type=jnp.float32) + fc1b_ref[...], 0.0)
    acc_ref[...] += jnp.dot(a1, fc2w_ref[...],
                            preferred_element_type=jnp.float32)

    @pl.when(j == pl.num_programs(0) - 1)
    def _backend():
        combined = acc_ref[...] + fc2b_ref[...] + convh_ref[...]
        o1 = jnp.maximum(
            jnp.dot(combined, out1w_ref[...],
                    preferred_element_type=jnp.float32) + out1b_ref[...], 0.0)
        # TODO(synk): nn.Dropout(p=0.5) is inference-mode identity here.
        out_ref[...] = (jnp.dot(o1, out2w_ref[...],
                                preferred_element_type=jnp.float32)
                        + out2b_ref[...])


# ----------------------------------------------------------------------------
# Host-side structural constants (depend only on static num_frames / K)
# ----------------------------------------------------------------------------

def _build_structural_mats(num_frames, T, K, noh):
    B = len(num_frames)
    BT = B * T
    N_total = sum(num_frames)
    pad_t = (K - 1) // 2
    padmat = np.zeros((BT, N_total), np.float32)   # zero-pad scatter
    abias = np.zeros((BT, noh), np.float32)        # -50 on padded frames
    segsum = np.zeros((B, BT), np.float32)         # per-video time reduction
    bcast = np.zeros((BT, B), np.float32)          # broadcast per-video back to T
    shift = np.zeros((K * BT, BT), np.float32)     # Conv1d 'same' tap shifts
    off = 0
    for b, n in enumerate(num_frames):
        for t in range(T):
            segsum[b, b * T + t] = 1.0
            bcast[b * T + t, b] = 1.0
            if t < n:
                padmat[b * T + t, off + t] = 1.0
            else:
                abias[b * T + t, :] = -50.0
            for k in range(K):
                src = t + k - pad_t
                if 0 <= src < T:
                    shift[k * BT + b * T + t, b * T + src] = 1.0
        off += n
    return padmat, abias, segsum, bcast, shift


# ----------------------------------------------------------------------------
# Parameter preparation (done once, outside the hot path)
# ----------------------------------------------------------------------------

def prepare_params(p, *, num_heads, num_out, kernel_width, bn_eps=1e-5):
    F = p["enc_w"].shape[1]
    H = num_heads
    S = F // H
    K = kernel_width
    scale = math.sqrt(S)

    # Block-diagonal, pre-scaled query matrix (F, num_out*H); head->feature
    # expansion matrix (num_out*H, num_out*F); feature tiling matrix.
    q = np.asarray(p["qvecs"], np.float32) / scale          # (num_out, H, S)
    qmat = np.zeros((F, num_out * H), np.float32)
    emat = np.zeros((num_out * H, num_out * F), np.float32)
    for i in range(num_out):
        for hh in range(H):
            qmat[hh * S:(hh + 1) * S, i * H + hh] = q[i, hh]
            emat[i * H + hh, i * F + hh * S:i * F + (hh + 1) * S] = 1.0
    tilemat = np.zeros((F, num_out * F), np.float32)
    for i in range(num_out):
        tilemat[np.arange(F), i * F + np.arange(F)] = 1.0

    # Conv1d weight (F_out, F_in, K) -> per-tap stacked (K*F_in, F_out).
    w = np.asarray(p["conv_w"], np.float32)
    conv_w = np.concatenate([w[:, :, k].T for k in range(K)], axis=0)

    # Eval-mode BatchNorm folded into a per-channel scale / shift.
    gamma = np.asarray(p["bn_gamma"], np.float32)
    inv_std = 1.0 / np.sqrt(np.asarray(p["bn_var"], np.float32) + bn_eps)
    bn_scale = (gamma * inv_std).reshape(1, F)
    bn_shift = (np.asarray(p["bn_beta"], np.float32)
                - np.asarray(p["bn_mean"], np.float32) * gamma * inv_std
                ).reshape(1, F)

    return {
        "enc_w": jnp.asarray(p["enc_w"], jnp.float32),
        "enc_b": jnp.asarray(p["enc_b"], jnp.float32).reshape(1, F),
        "qmat": jnp.asarray(qmat),
        "emat": jnp.asarray(emat),
        "tilemat": jnp.asarray(tilemat),
        "conv_w": jnp.asarray(conv_w),
        "bn_scale": jnp.asarray(bn_scale),
        "bn_shift": jnp.asarray(bn_shift),
        "fc1_w": jnp.asarray(p["fc1_w"], jnp.float32),
        "fc1_b": jnp.asarray(p["fc1_b"], jnp.float32).reshape(1, -1),
        "fc2_w": jnp.asarray(p["fc2_w"], jnp.float32),
        "fc2_b": jnp.asarray(p["fc2_b"], jnp.float32).reshape(1, F),
        "out1_w": jnp.asarray(p["out1_w"], jnp.float32),
        "out1_b": jnp.asarray(p["out1_b"], jnp.float32).reshape(1, -1),
        "out2_w": jnp.asarray(p["out2_w"], jnp.float32),
        "out2_b": jnp.asarray(p["out2_b"], jnp.float32).reshape(1, -1),
    }


# ----------------------------------------------------------------------------
# Forward
# ----------------------------------------------------------------------------

def luv_net_forward(kp, x, num_frames, *, num_heads, num_out, tile_n=512):
    num_frames = tuple(int(n) for n in num_frames)
    B = len(num_frames)
    T = max(num_frames)
    BT = B * T
    N_total = sum(num_frames)
    F = kp["enc_w"].shape[1]
    noh = num_out * num_heads
    d_in = num_out * F
    K = kp["conv_w"].shape[0] // F
    hidden = kp["fc1_w"].shape[1]
    mid = kp["out1_w"].shape[1]
    assert hidden % tile_n == 0
    nt = hidden // tile_n

    padmat, abias, segsum, bcast, shift = _build_structural_mats(
        num_frames, T, K, noh)

    kernel = functools.partial(_luv_kernel, K=K, BT=BT, F=F, inv_T=1.0 / T)

    def const(shape):
        return pl.BlockSpec(shape, lambda j: (0, 0))

    output, attn_flat = pl.pallas_call(
        kernel,
        out_shape=(
            jax.ShapeDtypeStruct((B, num_out), jnp.float32),   # output
            jax.ShapeDtypeStruct((BT, noh), jnp.float32),      # attn (flat)
        ),
        grid=(nt,),
        in_specs=[
            const(x.shape),                                    # x
            const(kp["enc_w"].shape),                          # enc_w
            const((1, F)),                                     # enc_b
            const((BT, N_total)),                              # padmat
            const((F, noh)),                                   # qmat
            const((BT, noh)),                                  # abias
            const((noh, d_in)),                                # emat
            const((F, d_in)),                                  # tilemat
            const((B, BT)),                                    # segsum
            const((BT, B)),                                    # bcast
            const((K * BT, BT)),                               # shift
            const((K * F, F)),                                 # conv_w
            const((1, F)),                                     # bn_scale
            const((1, F)),                                     # bn_shift
            pl.BlockSpec((d_in, tile_n), lambda j: (0, j)),    # fc1_w tile
            pl.BlockSpec((1, tile_n), lambda j: (0, j)),       # fc1_b tile
            pl.BlockSpec((tile_n, F), lambda j: (j, 0)),       # fc2_w tile
            const((1, F)),                                     # fc2_b
            const((F, mid)),                                   # out1_w
            const((1, mid)),                                   # out1_b
            const((mid, num_out)),                             # out2_w
            const((1, num_out)),                               # out2_b
        ],
        out_specs=(const((B, num_out)), const((BT, noh))),
        scratch_shapes=[
            pltpu.VMEM((B, d_in), jnp.float32),                # hvid
            pltpu.VMEM((B, F), jnp.float32),                   # conv_h
            pltpu.VMEM((B, F), jnp.float32),                   # fc2 accumulator
        ],
        compiler_params=pltpu.CompilerParams(
            dimension_semantics=("arbitrary",)),
    )(x, kp["enc_w"], kp["enc_b"], jnp.asarray(padmat), kp["qmat"],
      jnp.asarray(abias), kp["emat"], kp["tilemat"], jnp.asarray(segsum),
      jnp.asarray(bcast), jnp.asarray(shift), kp["conv_w"], kp["bn_scale"],
      kp["bn_shift"], kp["fc1_w"], kp["fc1_b"], kp["fc2_w"], kp["fc2_b"],
      kp["out1_w"], kp["out1_b"], kp["out2_w"], kp["out2_b"])

    # Kernel emits attention in its lane-dense compute layout; one cheap
    # transpose outside the hot path recovers the reference (num_out, T, B, H).
    attn = attn_flat.reshape(B, T, num_out, num_heads).transpose(2, 1, 0, 3)
    return output, attn


# ----------------------------------------------------------------------------
# Main
# ----------------------------------------------------------------------------

if __name__ == "__main__":
    D_in = 16           # stand-in encoder input feature size
    F = 32              # encoder.num_features
    H = 4               # num_heads
    S = F // H
    NUM_OUT = 4
    KW = 5              # kernel_width
    ATTN_HIDDEN = 4096  # hardcoded in LUV_Net.attn_fc
    num_frames = (8, 6)
    B = len(num_frames)
    N_total = sum(num_frames)

    key = jax.random.PRNGKey(0)
    ks = jax.random.split(key, 12)

    raw_params = {
        "enc_w": 0.1 * jax.random.normal(ks[0], (D_in, F), jnp.float32),
        "enc_b": 0.1 * jax.random.normal(ks[1], (F,), jnp.float32),
        "qvecs": jax.random.normal(ks[2], (NUM_OUT, H, S), jnp.float32),
        "conv_w": (1.0 / math.sqrt(F * KW)) *
                  jax.random.normal(ks[3], (F, F, KW), jnp.float32),
        "bn_gamma": jnp.ones((F,), jnp.float32),
        "bn_beta": jnp.zeros((F,), jnp.float32),
        "bn_mean": jnp.zeros((F,), jnp.float32),   # eval-mode running stats
        "bn_var": jnp.ones((F,), jnp.float32),
        "fc1_w": 0.05 * jax.random.normal(ks[4], (NUM_OUT * F, ATTN_HIDDEN),
                                          jnp.float32),
        "fc1_b": 0.05 * jax.random.normal(ks[5], (ATTN_HIDDEN,), jnp.float32),
        "fc2_w": 0.02 * jax.random.normal(ks[6], (ATTN_HIDDEN, F), jnp.float32),
        "fc2_b": 0.02 * jax.random.normal(ks[7], (F,), jnp.float32),
        "out1_w": 0.05 * jax.random.normal(ks[8], (F, 512), jnp.float32),
        "out1_b": 0.05 * jax.random.normal(ks[9], (512,), jnp.float32),
        "out2_w": 0.05 * jax.random.normal(ks[10], (512, NUM_OUT), jnp.float32),
        "out2_b": jnp.zeros((NUM_OUT,), jnp.float32),
    }

    kparams = prepare_params(raw_params, num_heads=H, num_out=NUM_OUT,
                             kernel_width=KW)
    x = jax.random.normal(ks[11], (N_total, D_in), jnp.float32)

    @functools.partial(jax.jit, static_argnames=("num_frames",))
    def fwd(kp, xin, *, num_frames):
        return luv_net_forward(kp, xin, num_frames,
                               num_heads=H, num_out=NUM_OUT)

    output, attn = fwd(kparams, x, num_frames=num_frames)
    jax.block_until_ready(output)
    jax.block_until_ready(attn)

    assert output.shape == (B, NUM_OUT)
    assert attn.shape == (NUM_OUT, max(num_frames), B, H)
    assert bool(jnp.all(jnp.isfinite(output)))
    assert bool(jnp.all(jnp.isfinite(attn)))
    # Per-video attention weights must sum to 1 over time for every head/out.
    assert bool(jnp.all(jnp.abs(jnp.sum(attn, axis=1) - 1.0) < 1e-4))

    print("KERNEL_OK")
</pallas_src>

<mosaic_0001>
module attributes {stable_mosaic.version = 11 : i64} {
  func.func @_luv_kernel(%arg0: i32, %arg1: memref<14x16xf32, #tpu.memory_space<vmem>>, %arg2: memref<16x32xf32, #tpu.memory_space<vmem>>, %arg3: memref<1x32xf32, #tpu.memory_space<vmem>>, %arg4: memref<16x14xf32, #tpu.memory_space<vmem>>, %arg5: memref<32x16xf32, #tpu.memory_space<vmem>>, %arg6: memref<16x16xf32, #tpu.memory_space<vmem>>, %arg7: memref<16x128xf32, #tpu.memory_space<vmem>>, %arg8: memref<32x128xf32, #tpu.memory_space<vmem>>, %arg9: memref<2x16xf32, #tpu.memory_space<vmem>>, %arg10: memref<16x2xf32, #tpu.memory_space<vmem>>, %arg11: memref<80x16xf32, #tpu.memory_space<vmem>>, %arg12: memref<160x32xf32, #tpu.memory_space<vmem>>, %arg13: memref<1x32xf32, #tpu.memory_space<vmem>>, %arg14: memref<1x32xf32, #tpu.memory_space<vmem>>, %arg15: memref<128x512xf32, #tpu.memory_space<vmem>>, %arg16: memref<1x512xf32, #tpu.memory_space<vmem>>, %arg17: memref<512x32xf32, #tpu.memory_space<vmem>>, %arg18: memref<1x32xf32, #tpu.memory_space<vmem>>, %arg19: memref<32x512xf32, #tpu.memory_space<vmem>>, %arg20: memref<1x512xf32, #tpu.memory_space<vmem>>, %arg21: memref<512x4xf32, #tpu.memory_space<vmem>>, %arg22: memref<1x4xf32, #tpu.memory_space<vmem>>, %arg23: memref<2x4xf32, #tpu.memory_space<vmem>>, %arg24: memref<16x16xf32, #tpu.memory_space<vmem>>, %arg25: memref<2x128xf32, #tpu.memory_space<vmem>>, %arg26: memref<2x32xf32, #tpu.memory_space<vmem>>, %arg27: memref<2x32xf32, #tpu.memory_space<vmem>>) attributes {dimension_semantics = [#tpu.dimension_semantics<arbitrary>], iteration_bounds = array<i64: 8>, scalar_prefetch = 0 : i64, scratch_operands = 3 : i64, tpu.core_type = #tpu.core_type<tc>, window_params = [{pipeline_mode = #tpu.pipeline_mode<synchronous>, transform_indices = @transform_0, window_bounds = array<i64: 14, 16>}, {pipeline_mode = #tpu.pipeline_mode<synchronous>, transform_indices = @transform_1, window_bounds = array<i64: 16, 32>}, {pipeline_mode = #tpu.pipeline_mode<synchronous>, transform_indices = @transform_2, window_bounds = array<i64: 1, 32>}, {pipeline_mode = #tpu.pipeline_mode<synchronous>, transform_indices = @transform_3, window_bounds = array<i64: 16, 14>}, {pipeline_mode = #tpu.pipeline_mode<synchronous>, transform_indices = @transform_4, window_bounds = array<i64: 32, 16>}, {pipeline_mode = #tpu.pipeline_mode<synchronous>, transform_indices = @transform_5, window_bounds = array<i64: 16, 16>}, {pipeline_mode = #tpu.pipeline_mode<synchronous>, transform_indices = @transform_6, window_bounds = array<i64: 16, 128>}, {pipeline_mode = #tpu.pipeline_mode<synchronous>, transform_indices = @transform_7, window_bounds = array<i64: 32, 128>}, {pipeline_mode = #tpu.pipeline_mode<synchronous>, transform_indices = @transform_8, window_bounds = array<i64: 2, 16>}, {pipeline_mode = #tpu.pipeline_mode<synchronous>, transform_indices = @transform_9, window_bounds = array<i64: 16, 2>}, {pipeline_mode = #tpu.pipeline_mode<synchronous>, transform_indices = @transform_10, window_bounds = array<i64: 80, 16>}, {pipeline_mode = #tpu.pipeline_mode<synchronous>, transform_indices = @transform_11, window_bounds = array<i64: 160, 32>}, {pipeline_mode = #tpu.pipeline_mode<synchronous>, transform_indices = @transform_12, window_bounds = array<i64: 1, 32>}, {pipeline_mode = #tpu.pipeline_mode<synchronous>, transform_indices = @transform_13, window_bounds = array<i64: 1, 32>}, {transform_indices = @transform_14, window_bounds = array<i64: 128, 512>}, {transform_indices = @transform_15, window_bounds = array<i64: 1, 512>}, {transform_indices = @transform_16, window_bounds = array<i64: 512, 32>}, {pipeline_mode = #tpu.pipeline_mode<synchronous>, transform_indices = @transform_17, window_bounds = array<i64: 1, 32>}, {pipeline_mode = #tpu.pipeline_mode<synchronous>, transform_indices = @transform_18, window_bounds = array<i64: 32, 512>}, {pipeline_mode = #tpu.pipeline_mode<synchronous>, transform_indices = @transform_19, window_bounds = array<i64: 1, 512>}, {pipeline_mode = #tpu.pipeline_mode<synchronous>, transform_indices = @transform_20, window_bounds = array<i64: 512, 4>}, {pipeline_mode = #tpu.pipeline_mode<synchronous>, transform_indices = @transform_21, window_bounds = array<i64: 1, 4>}, {pipeline_mode = #tpu.pipeline_mode<synchronous>, transform_indices = @transform_22, window_bounds = array<i64: 2, 4>}, {pipeline_mode = #tpu.pipeline_mode<synchronous>, transform_indices = @transform_23, window_bounds = array<i64: 16, 16>}]} {
    %c0_i32 = arith.constant 0 : i32
    %0 = arith.cmpi eq, %arg0, %c0_i32 : i32
    %1 = arith.extui %0 : i1 to i32
    %c0_i32_0 = arith.constant 0 : i32
    %2 = arith.cmpi ne, %1, %c0_i32_0 : i32
    scf.if %2 {
      %c0_15 = arith.constant 0 : index
      %c0_16 = arith.constant 0 : index
      %19 = vector.load %arg1[%c0_15, %c0_16] : memref<14x16xf32, #tpu.memory_space<vmem>>, vector<14x16xf32>
      %c0_17 = arith.constant 0 : index
      %c0_18 = arith.constant 0 : index
      %20 = vector.load %arg2[%c0_17, %c0_18] : memref<16x32xf32, #tpu.memory_space<vmem>>, vector<16x32xf32>
      %cst_19 = arith.constant dense<0.000000e+00> : vector<14x32xf32>
      %21 = tpu.matmul %19, %20, %cst_19 {dimension_numbers = #tpu.dot_dimension_numbers<[1], [0], [0], [1], [0, 0, 1, 1], [], []>} : vector<14x16xf32>, vector<16x32xf32>, vector<14x32xf32> -> vector<14x32xf32>
      %c0_20 = arith.constant 0 : index
      %c0_21 = arith.constant 0 : index
      %22 = vector.load %arg3[%c0_20, %c0_21] : memref<1x32xf32, #tpu.memory_space<vmem>>, vector<1x32xf32>
      %23 = vector.broadcast %22 : vector<1x32xf32> to vector<14x32xf32>
      %24 = arith.addf %21, %23 : vector<14x32xf32>
      %c0_22 = arith.constant 0 : index
      %c0_23 = arith.constant 0 : index
      %25 = vector.load %arg4[%c0_22, %c0_23] : memref<16x14xf32, #tpu.memory_space<vmem>>, vector<16x14xf32>
      %cst_24 = arith.constant dense<0.000000e+00> : vector<16x32xf32>
      %26 = tpu.matmul %25, %24, %cst_24 {dimension_numbers = #tpu.dot_dimension_numbers<[1], [0], [0], [1], [0, 0, 1, 1], [], []>} : vector<16x14xf32>, vector<14x32xf32>, vector<16x32xf32> -> vector<16x32xf32>
      %c0_25 = arith.constant 0 : index
      %c0_26 = arith.constant 0 : index
      %27 = vector.load %arg5[%c0_25, %c0_26] : memref<32x16xf32, #tpu.memory_space<vmem>>, vector<32x16xf32>
      %cst_27 = arith.constant dense<0.000000e+00> : vector<16x16xf32>
      %28 = tpu.matmul %26, %27, %cst_27 {dimension_numbers = #tpu.dot_dimension_numbers<[1], [0], [0], [1], [0, 0, 1, 1], [], []>} : vector<16x32xf32>, vector<32x16xf32>, vector<16x16xf32> -> vector<16x16xf32>
      %c0_28 = arith.constant 0 : index
      %c0_29 = arith.constant 0 : index
      %29 = vector.load %arg6[%c0_28, %c0_29] : memref<16x16xf32, #tpu.memory_space<vmem>>, vector<16x16xf32>
      %30 = arith.addf %28, %29 : vector<16x16xf32>
      %cst_30 = arith.constant dense<0xFF800000> : vector<16xf32>
      %31 = vector.multi_reduction <maximumf>, %30, %cst_30 [0] : vector<16x16xf32> to vector<16xf32>
      %32 = vector.shape_cast %31 : vector<16xf32> to vector<1x16xf32>
      %33 = vector.broadcast %32 : vector<1x16xf32> to vector<16x16xf32>
      %34 = arith.subf %30, %33 : vector<16x16xf32>
      %35 = math.exp %34 : vector<16x16xf32>
      %c0_31 = arith.constant 0 : index
      %c0_32 = arith.constant 0 : index
      %36 = vector.load %arg9[%c0_31, %c0_32] : memref<2x16xf32, #tpu.memory_space<vmem>>, vector<2x16xf32>
      %cst_33 = arith.constant dense<0.000000e+00> : vector<2x16xf32>
      %37 = tpu.matmul %36, %35, %cst_33 {dimension_numbers = #tpu.dot_dimension_numbers<[1], [0], [0], [1], [0, 0, 1, 1], [], []>} : vector<2x16xf32>, vector<16x16xf32>, vector<2x16xf32> -> vector<2x16xf32>
      %c0_34 = arith.constant 0 : index
      %c0_35 = arith.constant 0 : index
      %38 = vector.load %arg10[%c0_34, %c0_35] : memref<16x2xf32, #tpu.memory_space<vmem>>, vector<16x2xf32>
      %cst_36 = arith.constant dense<0.000000e+00> : vector<16x16xf32>
      %39 = tpu.matmul %38, %37, %cst_36 {dimension_numbers = #tpu.dot_dimension_numbers<[1], [0], [0], [1], [0, 0, 1, 1], [], []>} : vector<16x2xf32>, vector<2x16xf32>, vector<16x16xf32> -> vector<16x16xf32>
      %40 = arith.divf %35, %39 : vector<16x16xf32>
      %c0_37 = arith.constant 0 : index
      %c0_38 = arith.constant 0 : index
      %41 = vector.load %arg24[%c0_37, %c0_38] : memref<16x16xf32, #tpu.memory_space<vmem>>, vector<16x16xf32>
      tpu.vector_store %arg24[%c0_37, %c0_38], %40 {strides = array<i32>} : memref<16x16xf32, #tpu.memory_space<vmem>>, vector<16x16xf32>,
      %c0_39 = arith.constant 0 : index
      %c0_40 = arith.constant 0 : index
      %42 = vector.load %arg7[%c0_39, %c0_40] : memref<16x128xf32, #tpu.memory_space<vmem>>, vector<16x128xf32>
      %cst_41 = arith.constant dense<0.000000e+00> : vector<16x128xf32>
      %43 = tpu.matmul %40, %42, %cst_41 {dimension_numbers = #tpu.dot_dimension_numbers<[1], [0], [0], [1], [0, 0, 1, 1], [], []>} : vector<16x16xf32>, vector<16x128xf32>, vector<16x128xf32> -> vector<16x128xf32>
      %c0_42 = arith.constant 0 : index
      %c0_43 = arith.constant 0 : index
      %44 = vector.load %arg8[%c0_42, %c0_43] : memref<32x128xf32, #tpu.memory_space<vmem>>, vector<32x128xf32>
      %cst_44 = arith.constant dense<0.000000e+00> : vector<16x128xf32>
      %45 = tpu.matmul %26, %44, %cst_44 {dimension_numbers = #tpu.dot_dimension_numbers<[1], [0], [0], [1], [0, 0, 1, 1], [], []>} : vector<16x32xf32>, vector<32x128xf32>, vector<16x128xf32> -> vector<16x128xf32>
      %c0_45 = arith.constant 0 : index
      %c0_46 = arith.constant 0 : index
      %46 = vector.load %arg9[%c0_45, %c0_46] : memref<2x16xf32, #tpu.memory_space<vmem>>, vector<2x16xf32>
      %47 = arith.mulf %43, %45 : vector<16x128xf32>
      %cst_47 = arith.constant dense<0.000000e+00> : vector<2x128xf32>
      %48 = tpu.matmul %46, %47, %cst_47 {dimension_numbers = #tpu.dot_dimension_numbers<[1], [0], [0], [1], [0, 0, 1, 1], [], []>} : vector<2x16xf32>, vector<16x128xf32>, vector<2x128xf32> -> vector<2x128xf32>
      %c0_48 = arith.constant 0 : index
      %c0_49 = arith.constant 0 : index
      %49 = vector.load %arg25[%c0_48, %c0_49] : memref<2x128xf32, #tpu.memory_space<vmem>>, vector<2x128xf32>
      tpu.vector_store %arg25[%c0_48, %c0_49], %48 {strides = array<i32>} : memref<2x128xf32, #tpu.memory_space<vmem>>, vector<2x128xf32>,
      %cst_50 = arith.constant 0.000000e+00 : f32
      %50 = vector.broadcast %cst_50 : f32 to vector<16x32xf32>
      %c0_51 = arith.constant 0 : index
      %c0_52 = arith.constant 0 : index
      %51 = vector.load %arg11[%c0_51, %c0_52] : memref<80x16xf32, #tpu.memory_space<vmem>>, vector<16x16xf32>
      %cst_53 = arith.constant dense<0.000000e+00> : vector<16x32xf32>
      %52 = tpu.matmul %51, %26, %cst_53 {dimension_numbers = #tpu.dot_dimension_numbers<[1], [0], [0], [1], [0, 0, 1, 1], [], []>} : vector<16x16xf32>, vector<16x32xf32>, vector<16x32xf32> -> vector<16x32xf32>
      %c0_54 = arith.constant 0 : index
      %c0_55 = arith.constant 0 : index
      %53 = vector.load %arg12[%c0_54, %c0_55] : memref<160x32xf32, #tpu.memory_space<vmem>>, vector<32x32xf32>
      %cst_56 = arith.constant dense<0.000000e+00> : vector<16x32xf32>
      %54 = tpu.matmul %52, %53, %cst_56 {dimension_numbers = #tpu.dot_dimension_numbers<[1], [0], [0], [1], [0, 0, 1, 1], [], []>} : vector<16x32xf32>, vector<32x32xf32>, vector<16x32xf32> -> vector<16x32xf32>
      %55 = arith.addf %50, %54 : vector<16x32xf32>
      %c16 = arith.constant 16 : index
      %c0_57 = arith.constant 0 : index
      %56 = vector.load %arg11[%c16, %c0_57] : memref<80x16xf32, #tpu.memory_space<vmem>>, vector<16x16xf32>
      %cst_58 = arith.constant dense<0.000000e+00> : vector<16x32xf32>
      %57 = tpu.matmul %56, %26, %cst_58 {dimension_numbers = #tpu.dot_dimension_numbers<[1], [0], [0], [1], [0, 0, 1, 1], [], []>} : vector<16x16xf32>, vector<16x32xf32>, vector<16x32xf32> -> vector<16x32xf32>
      %c32 = arith.constant 32 : index
      %c0_59 = arith.constant 0 : index
      %58 = vector.load %arg12[%c32, %c0_59] : memref<160x32xf32, #tpu.memory_space<vmem>>, vector<32x32xf32>
      %cst_60 = arith.constant dense<0.000000e+00> : vector<16x32xf32>
      %59 = tpu.matmul %57, %58, %cst_60 {dimension_numbers = #tpu.dot_dimension_numbers<[1], [0], [0], [1], [0, 0, 1, 1], [], []>} : vector<16x32xf32>, vector<32x32xf32>, vector<16x32xf32> -> vector<16x32xf32>
      %60 = arith.addf %55, %59 : vector<16x32xf32>
      %c32_61 = arith.constant 32 : index
      %c0_62 = arith.constant 0 : index
      %61 = vector.load %arg11[%c32_61, %c0_62] : memref<80x16xf32, #tpu.memory_space<vmem>>, vector<16x16xf32>
      %cst_63 = arith.constant dense<0.000000e+00> : vector<16x32xf32>
      %62 = tpu.matmul %61, %26, %cst_63 {dimension_numbers = #tpu.dot_dimension_numbers<[1], [0], [0], [1], [0, 0, 1, 1], [], []>} : vector<16x16xf32>, vector<16x32xf32>, vector<16x32xf32> -> vector<16x32xf32>
      %c64 = arith.constant 64 : index
      %c0_64 = arith.constant 0 : index
      %63 = vector.load %arg12[%c64, %c0_64] : memref<160x32xf32, #tpu.memory_space<vmem>>, vector<32x32xf32>
      %cst_65 = arith.constant dense<0.000000e+00> : vector<16x32xf32>
      %64 = tpu.matmul %62, %63, %cst_65 {dimension_numbers = #tpu.dot_dimension_numbers<[1], [0], [0], [1], [0, 0, 1, 1], [], []>} : vector<16x32xf32>, vector<32x32xf32>, vector<16x32xf32> -> vector<16x32xf32>
      %65 = arith.addf %60, %64 : vector<16x32xf32>
      %c48 = arith.constant 48 : index
      %c0_66 = arith.constant 0 : index
      %66 = vector.load %arg11[%c48, %c0_66] : memref<80x16xf32, #tpu.memory_space<vmem>>, vector<16x16xf32>
      %cst_67 = arith.constant dense<0.000000e+00> : vector<16x32xf32>
      %67 = tpu.matmul %66, %26, %cst_67 {dimension_numbers = #tpu.dot_dimension_numbers<[1], [0], [0], [1], [0, 0, 1, 1], [], []>} : vector<16x16xf32>, vector<16x32xf32>, vector<16x32xf32> -> vector<16x32xf32>
      %c96 = arith.constant 96 : index
      %c0_68 = arith.constant 0 : index
      %68 = vector.load %arg12[%c96, %c0_68] : memref<160x32xf32, #tpu.memory_space<vmem>>, vector<32x32xf32>
      %cst_69 = arith.constant dense<0.000000e+00> : vector<16x32xf32>
      %69 = tpu.matmul %67, %68, %cst_69 {dimension_numbers = #tpu.dot_dimension_numbers<[1], [0], [0], [1], [0, 0, 1, 1], [], []>} : vector<16x32xf32>, vector<32x32xf32>, vector<16x32xf32> -> vector<16x32xf32>
      %70 = arith.addf %65, %69 : vector<16x32xf32>
      %c64_70 = arith.constant 64 : index
      %c0_71 = arith.constant 0 : index
      %71 = vector.load %arg11[%c64_70, %c0_71] : memref<80x16xf32, #tpu.memory_space<vmem>>, vector<16x16xf32>
      %cst_72 = arith.constant dense<0.000000e+00> : vector<16x32xf32>
      %72 = tpu.matmul %71, %26, %cst_72 {dimension_numbers = #tpu.dot_dimension_numbers<[1], [0], [0], [1], [0, 0, 1, 1], [], []>} : vector<16x16xf32>, vector<16x32xf32>, vector<16x32xf32> -> vector<16x32xf32>
      %c128 = arith.constant 128 : index
      %c0_73 = arith.constant 0 : index
      %73 = vector.load %arg12[%c128, %c0_73] : memref<160x32xf32, #tpu.memory_space<vmem>>, vector<32x32xf32>
      %cst_74 = arith.constant dense<0.000000e+00> : vector<16x32xf32>
      %74 = tpu.matmul %72, %73, %cst_74 {dimension_numbers = #tpu.dot_dimension_numbers<[1], [0], [0], [1], [0, 0, 1, 1], [], []>} : vector<16x32xf32>, vector<32x32xf32>, vector<16x32xf32> -> vector<16x32xf32>
      %75 = arith.addf %70, %74 : vector<16x32xf32>
      %c0_75 = arith.constant 0 : index
      %c0_76 = arith.constant 0 : index
      %76 = vector.load %arg13[%c0_75, %c0_76] : memref<1x32xf32, #tpu.memory_space<vmem>>, vector<1x32xf32>
      %77 = vector.broadcast %76 : vector<1x32xf32> to vector<16x32xf32>
      %78 = arith.mulf %75, %77 : vector<16x32xf32>
      %c0_77 = arith.constant 0 : index
      %c0_78 = arith.constant 0 : index
      %79 = vector.load %arg14[%c0_77, %c0_78] : memref<1x32xf32, #tpu.memory_space<vmem>>, vector<1x32xf32>
      %80 = vector.broadcast %79 : vector<1x32xf32> to vector<16x32xf32>
      %81 = arith.addf %78, %80 : vector<16x32xf32>
      %cst_79 = arith.constant 0.000000e+00 : f32
      %82 = vector.broadcast %cst_79 : f32 to vector<16x32xf32>
      %83 = arith.maximumf %81, %82 : vector<16x32xf32>
      %c0_80 = arith.constant 0 : index
      %c0_81 = arith.constant 0 : index
      %84 = vector.load %arg9[%c0_80, %c0_81] : memref<2x16xf32, #tpu.memory_space<vmem>>, vector<2x16xf32>
      %cst_82 = arith.constant dense<0.000000e+00> : vector<2x32xf32>
      %85 = tpu.matmul %84, %83, %cst_82 {dimension_numbers = #tpu.dot_dimension_numbers<[1], [0], [0], [1], [0, 0, 1, 1], [], []>} : vector<2x16xf32>, vector<16x32xf32>, vector<2x32xf32> -> vector<2x32xf32>
      %cst_83 = arith.constant 1.250000e-01 : f32
      %86 = vector.broadcast %cst_83 : f32 to vector<2x32xf32>
      %87 = arith.mulf %85, %86 : vector<2x32xf32>
      %c0_84 = arith.constant 0 : index
      %c0_85 = arith.constant 0 : index
      %88 = vector.load %arg26[%c0_84, %c0_85] : memref<2x32xf32, #tpu.memory_space<vmem>>, vector<2x32xf32>
      tpu.vector_store %arg26[%c0_84, %c0_85], %87 {strides = array<i32>} : memref<2x32xf32, #tpu.memory_space<vmem>>, vector<2x32xf32>,
      %cst_86 = arith.constant 0.000000e+00 : f32
      %89 = vector.broadcast %cst_86 : f32 to vector<2x32xf32>
      %c0_87 = arith.constant 0 : index
      %c0_88 = arith.constant 0 : index
      %90 = vector.load %arg27[%c0_87, %c0_88] : memref<2x32xf32, #tpu.memory_space<vmem>>, vector<2x32xf32>
      tpu.vector_store %arg27[%c0_87, %c0_88], %89 {strides = array<i32>} : memref<2x32xf32, #tpu.memory_space<vmem>>, vector<2x32xf32>,
    } else {
    }
    %c0 = arith.constant 0 : index
    %c0_1 = arith.constant 0 : index
    %3 = vector.load %arg25[%c0, %c0_1] : memref<2x128xf32, #tpu.memory_space<vmem>>, vector<2x128xf32>
    %c0_2 = arith.constant 0 : index
    %c0_3 = arith.constant 0 : index
    %4 = vector.load %arg15[%c0_2, %c0_3] : memref<128x512xf32, #tpu.memory_space<vmem>>, vector<128x512xf32>
    %cst = arith.constant dense<0.000000e+00> : vector<2x512xf32>
    %5 = tpu.matmul %3, %4, %cst {dimension_numbers = #tpu.dot_dimension_numbers<[1], [0], [0], [1], [0, 0, 1, 1], [], []>} : vector<2x128xf32>, vector<128x512xf32>, vector<2x512xf32> -> vector<2x512xf32>
    %c0_4 = arith.constant 0 : index
    %c0_5 = arith.constant 0 : index
    %6 = vector.load %arg16[%c0_4, %c0_5] : memref<1x512xf32, #tpu.memory_space<vmem>>, vector<1x512xf32>
    %7 = vector.broadcast %6 : vector<1x512xf32> to vector<2x512xf32>
    %8 = arith.addf %5, %7 : vector<2x512xf32>
    %cst_6 = arith.constant 0.000000e+00 : f32
    %9 = vector.broadcast %cst_6 : f32 to vector<2x512xf32>
    %10 = arith.maximumf %8, %9 : vector<2x512xf32>
    %c0_7 = arith.constant 0 : index
    %c0_8 = arith.constant 0 : index
    %11 = vector.load %arg27[%c0_7, %c0_8] : memref<2x32xf32, #tpu.memory_space<vmem>>, vector<2x32xf32>
    %c0_9 = arith.constant 0 : index
    %c0_10 = arith.constant 0 : index
    %12 = vector.load %arg17[%c0_9, %c0_10] : memref<512x32xf32, #tpu.memory_space<vmem>>, vector<512x32xf32>
    %cst_11 = arith.constant dense<0.000000e+00> : vector<2x32xf32>
    %13 = tpu.matmul %10, %12, %cst_11 {dimension_numbers = #tpu.dot_dimension_numbers<[1], [0], [0], [1], [0, 0, 1, 1], [], []>} : vector<2x512xf32>, vector<512x32xf32>, vector<2x32xf32> -> vector<2x32xf32>
    %14 = arith.addf %11, %13 : vector<2x32xf32>
    %c0_12 = arith.constant 0 : index
    %c0_13 = arith.constant 0 : index
    %15 = vector.load %arg27[%c0_12, %c0_13] : memref<2x32xf32, #tpu.memory_space<vmem>>, vector<2x32xf32>
    tpu.vector_store %arg27[%c0_12, %c0_13], %14 {strides = array<i32>} : memref<2x32xf32, #tpu.memory_space<vmem>>, vector<2x32xf32>,
    %c7_i32 = arith.constant 7 : i32
    %16 = arith.cmpi eq, %arg0, %c7_i32 : i32
    %17 = arith.extui %16 : i1 to i32
    %c0_i32_14 = arith.constant 0 : i32
    %18 = arith.cmpi ne, %17, %c0_i32_14 : i32
    scf.if %18 {
      %c0_15 = arith.constant 0 : index
      %c0_16 = arith.constant 0 : index
      %19 = vector.load %arg27[%c0_15, %c0_16] : memref<2x32xf32, #tpu.memory_space<vmem>>, vector<2x32xf32>
      %c0_17 = arith.constant 0 : index
      %c0_18 = arith.constant 0 : index
      %20 = vector.load %arg18[%c0_17, %c0_18] : memref<1x32xf32, #tpu.memory_space<vmem>>, vector<1x32xf32>
      %21 = vector.broadcast %20 : vector<1x32xf32> to vector<2x32xf32>
      %22 = arith.addf %19, %21 : vector<2x32xf32>
      %c0_19 = arith.constant 0 : index
      %c0_20 = arith.constant 0 : index
      %23 = vector.load %arg26[%c0_19, %c0_20] : memref<2x32xf32, #tpu.memory_space<vmem>>, vector<2x32xf32>
      %24 = arith.addf %22, %23 : vector<2x32xf32>
      %c0_21 = arith.constant 0 : index
      %c0_22 = arith.constant 0 : index
      %25 = vector.load %arg19[%c0_21, %c0_22] : memref<32x512xf32, #tpu.memory_space<vmem>>, vector<32x512xf32>
      %cst_23 = arith.constant dense<0.000000e+00> : vector<2x512xf32>
      %26 = tpu.matmul %24, %25, %cst_23 {dimension_numbers = #tpu.dot_dimension_numbers<[1], [0], [0], [1], [0, 0, 1, 1], [], []>} : vector<2x32xf32>, vector<32x512xf32>, vector<2x512xf32> -> vector<2x512xf32>
      %c0_24 = arith.constant 0 : index
      %c0_25 = arith.constant 0 : index
      %27 = vector.load %arg20[%c0_24, %c0_25] : memref<1x512xf32, #tpu.memory_space<vmem>>, vector<1x512xf32>
      %28 = vector.broadcast %27 : vector<1x512xf32> to vector<2x512xf32>
      %29 = arith.addf %26, %28 : vector<2x512xf32>
      %cst_26 = arith.constant 0.000000e+00 : f32
      %30 = vector.broadcast %cst_26 : f32 to vector<2x512xf32>
      %31 = arith.maximumf %29, %30 : vector<2x512xf32>
      %c0_27 = arith.constant 0 : index
      %c0_28 = arith.constant 0 : index
      %32 = vector.load %arg21[%c0_27, %c0_28] : memref<512x4xf32, #tpu.memory_space<vmem>>, vector<512x4xf32>
      %cst_29 = arith.constant dense<0.000000e+00> : vector<2x4xf32>
      %33 = tpu.matmul %31, %32, %cst_29 {dimension_numbers = #tpu.dot_dimension_numbers<[1], [0], [0], [1], [0, 0, 1, 1], [], []>} : vector<2x512xf32>, vector<512x4xf32>, vector<2x4xf32> -> vector<2x4xf32>
      %c0_30 = arith.constant 0 : index
      %c0_31 = arith.constant 0 : index
      %34 = vector.load %arg22[%c0_30, %c0_31] : memref<1x4xf32, #tpu.memory_space<vmem>>, vector<1x4xf32>
      %35 = vector.broadcast %34 : vector<1x4xf32> to vector<2x4xf32>
      %36 = arith.addf %33, %35 : vector<2x4xf32>
      %c0_32 = arith.constant 0 : index
      %c0_33 = arith.constant 0 : index
      %37 = vector.load %arg23[%c0_32, %c0_33] : memref<2x4xf32, #tpu.memory_space<vmem>>, vector<2x4xf32>
      tpu.vector_store %arg23[%c0_32, %c0_33], %36 {strides = array<i32>} : memref<2x4xf32, #tpu.memory_space<vmem>>, vector<2x4xf32>,
    } else {
    }
    return
  }
  func.func @transform_0(%arg0: i32) -> (i32, i32) {
    %c0_i32 = arith.constant 0 : i32
    %c0_i32_0 = arith.constant 0 : i32
    %c0_i32_1 = arith.constant 0 : i32
    return %c0_i32, %c0_i32_0 : i32, i32
  }
  func.func @transform_1(%arg0: i32) -> (i32, i32) {
    %c0_i32 = arith.constant 0 : i32
    %c0_i32_0 = arith.constant 0 : i32
    %c0_i32_1 = arith.constant 0 : i32
    return %c0_i32, %c0_i32_0 : i32, i32
  }
  func.func @transform_2(%arg0: i32) -> (i32, i32) {
    %c0_i32 = arith.constant 0 : i32
    %c0_i32_0 = arith.constant 0 : i32
    %c0_i32_1 = arith.constant 0 : i32
    return %c0_i32, %c0_i32_0 : i32, i32
  }
  func.func @transform_3(%arg0: i32) -> (i32, i32) {
    %c0_i32 = arith.constant 0 : i32
    %c0_i32_0 = arith.constant 0 : i32
    %c0_i32_1 = arith.constant 0 : i32
    return %c0_i32, %c0_i32_0 : i32, i32
  }
  func.func @transform_4(%arg0: i32) -> (i32, i32) {
    %c0_i32 = arith.constant 0 : i32
    %c0_i32_0 = arith.constant 0 : i32
    %c0_i32_1 = arith.constant 0 : i32
    return %c0_i32, %c0_i32_0 : i32, i32
  }
  func.func @transform_5(%arg0: i32) -> (i32, i32) {
    %c0_i32 = arith.constant 0 : i32
    %c0_i32_0 = arith.constant 0 : i32
    %c0_i32_1 = arith.constant 0 : i32
    return %c0_i32, %c0_i32_0 : i32, i32
  }
  func.func @transform_6(%arg0: i32) -> (i32, i32) {
    %c0_i32 = arith.constant 0 : i32
    %c0_i32_0 = arith.constant 0 : i32
    %c0_i32_1 = arith.constant 0 : i32
    return %c0_i32, %c0_i32_0 : i32, i32
  }
  func.func @transform_7(%arg0: i32) -> (i32, i32) {
    %c0_i32 = arith.constant 0 : i32
    %c0_i32_0 = arith.constant 0 : i32
    %c0_i32_1 = arith.constant 0 : i32
    return %c0_i32, %c0_i32_0 : i32, i32
  }
  func.func @transform_8(%arg0: i32) -> (i32, i32) {
    %c0_i32 = arith.constant 0 : i32
    %c0_i32_0 = arith.constant 0 : i32
    %c0_i32_1 = arith.constant 0 : i32
    return %c0_i32, %c0_i32_0 : i32, i32
  }
  func.func @transform_9(%arg0: i32) -> (i32, i32) {
    %c0_i32 = arith.constant 0 : i32
    %c0_i32_0 = arith.constant 0 : i32
    %c0_i32_1 = arith.constant 0 : i32
    return %c0_i32, %c0_i32_0 : i32, i32
  }
  func.func @transform_10(%arg0: i32) -> (i32, i32) {
    %c0_i32 = arith.constant 0 : i32
    %c0_i32_0 = arith.constant 0 : i32
    %c0_i32_1 = arith.constant 0 : i32
    return %c0_i32, %c0_i32_0 : i32, i32
  }
  func.func @transform_11(%arg0: i32) -> (i32, i32) {
    %c0_i32 = arith.constant 0 : i32
    %c0_i32_0 = arith.constant 0 : i32
    %c0_i32_1 = arith.constant 0 : i32
    return %c0_i32, %c0_i32_0 : i32, i32
  }
  func.func @transform_12(%arg0: i32) -> (i32, i32) {
    %c0_i32 = arith.constant 0 : i32
    %c0_i32_0 = arith.constant 0 : i32
    %c0_i32_1 = arith.constant 0 : i32
    return %c0_i32, %c0_i32_0 : i32, i32
  }
  func.func @transform_13(%arg0: i32) -> (i32, i32) {
    %c0_i32 = arith.constant 0 : i32
    %c0_i32_0 = arith.constant 0 : i32
    %c0_i32_1 = arith.constant 0 : i32
    return %c0_i32, %c0_i32_0 : i32, i32
  }
  func.func @transform_14(%arg0: i32) -> (i32, i32) {
    %c0_i32 = arith.constant 0 : i32
    %c0_i32_0 = arith.constant 0 : i32
    return %c0_i32, %arg0 : i32, i32
  }
  func.func @transform_15(%arg0: i32) -> (i32, i32) {
    %c0_i32 = arith.constant 0 : i32
    %c0_i32_0 = arith.constant 0 : i32
    return %c0_i32, %arg0 : i32, i32
  }
  func.func @transform_16(%arg0: i32) -> (i32, i32) {
    %c0_i32 = arith.constant 0 : i32
    %c0_i32_0 = arith.constant 0 : i32
    return %arg0, %c0_i32 : i32, i32
  }
  func.func @transform_17(%arg0: i32) -> (i32, i32) {
    %c0_i32 = arith.constant 0 : i32
    %c0_i32_0 = arith.constant 0 : i32
    %c0_i32_1 = arith.constant 0 : i32
    return %c0_i32, %c0_i32_0 : i32, i32
  }
  func.func @transform_18(%arg0: i32) -> (i32, i32) {
    %c0_i32 = arith.constant 0 : i32
    %c0_i32_0 = arith.constant 0 : i32
    %c0_i32_1 = arith.constant 0 : i32
    return %c0_i32, %c0_i32_0 : i32, i32
  }
  func.func @transform_19(%arg0: i32) -> (i32, i32) {
    %c0_i32 = arith.constant 0 : i32
    %c0_i32_0 = arith.constant 0 : i32
    %c0_i32_1 = arith.constant 0 : i32
    return %c0_i32, %c0_i32_0 : i32, i32
  }
  func.func @transform_20(%arg0: i32) -> (i32, i32) {
    %c0_i32 = arith.constant 0 : i32
    %c0_i32_0 = arith.constant 0 : i32
    %c0_i32_1 = arith.constant 0 : i32
    return %c0_i32, %c0_i32_0 : i32, i32
  }
  func.func @transform_21(%arg0: i32) -> (i32, i32) {
    %c0_i32 = arith.constant 0 : i32
    %c0_i32_0 = arith.constant 0 : i32
    %c0_i32_1 = arith.constant 0 : i32
    return %c0_i32, %c0_i32_0 : i32, i32
  }
  func.func @transform_22(%arg0: i32) -> (i32, i32) {
    %c0_i32 = arith.constant 0 : i32
    %c0_i32_0 = arith.constant 0 : i32
    %c0_i32_1 = arith.constant 0 : i32
    return %c0_i32, %c0_i32_0 : i32, i32
  }
  func.func @transform_23(%arg0: i32) -> (i32, i32) {
    %c0_i32 = arith.constant 0 : i32
    %c0_i32_0 = arith.constant 0 : i32
    %c0_i32_1 = arith.constant 0 : i32
    return %c0_i32, %c0_i32_0 : i32, i32
  }
}

</mosaic_0001>

<llo_original>
// kernel: fwd.1
$region0: #{fwd.1}
  #allocation0 [shape = 'u32[]', space=smem, size = 0x4, offset = 0x4, fixed_abs, tag = 'smem constant byte address 0x4 - core index']
  #allocation1 [shape = 'u32[144,128]{1,0:T(1,128)}', space=vmem, size = 0x12000, scoped, tag = 'internal scratch']
  #allocation2 [shape = 'f32[2,128]{1,0:T(2,128)}', space=vmem, size = 0x400, scoped, tag = 'scratch operand']
  #allocation3 [shape = 'f32[2,32]{1,0:T(2,128)}', space=vmem, size = 0x400, scoped, tag = 'scratch operand']
  #allocation4 [shape = 'f32[2,32]{1,0:T(2,128)}', space=vmem, size = 0x400, scoped, tag = 'scratch operand']
  %s0 = inlined_call_operand.vmem [shape: f32[14,16], index: 0, kind: input, shape index: {}]
  %s1 = inlined_call_operand.vmem [shape: f32[16,32], index: 1, kind: input, shape index: {}]
  %s2 = inlined_call_operand.vmem [shape: f32[1,32], index: 2, kind: input, shape index: {}]
  %s3 = inlined_call_operand.vmem [shape: f32[16,14], index: 3, kind: input, shape index: {}]
  %s4 = inlined_call_operand.vmem [shape: f32[32,16], index: 4, kind: input, shape index: {}]
  %s5 = inlined_call_operand.vmem [shape: f32[16,16], index: 5, kind: input, shape index: {}]
  %s6 = inlined_call_operand.vmem [shape: f32[16,128], index: 6, kind: input, shape index: {}]
  %s7 = inlined_call_operand.vmem [shape: f32[32,128], index: 7, kind: input, shape index: {}]
  %s8 = inlined_call_operand.vmem [shape: f32[2,16], index: 8, kind: input, shape index: {}]
  %s9 = inlined_call_operand.vmem [shape: f32[16,2], index: 9, kind: input, shape index: {}]
  %s10 = inlined_call_operand.vmem [shape: f32[80,16], index: 10, kind: input, shape index: {}]
  %s11 = inlined_call_operand.vmem [shape: f32[160,32], index: 11, kind: input, shape index: {}]
  %s12 = inlined_call_operand.vmem [shape: f32[1,32], index: 12, kind: input, shape index: {}]
  %s13 = inlined_call_operand.vmem [shape: f32[1,32], index: 13, kind: input, shape index: {}]
  %s14 = inlined_call_operand.vmem [shape: f32[128,4096], index: 14, kind: input, shape index: {}]
  %s15 = inlined_call_operand.vmem [shape: f32[1,4096], index: 15, kind: input, shape index: {}]
  %s16 = inlined_call_operand.vmem [shape: f32[4096,32], index: 16, kind: input, shape index: {}]
  %s17 = inlined_call_operand.vmem [shape: f32[1,32], index: 17, kind: input, shape index: {}]
  %s18 = inlined_call_operand.vmem [shape: f32[32,512], index: 18, kind: input, shape index: {}]
  %s19 = inlined_call_operand.vmem [shape: f32[1,512], index: 19, kind: input, shape index: {}]
  %s20 = inlined_call_operand.vmem [shape: f32[512,4], index: 20, kind: input, shape index: {}]
  %s21 = inlined_call_operand.vmem [shape: f32[1,4], index: 21, kind: input, shape index: {}]
  %s22 = inlined_call_operand.hbm [shape: f32[2,4], index: 22, kind: output, shape index: {0}]
  %s23 = inlined_call_operand.vmem [shape: f32[16,16], index: 23, kind: output, shape index: {1}]
  %24 = xla_tuple %s22, %s23
  %s25 = sld [smem:[#allocation0]]
  $region160: #{fwd.1} parent=0
    _
  %s27 = ssub.s32 1, %s25
  %s28 = scalar_select 0, %s27, %s25
  $region1: #{fwd.1} parent=0
    #allocation5 [shape = 'u8[524288]{0}', space=vmem, size = 0x80000, scoped, tag = 'input window, operand 14']
    #allocation6 [shape = 'u8[1024]{0}', space=vmem, size = 0x400, scoped, tag = 'output window, operand 0, single buffered']
    #allocation7 [shape = 's32[2]{0}', space=sflag, size = 0x8, scoped, tag = 'scoped memory for fwd.1']
    %29 = vsyncpa [#allocation7], 0
    loop: start=0, step=1, limit=10
    $region2: #{fwd.1} parent=1 // loop_pre_header
      _
    $region3: #{fwd.1} parent=1 // loop_header
      %s31 = sphi 0, %s35
      %p32 = scmp.ge.s32.totalorder %s31, 10
      %s39 = sphi 0, %s39
      %s41 = sphi 0, %s39
      %s42 = sphi 0, %s41
      %s56 = sphi 0, %s42
      %s60 = sphi 0, %s60
      %s62 = sphi 0, %s60
      %s63 = sphi 0, %s62
      %s77 = sphi 0, %s63
      %s81 = sphi 0, %s81
      %s83 = sphi 0, %s81
      %s84 = sphi 0, %s83
      %s98 = sphi 0, %s84
      %s102 = sphi 0, %s102
      %s104 = sphi 0, %s102
      %s105 = sphi 0, %s104
      %s119 = sphi 0, %s105
      %s123 = sphi 0, %s123
      %s125 = sphi 0, %s123
      %s126 = sphi 0, %s125
      %s140 = sphi 0, %s126
      %s144 = sphi 0, %s144
      %s146 = sphi 0, %s144
      %s147 = sphi 0, %s146
      %s161 = sphi 0, %s147
      %s165 = sphi 0, %s165
      %s167 = sphi 0, %s165
      %s168 = sphi 0, %s167
      %s182 = sphi 0, %s168
      %s186 = sphi 0, %s186
      %s188 = sphi 0, %s186
      %s189 = sphi 0, %s188
      %s203 = sphi 0, %s189
      %s207 = sphi 0, %s207
      %s209 = sphi 0, %s207
      %s210 = sphi 0, %s209
      %s224 = sphi 0, %s210
      %s228 = sphi 0, %s228
      %s230 = sphi 0, %s228
      %s231 = sphi 0, %s230
      %s245 = sphi 0, %s231
      %s249 = sphi 0, %s249
      %s251 = sphi 0, %s249
      %s252 = sphi 0, %s251
      %s266 = sphi 0, %s252
      %s270 = sphi 0, %s270
      %s272 = sphi 0, %s270
      %s273 = sphi 0, %s272
      %s287 = sphi 0, %s273
      %s291 = sphi 0, %s291
      %s293 = sphi 0, %s291
      %s294 = sphi 0, %s293
      %s308 = sphi 0, %s294
      %s312 = sphi 0, %s312
      %s314 = sphi 0, %s312
      %s315 = sphi 0, %s314
      %s329 = sphi 0, %s315
      %s335 = sphi 0, %s337
      %s338 = sphi 0, %s335
      %s339 = sphi 0, %s338
      %s355 = sphi 0, %s339
      %s361 = sphi 0, %s363
      %s364 = sphi 0, %s361
      %s365 = sphi 0, %s364
      %s381 = sphi 0, %s365
      %s387 = sphi 0, %s389
      %s390 = sphi 0, %s387
      %s391 = sphi 0, %s390
      %s407 = sphi 0, %s391
      %s411 = sphi 0, %s411
      %s413 = sphi 0, %s411
      %s414 = sphi 0, %s413
      %s428 = sphi 0, %s414
      %s432 = sphi 0, %s432
      %s434 = sphi 0, %s432
      %s435 = sphi 0, %s434
      %s449 = sphi 0, %s435
      %s453 = sphi 0, %s453
      %s455 = sphi 0, %s453
      %s456 = sphi 0, %s455
      %s470 = sphi 0, %s456
      %s474 = sphi 0, %s474
      %s476 = sphi 0, %s474
      %s477 = sphi 0, %s476
      %s491 = sphi 0, %s477
      %s495 = sphi 0, %s495
      %s497 = sphi 0, %s495
      %s498 = sphi 0, %s497
      %s512 = sphi 0, %s498
      %s516 = sphi 0, %s516
      %s518 = sphi 0, %s516
      %s519 = sphi 0, %s518
      %s533 = sphi 0, %s519
      %s537 = sphi 0, %s537
      %s539 = sphi 0, %s537
      %s540 = sphi 0, %s539
      %s554 = sphi 0, %s540
    $region4: #{fwd.1} parent=1 // loop_header_branch
      %34 = sbr.rel (%p32) target = $region8
    $region5: #{fwd.1} parent=1 // loop_body
      %s36 = ssub.s32 %s31, 1
      %s37 = ssub.s32 %s31, 2
      %s38 = sadd.s32 %s31, 1
      %s40 = sadd.s32 %s39, 1
      %p43 = scmp.eq.s32.totalorder %s31, 7
      %p44 = scmp.ne.s32.totalorder %s39, %s41
      %p45 = scmp.eq.s32.totalorder %s31, 0
      %p46 = por %p44, %p45
      %p47 = scmp.ne.s32.totalorder %s39, %s41
      %p48 = scmp.eq.s32.totalorder %s36, 7
      %p49 = por %p47, %p48
      %p50 = scmp.ne.s32.totalorder %s41, %s42
      %p51 = scmp.eq.s32.totalorder %s36, 0
      %p52 = por %p50, %p51
      %p53 = scmp.ne.s32.totalorder %s41, %s42
      %p54 = scmp.eq.s32.totalorder %s37, 7
      %p55 = por %p53, %p54
      %p57 = scmp.ne.s32.totalorder %s42, %s56
      %p58 = scmp.eq.s32.totalorder %s37, 0
      %p59 = por %p57, %p58
      %s61 = sadd.s32 %s60, 1
      %p64 = scmp.eq.s32.totalorder %s31, 7
      %p65 = scmp.ne.s32.totalorder %s60, %s62
      %p66 = scmp.eq.s32.totalorder %s31, 0
      %p67 = por %p65, %p66
      %p68 = scmp.ne.s32.totalorder %s60, %s62
      %p69 = scmp.eq.s32.totalorder %s36, 7
      %p70 = por %p68, %p69
      %p71 = scmp.ne.s32.totalorder %s62, %s63
      %p72 = scmp.eq.s32.totalorder %s36, 0
      %p73 = por %p71, %p72
      %p74 = scmp.ne.s32.totalorder %s62, %s63
      %p75 = scmp.eq.s32.totalorder %s37, 7
      %p76 = por %p74, %p75
      %p78 = scmp.ne.s32.totalorder %s63, %s77
      %p79 = scmp.eq.s32.totalorder %s37, 0
      %p80 = por %p78, %p79
      %s82 = sadd.s32 %s81, 1
      %p85 = scmp.eq.s32.totalorder %s31, 7
      %p86 = scmp.ne.s32.totalorder %s81, %s83
      %p87 = scmp.eq.s32.totalorder %s31, 0
      %p88 = por %p86, %p87
      %p89 = scmp.ne.s32.totalorder %s81, %s83
      %p90 = scmp.eq.s32.totalorder %s36, 7
      %p91 = por %p89, %p90
      %p92 = scmp.ne.s32.totalorder %s83, %s84
      %p93 = scmp.eq.s32.totalorder %s36, 0
      %p94 = por %p92, %p93
      %p95 = scmp.ne.s32.totalorder %s83, %s84
      %p96 = scmp.eq.s32.totalorder %s37, 7
      %p97 = por %p95, %p96
      %p99 = scmp.ne.s32.totalorder %s84, %s98
      %p100 = scmp.eq.s32.totalorder %s37, 0
      %p101 = por %p99, %p100
      %s103 = sadd.s32 %s102, 1
      %p106 = scmp.eq.s32.totalorder %s31, 7
      %p107 = scmp.ne.s32.totalorder %s102, %s104
      %p108 = scmp.eq.s32.totalorder %s31, 0
      %p109 = por %p107, %p108
      %p110 = scmp.ne.s32.totalorder %s102, %s104
      %p111 = scmp.eq.s32.totalorder %s36, 7
      %p112 = por %p110, %p111
      %p113 = scmp.ne.s32.totalorder %s104, %s105
      %p114 = scmp.eq.s32.totalorder %s36, 0
      %p115 = por %p113, %p114
      %p116 = scmp.ne.s32.totalorder %s104, %s105
      %p117 = scmp.eq.s32.totalorder %s37, 7
      %p118 = por %p116, %p117
      %p120 = scmp.ne.s32.totalorder %s105, %s119
      %p121 = scmp.eq.s32.totalorder %s37, 0
      %p122 = por %p120, %p121
      %s124 = sadd.s32 %s123, 1
      %p127 = scmp.eq.s32.totalorder %s31, 7
      %p128 = scmp.ne.s32.totalorder %s123, %s125
      %p129 = scmp.eq.s32.totalorder %s31, 0
      %p130 = por %p128, %p129
      %p131 = scmp.ne.s32.totalorder %s123, %s125
      %p132 = scmp.eq.s32.totalorder %s36, 7
      %p133 = por %p131, %p132
      %p134 = scmp.ne.s32.totalorder %s125, %s126
      %p135 = scmp.eq.s32.totalorder %s36, 0
      %p136 = por %p134, %p135
      %p137 = scmp.ne.s32.totalorder %s125, %s126
      %p138 = scmp.eq.s32.totalorder %s37, 7
      %p139 = por %p137, %p138
      %p141 = scmp.ne.s32.totalorder %s126, %s140
      %p142 = scmp.eq.s32.totalorder %s37, 0
      %p143 = por %p141, %p142
      %s145 = sadd.s32 %s144, 1
      %p148 = scmp.eq.s32.totalorder %s31, 7
      %p149 = scmp.ne.s32.totalorder %s144, %s146
      %p150 = scmp.eq.s32.totalorder %s31, 0
      %p151 = por %p149, %p150
      %p152 = scmp.ne.s32.totalorder %s144, %s146
      %p153 = scmp.eq.s32.totalorder %s36, 7
      %p154 = por %p152, %p153
      %p155 = scmp.ne.s32.totalorder %s146, %s147
      %p156 = scmp.eq.s32.totalorder %s36, 0
      %p157 = por %p155, %p156
      %p158 = scmp.ne.s32.totalorder %s146, %s147
      %p159 = scmp.eq.s32.totalorder %s37, 7
      %p160 = por %p158, %p159
      %p162 = scmp.ne.s32.totalorder %s147, %s161
      %p163 = scmp.eq.s32.totalorder %s37, 0
      %p164 = por %p162, %p163
      %s166 = sadd.s32 %s165, 1
      %p169 = scmp.eq.s32.totalorder %s31, 7
      %p170 = scmp.ne.s32.totalorder %s165, %s167
      %p171 = scmp.eq.s32.totalorder %s31, 0
      %p172 = por %p170, %p171
      %p173 = scmp.ne.s32.totalorder %s165, %s167
      %p174 = scmp.eq.s32.totalorder %s36, 7
      %p175 = por %p173, %p174
      %p176 = scmp.ne.s32.totalorder %s167, %s168
      %p177 = scmp.eq.s32.totalorder %s36, 0
      %p178 = por %p176, %p177
      %p179 = scmp.ne.s32.totalorder %s167, %s168
      %p180 = scmp.eq.s32.totalorder %s37, 7
      %p181 = por %p179, %p180
      %p183 = scmp.ne.s32.totalorder %s168, %s182
      %p184 = scmp.eq.s32.totalorder %s37, 0
      %p185 = por %p183, %p184
      %s187 = sadd.s32 %s186, 1
      %p190 = scmp.eq.s32.totalorder %s31, 7
      %p191 = scmp.ne.s32.totalorder %s186, %s188
      %p192 = scmp.eq.s32.totalorder %s31, 0
      %p193 = por %p191, %p192
      %p194 = scmp.ne.s32.totalorder %s186, %s188
      %p195 = scmp.eq.s32.totalorder %s36, 7
      %p196 = por %p194, %p195
      %p197 = scmp.ne.s32.totalorder %s188, %s189
      %p198 = scmp.eq.s32.totalorder %s36, 0
      %p199 = por %p197, %p198
      %p200 = scmp.ne.s32.totalorder %s188, %s189
      %p201 = scmp.eq.s32.totalorder %s37, 7
      %p202 = por %p200, %p201
      %p204 = scmp.ne.s32.totalorder %s189, %s203
      %p205 = scmp.eq.s32.totalorder %s37, 0
      %p206 = por %p204, %p205
      %s208 = sadd.s32 %s207, 1
      %p211 = scmp.eq.s32.totalorder %s31, 7
      %p212 = scmp.ne.s32.totalorder %s207, %s209
      %p213 = scmp.eq.s32.totalorder %s31, 0
      %p214 = por %p212, %p213
      %p215 = scmp.ne.s32.totalorder %s207, %s209
      %p216 = scmp.eq.s32.totalorder %s36, 7
      %p217 = por %p215, %p216
      %p218 = scmp.ne.s32.totalorder %s209, %s210
      %p219 = scmp.eq.s32.totalorder %s36, 0
      %p220 = por %p218, %p219
      %p221 = scmp.ne.s32.totalorder %s209, %s210
      %p222 = scmp.eq.s32.totalorder %s37, 7
      %p223 = por %p221, %p222
      %p225 = scmp.ne.s32.totalorder %s210, %s224
      %p226 = scmp.eq.s32.totalorder %s37, 0
      %p227 = por %p225, %p226
      %s229 = sadd.s32 %s228, 1
      %p232 = scmp.eq.s32.totalorder %s31, 7
      %p233 = scmp.ne.s32.totalorder %s228, %s230
      %p234 = scmp.eq.s32.totalorder %s31, 0
      %p235 = por %p233, %p234
      %p236 = scmp.ne.s32.totalorder %s228, %s230
      %p237 = scmp.eq.s32.totalorder %s36, 7
      %p238 = por %p236, %p237
      %p239 = scmp.ne.s32.totalorder %s230, %s231
      %p240 = scmp.eq.s32.totalorder %s36, 0
      %p241 = por %p239, %p240
      %p242 = scmp.ne.s32.totalorder %s230, %s231
      %p243 = scmp.eq.s32.totalorder %s37, 7
      %p244 = por %p242, %p243
      %p246 = scmp.ne.s32.totalorder %s231, %s245
      %p247 = scmp.eq.s32.totalorder %s37, 0
      %p248 = por %p246, %p247
      %s250 = sadd.s32 %s249, 1
      %p253 = scmp.eq.s32.totalorder %s31, 7
      %p254 = scmp.ne.s32.totalorder %s249, %s251
      %p255 = scmp.eq.s32.totalorder %s31, 0
      %p256 = por %p254, %p255
      %p257 = scmp.ne.s32.totalorder %s249, %s251
      %p258 = scmp.eq.s32.totalorder %s36, 7
      %p259 = por %p257, %p258
      %p260 = scmp.ne.s32.totalorder %s251, %s252
      %p261 = scmp.eq.s32.totalorder %s36, 0
      %p262 = por %p260, %p261
      %p263 = scmp.ne.s32.totalorder %s251, %s252
      %p264 = scmp.eq.s32.totalorder %s37, 7
      %p265 = por %p263, %p264
      %p267 = scmp.ne.s32.totalorder %s252, %s266
      %p268 = scmp.eq.s32.totalorder %s37, 0
      %p269 = por %p267, %p268
      %s271 = sadd.s32 %s270, 1
      %p274 = scmp.eq.s32.totalorder %s31, 7
      %p275 = scmp.ne.s32.totalorder %s270, %s272
      %p276 = scmp.eq.s32.totalorder %s31, 0
      %p277 = por %p275, %p276
      %p278 = scmp.ne.s32.totalorder %s270, %s272
      %p279 = scmp.eq.s32.totalorder %s36, 7
      %p280 = por %p278, %p279
      %p281 = scmp.ne.s32.totalorder %s272, %s273
      %p282 = scmp.eq.s32.totalorder %s36, 0
      %p283 = por %p281, %p282
      %p284 = scmp.ne.s32.totalorder %s272, %s273
      %p285 = scmp.eq.s32.totalorder %s37, 7
      %p286 = por %p284, %p285
      %p288 = scmp.ne.s32.totalorder %s273, %s287
      %p289 = scmp.eq.s32.totalorder %s37, 0
      %p290 = por %p288, %p289
      %s292 = sadd.s32 %s291, 1
      %p295 = scmp.eq.s32.totalorder %s31, 7
      %p296 = scmp.ne.s32.totalorder %s291, %s293
      %p297 = scmp.eq.s32.totalorder %s31, 0
      %p298 = por %p296, %p297
      %p299 = scmp.ne.s32.totalorder %s291, %s293
      %p300 = scmp.eq.s32.totalorder %s36, 7
      %p301 = por %p299, %p300
      %p302 = scmp.ne.s32.totalorder %s293, %s294
      %p303 = scmp.eq.s32.totalorder %s36, 0
      %p304 = por %p302, %p303
      %p305 = scmp.ne.s32.totalorder %s293, %s294
      %p306 = scmp.eq.s32.totalorder %s37, 7
      %p307 = por %p305, %p306
      %p309 = scmp.ne.s32.totalorder %s294, %s308
      %p310 = scmp.eq.s32.totalorder %s37, 0
      %p311 = por %p309, %p310
      %s313 = sadd.s32 %s312, 1
      %p316 = scmp.eq.s32.totalorder %s31, 7
      %p317 = scmp.ne.s32.totalorder %s312, %s314
      %p318 = scmp.eq.s32.totalorder %s31, 0
      %p319 = por %p317, %p318
      %p320 = scmp.ne.s32.totalorder %s312, %s314
      %p321 = scmp.eq.s32.totalorder %s36, 7
      %p322 = por %p320, %p321
      %p323 = scmp.ne.s32.totalorder %s314, %s315
      %p324 = scmp.eq.s32.totalorder %s36, 0
      %p325 = por %p323, %p324
      %p326 = scmp.ne.s32.totalorder %s314, %s315
      %p327 = scmp.eq.s32.totalorder %s37, 7
      %p328 = por %p326, %p327
      %p330 = scmp.ne.s32.totalorder %s315, %s329
      %p331 = scmp.eq.s32.totalorder %s37, 0
      %p332 = por %p330, %p331
      %s333 = ssub.s32 %s31, %s38
      %p334 = scmp.eq.s32.totalorder %s333, 0
      %s336 = sadd.s32 %s335, 1
      %s337 = scalar_select %p334, %s335, %s336
      %p340 = pneg %p334
      %p341 = scmp.eq.s32.totalorder %s31, 7
      %p342 = por %p340, %p341
      %p343 = scmp.ne.s32.totalorder %s335, %s338
      %p344 = scmp.eq.s32.totalorder %s31, 0
      %p345 = por %p343, %p344
      %p346 = scmp.ne.s32.totalorder %s335, %s338
      %p347 = scmp.eq.s32.totalorder %s36, 7
      %p348 = por %p346, %p347
      %p349 = scmp.ne.s32.totalorder %s338, %s339
      %p350 = scmp.eq.s32.totalorder %s36, 0
      %p351 = por %p349, %p350
      %p352 = scmp.ne.s32.totalorder %s338, %s339
      %p353 = scmp.eq.s32.totalorder %s37, 7
      %p354 = por %p352, %p353
      %p356 = scmp.ne.s32.totalorder %s339, %s355
      %p357 = scmp.eq.s32.totalorder %s37, 0
      %p358 = por %p356, %p357
      %s359 = ssub.s32 %s31, %s38
      %p360 = scmp.eq.s32.totalorder %s359, 0
      %s362 = sadd.s32 %s361, 1
      %s363 = scalar_select %p360, %s361, %s362
      %p366 = pneg %p360
      %p367 = scmp.eq.s32.totalorder %s31, 7
      %p368 = por %p366, %p367
      %p369 = scmp.ne.s32.totalorder %s361, %s364
      %p370 = scmp.eq.s32.totalorder %s31, 0
      %p371 = por %p369, %p370
      %p372 = scmp.ne.s32.totalorder %s361, %s364
      %p373 = scmp.eq.s32.totalorder %s36, 7
      %p374 = por %p372, %p373
      %p375 = scmp.ne.s32.totalorder %s364, %s365
      %p376 = scmp.eq.s32.totalorder %s36, 0
      %p377 = por %p375, %p376
      %p378 = scmp.ne.s32.totalorder %s364, %s365
      %p379 = scmp.eq.s32.totalorder %s37, 7
      %p380 = por %p378, %p379
      %p382 = scmp.ne.s32.totalorder %s365, %s381
      %p383 = scmp.eq.s32.totalorder %s37, 0
      %p384 = por %p382, %p383
      %s385 = ssub.s32 %s31, %s38
      %p386 = scmp.eq.s32.totalorder %s385, 0
      %s388 = sadd.s32 %s387, 1
      %s389 = scalar_select %p386, %s387, %s388
      %p392 = pneg %p386
      %p393 = scmp.eq.s32.totalorder %s31, 7
      %p394 = por %p392, %p393
      %p395 = scmp.ne.s32.totalorder %s387, %s390
      %p396 = scmp.eq.s32.totalorder %s31, 0
      %p397 = por %p395, %p396
      %p398 = scmp.ne.s32.totalorder %s387, %s390
      %p399 = scmp.eq.s32.totalorder %s36, 7
      %p400 = por %p398, %p399
      %p401 = scmp.ne.s32.totalorder %s390, %s391
      %p402 = scmp.eq.s32.totalorder %s36, 0
      %p403 = por %p401, %p402
      %p404 = scmp.ne.s32.totalorder %s390, %s391
      %p405 = scmp.eq.s32.totalorder %s37, 7
      %p406 = por %p404, %p405
      %p408 = scmp.ne.s32.totalorder %s391, %s407
      %p409 = scmp.eq.s32.totalorder %s37, 0
      %p410 = por %p408, %p409
      %s412 = sadd.s32 %s411, 1
      %p415 = scmp.eq.s32.totalorder %s31, 7
      %p416 = scmp.ne.s32.totalorder %s411, %s413
      %p417 = scmp.eq.s32.totalorder %s31, 0
      %p418 = por %p416, %p417
      %p419 = scmp.ne.s32.totalorder %s411, %s413
      %p420 = scmp.eq.s32.totalorder %s36, 7
      %p421 = por %p419, %p420
      %p422 = scmp.ne.s32.totalorder %s413, %s414
      %p423 = scmp.eq.s32.totalorder %s36, 0
      %p424 = por %p422, %p423
      %p425 = scmp.ne.s32.totalorder %s413, %s414
      %p426 = scmp.eq.s32.totalorder %s37, 7
      %p427 = por %p425, %p426
      %p429 = scmp.ne.s32.totalorder %s414, %s428
      %p430 = scmp.eq.s32.totalorder %s37, 0
      %p431 = por %p429, %p430
      %s433 = sadd.s32 %s432, 1
      %p436 = scmp.eq.s32.totalorder %s31, 7
      %p437 = scmp.ne.s32.totalorder %s432, %s434
      %p438 = scmp.eq.s32.totalorder %s31, 0
      %p439 = por %p437, %p438
      %p440 = scmp.ne.s32.totalorder %s432, %s434
      %p441 = scmp.eq.s32.totalorder %s36, 7
      %p442 = por %p440, %p441
      %p443 = scmp.ne.s32.totalorder %s434, %s435
      %p444 = scmp.eq.s32.totalorder %s36, 0
      %p445 = por %p443, %p444
      %p446 = scmp.ne.s32.totalorder %s434, %s435
      %p447 = scmp.eq.s32.totalorder %s37, 7
      %p448 = por %p446, %p447
      %p450 = scmp.ne.s32.totalorder %s435, %s449
      %p451 = scmp.eq.s32.totalorder %s37, 0
      %p452 = por %p450, %p451
      %s454 = sadd.s32 %s453, 1
      %p457 = scmp.eq.s32.totalorder %s31, 7
      %p458 = scmp.ne.s32.totalorder %s453, %s455
      %p459 = scmp.eq.s32.totalorder %s31, 0
      %p460 = por %p458, %p459
      %p461 = scmp.ne.s32.totalorder %s453, %s455
      %p462 = scmp.eq.s32.totalorder %s36, 7
      %p463 = por %p461, %p462
      %p464 = scmp.ne.s32.totalorder %s455, %s456
      %p465 = scmp.eq.s32.totalorder %s36, 0
      %p466 = por %p464, %p465
      %p467 = scmp.ne.s32.totalorder %s455, %s456
      %p468 = scmp.eq.s32.totalorder %s37, 7
      %p469 = por %p467, %p468
      %p471 = scmp.ne.s32.totalorder %s456, %s470
      %p472 = scmp.eq.s32.totalorder %s37, 0
      %p473 = por %p471, %p472
      %s475 = sadd.s32 %s474, 1
      %p478 = scmp.eq.s32.totalorder %s31, 7
      %p479 = scmp.ne.s32.totalorder %s474, %s476
      %p480 = scmp.eq.s32.totalorder %s31, 0
      %p481 = por %p479, %p480
      %p482 = scmp.ne.s32.totalorder %s474, %s476
      %p483 = scmp.eq.s32.totalorder %s36, 7
      %p484 = por %p482, %p483
      %p485 = scmp.ne.s32.totalorder %s476, %s477
      %p486 = scmp.eq.s32.totalorder %s36, 0
      %p487 = por %p485, %p486
      %p488 = scmp.ne.s32.totalorder %s476, %s477
      %p489 = scmp.eq.s32.totalorder %s37, 7
      %p490 = por %p488, %p489
      %p492 = scmp.ne.s32.totalorder %s477, %s491
      %p493 = scmp.eq.s32.totalorder %s37, 0
      %p494 = por %p492, %p493
      %s496 = sadd.s32 %s495, 1
      %p499 = scmp.eq.s32.totalorder %s31, 7
      %p500 = scmp.ne.s32.totalorder %s495, %s497
      %p501 = scmp.eq.s32.totalorder %s31, 0
      %p502 = por %p500, %p501
      %p503 = scmp.ne.s32.totalorder %s495, %s497
      %p504 = scmp.eq.s32.totalorder %s36, 7
      %p505 = por %p503, %p504
      %p506 = scmp.ne.s32.totalorder %s497, %s498
      %p507 = scmp.eq.s32.totalorder %s36, 0
      %p508 = por %p506, %p507
      %p509 = scmp.ne.s32.totalorder %s497, %s498
      %p510 = scmp.eq.s32.totalorder %s37, 7
      %p511 = por %p509, %p510
      %p513 = scmp.ne.s32.totalorder %s498, %s512
      %p514 = scmp.eq.s32.totalorder %s37, 0
      %p515 = por %p513, %p514
      %s517 = sadd.s32 %s516, 1
      %p520 = scmp.eq.s32.totalorder %s31, 7
      %p521 = scmp.ne.s32.totalorder %s516, %s518
      %p522 = scmp.eq.s32.totalorder %s31, 0
      %p523 = por %p521, %p522
      %p524 = scmp.ne.s32.totalorder %s516, %s518
      %p525 = scmp.eq.s32.totalorder %s36, 7
      %p526 = por %p524, %p525
      %p527 = scmp.ne.s32.totalorder %s518, %s519
      %p528 = scmp.eq.s32.totalorder %s36, 0
      %p529 = por %p527, %p528
      %p530 = scmp.ne.s32.totalorder %s518, %s519
      %p531 = scmp.eq.s32.totalorder %s37, 7
      %p532 = por %p530, %p531
      %p534 = scmp.ne.s32.totalorder %s519, %s533
      %p535 = scmp.eq.s32.totalorder %s37, 0
      %p536 = por %p534, %p535
      %s538 = sadd.s32 %s537, 1
      %p541 = scmp.eq.s32.totalorder %s31, 7
      %p542 = scmp.ne.s32.totalorder %s537, %s539
      %p543 = scmp.eq.s32.totalorder %s31, 0
      %p544 = por %p542, %p543
      %p545 = scmp.ne.s32.totalorder %s537, %s539
      %p546 = scmp.eq.s32.totalorder %s36, 7
      %p547 = por %p545, %p546
      %p548 = scmp.ne.s32.totalorder %s539, %s540
      %p549 = scmp.eq.s32.totalorder %s36, 0
      %p550 = por %p548, %p549
      %p551 = scmp.ne.s32.totalorder %s539, %s540
      %p552 = scmp.eq.s32.totalorder %s37, 7
      %p553 = por %p551, %p552
      %p555 = scmp.ne.s32.totalorder %s540, %s554
      %p556 = scmp.eq.s32.totalorder %s37, 0
      %p557 = por %p555, %p556
      %p558 = scmp.le.s32.totalorder 1, %s31
      %p559 = scmp.lt.s32.totalorder %s31, 9
      %p560 = pnand %p558, %p559
      %p561 = pneg %p560
      // Predicated region
      $region9: #{fwd.1} parent=5 // pred_check
        _
      $region10: #{fwd.1} parent=5 // pred_check_branch
        %563 = sbr.rel (%p560) target = $region12
      $region11: #{fwd.1} parent=5 // pred_region
        %s564 = ssub.s32 %s31, 1
        // Predicated region
        $region13: #{fwd.1} parent=11 // pred_check
          %p565 = pneg %p52
        $region14: #{fwd.1} parent=11 // pred_check_branch
          %567 = sbr.rel (%p565) target = $region16
        $region15: #{fwd.1} parent=11 // pred_region
          _
        $region16: #{fwd.1} parent=11 // pred_fallthru
          _
        // Predicated region
        $region17: #{fwd.1} parent=11 // pred_check
          %p568 = pneg %p73
        $region18: #{fwd.1} parent=11 // pred_check_branch
          %570 = sbr.rel (%p568) target = $region20
        $region19: #{fwd.1} parent=11 // pred_region
          _
        $region20: #{fwd.1} parent=11 // pred_fallthru
          _
        // Predicated region
        $region21: #{fwd.1} parent=11 // pred_check
          %p571 = pneg %p94
        $region22: #{fwd.1} parent=11 // pred_check_branch
          %573 = sbr.rel (%p571) target = $region24
        $region23: #{fwd.1} parent=11 // pred_region
          _
        $region24: #{fwd.1} parent=11 // pred_fallthru
          _
        // Predicated region
        $region25: #{fwd.1} parent=11 // pred_check
          %p574 = pneg %p115
        $region26: #{fwd.1} parent=11 // pred_check_branch
          %576 = sbr.rel (%p574) target = $region28
        $region27: #{fwd.1} parent=11 // pred_region
          _
        $region28: #{fwd.1} parent=11 // pred_fallthru
          _
        // Predicated region
        $region29: #{fwd.1} parent=11 // pred_check
          %p577 = pneg %p136
        $region30: #{fwd.1} parent=11 // pred_check_branch
          %579 = sbr.rel (%p577) target = $region32
        $region31: #{fwd.1} parent=11 // pred_region
          _
        $region32: #{fwd.1} parent=11 // pred_fallthru
          _
        // Predicated region
        $region33: #{fwd.1} parent=11 // pred_check
          %p580 = pneg %p157
        $region34: #{fwd.1} parent=11 // pred_check_branch
          %582 = sbr.rel (%p580) target = $region36
        $region35: #{fwd.1} parent=11 // pred_region
          _
        $region36: #{fwd.1} parent=11 // pred_fallthru
          _
        // Predicated region
        $region37: #{fwd.1} parent=11 // pred_check
          %p583 = pneg %p178
        $region38: #{fwd.1} parent=11 // pred_check_branch
          %585 = sbr.rel (%p583) target = $region40
        $region39: #{fwd.1} parent=11 // pred_region
          _
        $region40: #{fwd.1} parent=11 // pred_fallthru
          _
        // Predicated region
        $region41: #{fwd.1} parent=11 // pred_check
          %p586 = pneg %p199
        $region42: #{fwd.1} parent=11 // pred_check_branch
          %588 = sbr.rel (%p586) target = $region44
        $region43: #{fwd.1} parent=11 // pred_region
          _
        $region44: #{fwd.1} parent=11 // pred_fallthru
          _
        // Predicated region
        $region45: #{fwd.1} parent=11 // pred_check
          %p589 = pneg %p220
        $region46: #{fwd.1} parent=11 // pred_check_branch
          %591 = sbr.rel (%p589) target = $region48
        $region47: #{fwd.1} parent=11 // pred_region
          _
        $region48: #{fwd.1} parent=11 // pred_fallthru
          _
        // Predicated region
        $region49: #{fwd.1} parent=11 // pred_check
          %p592 = pneg %p241
        $region50: #{fwd.1} parent=11 // pred_check_branch
          %594 = sbr.rel (%p592) target = $region52
        $region51: #{fwd.1} parent=11 // pred_region
          _
        $region52: #{fwd.1} parent=11 // pred_fallthru
          _
        // Predicated region
        $region53: #{fwd.1} parent=11 // pred_check
          %p595 = pneg %p262
        $region54: #{fwd.1} parent=11 // pred_check_branch
          %597 = sbr.rel (%p595) target = $region56
        $region55: #{fwd.1} parent=11 // pred_region
          _
        $region56: #{fwd.1} parent=11 // pred_fallthru
          _
        // Predicated region
        $region57: #{fwd.1} parent=11 // pred_check
          %p598 = pneg %p283
        $region58: #{fwd.1} parent=11 // pred_check_branch
          %600 = sbr.rel (%p598) target = $region60
        $region59: #{fwd.1} parent=11 // pred_region
          _
        $region60: #{fwd.1} parent=11 // pred_fallthru
          _
        // Predicated region
        $region61: #{fwd.1} parent=11 // pred_check
          %p601 = pneg %p304
        $region62: #{fwd.1} parent=11 // pred_check_branch
          %603 = sbr.rel (%p601) target = $region64
        $region63: #{fwd.1} parent=11 // pred_region
          _
        $region64: #{fwd.1} parent=11 // pred_fallthru
          _
        // Predicated region
        $region65: #{fwd.1} parent=11 // pred_check
          %p604 = pneg %p325
        $region66: #{fwd.1} parent=11 // pred_check_branch
          %606 = sbr.rel (%p604) target = $region68
        $region67: #{fwd.1} parent=11 // pred_region
          _
        $region68: #{fwd.1} parent=11 // pred_fallthru
          _
        // Predicated region
        $region69: #{fwd.1} parent=11 // pred_check
          %p607 = pneg %p424
        $region70: #{fwd.1} parent=11 // pred_check_branch
          %609 = sbr.rel (%p607) target = $region72
        $region71: #{fwd.1} parent=11 // pred_region
          _
        $region72: #{fwd.1} parent=11 // pred_fallthru
          _
        // Predicated region
        $region73: #{fwd.1} parent=11 // pred_check
          %p610 = pneg %p445
        $region74: #{fwd.1} parent=11 // pred_check_branch
          %612 = sbr.rel (%p610) target = $region76
        $region75: #{fwd.1} parent=11 // pred_region
          _
        $region76: #{fwd.1} parent=11 // pred_fallthru
          _
        // Predicated region
        $region77: #{fwd.1} parent=11 // pred_check
          %p613 = pneg %p466
        $region78: #{fwd.1} parent=11 // pred_check_branch
          %615 = sbr.rel (%p613) target = $region80
        $region79: #{fwd.1} parent=11 // pred_region
          _
        $region80: #{fwd.1} parent=11 // pred_fallthru
          _
        // Predicated region
        $region81: #{fwd.1} parent=11 // pred_check
          %p616 = pneg %p487
        $region82: #{fwd.1} parent=11 // pred_check_branch
          %618 = sbr.rel (%p616) target = $region84
        $region83: #{fwd.1} parent=11 // pred_region
          _
        $region84: #{fwd.1} parent=11 // pred_fallthru
          _
        // Predicated region
        $region85: #{fwd.1} parent=11 // pred_check
          %p619 = pneg %p508
        $region86: #{fwd.1} parent=11 // pred_check_branch
          %621 = sbr.rel (%p619) target = $region88
        $region87: #{fwd.1} parent=11 // pred_region
          _
        $region88: #{fwd.1} parent=11 // pred_fallthru
          _
      $region12: #{fwd.1} parent=5 // pred_fallthru
        _
      %p622 = scmp.lt.s32.totalorder %s31, 8
      // Predicated region
      $region89: #{fwd.1} parent=5 // pred_check
        %p623 = pneg %p622
      $region90: #{fwd.1} parent=5 // pred_check_branch
        %625 = sbr.rel (%p623) target = $region92
      $region91: #{fwd.1} parent=5 // pred_region
        // Predicated region
        $region93: #{fwd.1} parent=91 // pred_check
          %p626 = pneg %p345
        $region94: #{fwd.1} parent=91 // pred_check_branch
          %628 = sbr.rel (%p626) target = $region96
        $region95: #{fwd.1} parent=91 // pred_region
          %s629 = sand.u32 %s335, 1
          %s630 = sand.u32 %s335, 1
          %s631 = smul.addr %s630, 512
          %s632 = scalar_lea.vmem [#allocation5], %s631
          %s633 = smul.u32 4, %s31
          %s634 = smul.addr %s633, 8
          %s635 = scalar_lea.vmem %s14, %s634
          // Predicated region
          $region97: #{fwd.1} parent=95 // pred_check
            _
          $region98: #{fwd.1} parent=95 // pred_check_branch
            %637 = sbr.rel (0) target = $region100
          $region99: #{fwd.1} parent=95 // pred_region
            // Predicated region
            $region101: #{fwd.1} parent=99 // pred_check
              _
            $region102: #{fwd.1} parent=99 // pred_check_branch
              %639 = sbr.rel (0) target = $region104
            $region103: #{fwd.1} parent=99 // pred_region
              loop: start=0, step=1, limit=1
              $region105: #{fwd.1} parent=103 // loop_pre_header
                _
              $region106: #{fwd.1} parent=103 // loop_header
                %s641 = sphi 0, %s645
                %p642 = scmp.ge.s32.totalorder %s641, 1
                %s646 = sphi %s635, %s635
                %s647 = sphi %s632, %s632
              $region107: #{fwd.1} parent=103 // loop_header_branch
                %644 = sbr.rel (%p642) target = $region111
              $region108: #{fwd.1} parent=103 // loop_body
                %v648 = vld [vmem:[%s646] sm:$0xff]
                %649 = vst [vmem:[%s647] sm:$0xff] %v648
                %v650 = vld [vmem:[%s646 + $0x8] sm:$0xff]
                %651 = vst [vmem:[%s647 + $0x8] sm:$0xff] %v650
                %v652 = vld [vmem:[%s646 + $0x10] sm:$0xff]
                %653 = vst [vmem:[%s647 + $0x10] sm:$0xff] %v652
                %v654 = vld [vmem:[%s646 + $0x18] sm:$0xff]
                %655 = vst [vmem:[%s647 + $0x18] sm:$0xff] %v654
                %v656 = vld [vmem:[%s646 + $0x100] sm:$0xff]
                %657 = vst [vmem:[%s647 + $0x20] sm:$0xff] %v656
                %v658 = vld [vmem:[%s646 + $0x108] sm:$0xff]
                %659 = vst [vmem:[%s647 + $0x28] sm:$0xff] %v658
                %v660 = vld [vmem:[%s646 + $0x110] sm:$0xff]
                %661 = vst [vmem:[%s647 + $0x30] sm:$0xff] %v660
                %v662 = vld [vmem:[%s646 + $0x118] sm:$0xff]
                %663 = vst [vmem:[%s647 + $0x38] sm:$0xff] %v662
                %v664 = vld [vmem:[%s646 + $0x200] sm:$0xff]
                %665 = vst [vmem:[%s647 + $0x40] sm:$0xff] %v664
                %v666 = vld [vmem:[%s646 + $0x208] sm:$0xff]
                %667 = vst [vmem:[%s647 + $0x48] sm:$0xff] %v666
                %v668 = vld [vmem:[%s646 + $0x210] sm:$0xff]
                %669 = vst [vmem:[%s647 + $0x50] sm:$0xff] %v668
                %v670 = vld [vmem:[%s646 + $0x218] sm:$0xff]
                %671 = vst [vmem:[%s647 + $0x58] sm:$0xff] %v670
                %v672 = vld [vmem:[%s646 + $0x300] sm:$0xff]
                %673 = vst [vmem:[%s647 + $0x60] sm:$0xff] %v672
                %v674 = vld [vmem:[%s646 + $0x308] sm:$0xff]
                %675 = vst [vmem:[%s647 + $0x68] sm:$0xff] %v674
                %v676 = vld [vmem:[%s646 + $0x310] sm:$0xff]
                %677 = vst [vmem:[%s647 + $0x70] sm:$0xff] %v676
                %v678 = vld [vmem:[%s646 + $0x318] sm:$0xff]
                %679 = vst [vmem:[%s647 + $0x78] sm:$0xff] %v678
                %v680 = vld [vmem:[%s646 + $0x400] sm:$0xff]
                %681 = vst [vmem:[%s647 + $0x80] sm:$0xff] %v680
                %v682 = vld [vmem:[%s646 + $0x408] sm:$0xff]
                %683 = vst [vmem:[%s647 + $0x88] sm:$0xff] %v682
                %v684 = vld [vmem:[%s646 + $0x410] sm:$0xff]
                %685 = vst [vmem:[%s647 + $0x90] sm:$0xff] %v684
                %v686 = vld [vmem:[%s646 + $0x418] sm:$0xff]
                %687 = vst [vmem:[%s647 + $0x98] sm:$0xff] %v686
                %v688 = vld [vmem:[%s646 + $0x500] sm:$0xff]
                %689 = vst [vmem:[%s647 + $0xa0] sm:$0xff] %v688
                %v690 = vld [vmem:[%s646 + $0x508] sm:$0xff]
                %691 = vst [vmem:[%s647 + $0xa8] sm:$0xff] %v690
                %v692 = vld [vmem:[%s646 + $0x510] sm:$0xff]
                %693 = vst [vmem:[%s647 + $0xb0] sm:$0xff] %v692
                %v694 = vld [vmem:[%s646 + $0x518] sm:$0xff]
                %695 = vst [vmem:[%s647 + $0xb8] sm:$0xff] %v694
                %v696 = vld [vmem:[%s646 + $0x600] sm:$0xff]
                %697 = vst [vmem:[%s647 + $0xc0] sm:$0xff] %v696
                %v698 = vld [vmem:[%s646 + $0x608] sm:$0xff]
                %699 = vst [vmem:[%s647 + $0xc8] sm:$0xff] %v698
                %v700 = vld [vmem:[%s646 + $0x610] sm:$0xff]
                %701 = vst [vmem:[%s647 + $0xd0] sm:$0xff] %v700
                %v702 = vld [vmem:[%s646 + $0x618] sm:$0xff]
                %703 = vst [vmem:[%s647 + $0xd8] sm:$0xff] %v702
                %v704 = vld [vmem:[%s646 + $0x700] sm:$0xff]
                %705 = vst [vmem:[%s647 + $0xe0] sm:$0xff] %v704
                %v706 = vld [vmem:[%s646 + $0x708] sm:$0xff]
                %707 = vst [vmem:[%s647 + $0xe8] sm:$0xff] %v706
                %v708 = vld [vmem:[%s646 + $0x710] sm:$0xff]
                %709 = vst [vmem:[%s647 + $0xf0] sm:$0xff] %v708
                %v710 = vld [vmem:[%s646 + $0x718] sm:$0xff]
                %711 = vst [vmem:[%s647 + $0xf8] sm:$0xff] %v710
                %v712 = vld [vmem:[%s646 + $0x800] sm:$0xff]
                %713 = vst [vmem:[%s647 + $0x100] sm:$0xff] %v712
                %v714 = vld [vmem:[%s646 + $0x808] sm:$0xff]
                %715 = vst [vmem:[%s647 + $0x108] sm:$0xff] %v714
                %v716 = vld [vmem:[%s646 + $0x810] sm:$0xff]
                %717 = vst [vmem:[%s647 + $0x110] sm:$0xff] %v716
                %v718 = vld [vmem:[%s646 + $0x818] sm:$0xff]
                %719 = vst [vmem:[%s647 + $0x118] sm:$0xff] %v718
                %v720 = vld [vmem:[%s646 + $0x900] sm:$0xff]
                %721 = vst [vmem:[%s647 + $0x120] sm:$0xff] %v720
                %v722 = vld [vmem:[%s646 + $0x908] sm:$0xff]
                %723 = vst [vmem:[%s647 + $0x128] sm:$0xff] %v722
                %v724 = vld [vmem:[%s646 + $0x910] sm:$0xff]
                %725 = vst [vmem:[%s647 + $0x130] sm:$0xff] %v724
                %v726 = vld [vmem:[%s646 + $0x918] sm:$0xff]
                %727 = vst [vmem:[%s647 + $0x138] sm:$0xff] %v726
                %v728 = vld [vmem:[%s646 + $0xa00] sm:$0xff]
                %729 = vst [vmem:[%s647 + $0x140] sm:$0xff] %v728
                %v730 = vld [vmem:[%s646 + $0xa08] sm:$0xff]
                %731 = vst [vmem:[%s647 + $0x148] sm:$0xff] %v730
                %v732 = vld [vmem:[%s646 + $0xa10] sm:$0xff]
                %733 = vst [vmem:[%s647 + $0x150] sm:$0xff] %v732
                %v734 = vld [vmem:[%s646 + $0xa18] sm:$0xff]
                %735 = vst [vmem:[%s647 + $0x158] sm:$0xff] %v734
                %v736 = vld [vmem:[%s646 + $0xb00] sm:$0xff]
                %737 = vst [vmem:[%s647 + $0x160] sm:$0xff] %v736
                %v738 = vld [vmem:[%s646 + $0xb08] sm:$0xff]
                %739 = vst [vmem:[%s647 + $0x168] sm:$0xff] %v738
                %v740 = vld [vmem:[%s646 + $0xb10] sm:$0xff]
                %741 = vst [vmem:[%s647 + $0x170] sm:$0xff] %v740
                %v742 = vld [vmem:[%s646 + $0xb18] sm:$0xff]
                %743 = vst [vmem:[%s647 + $0x178] sm:$0xff] %v742
                %v744 = vld [vmem:[%s646 + $0xc00] sm:$0xff]
                %745 = vst [vmem:[%s647 + $0x180] sm:$0xff] %v744
                %v746 = vld [vmem:[%s646 + $0xc08] sm:$0xff]
                %747 = vst [vmem:[%s647 + $0x188] sm:$0xff] %v746
                %v748 = vld [vmem:[%s646 + $0xc10] sm:$0xff]
                %749 = vst [vmem:[%s647 + $0x190] sm:$0xff] %v748
                %v750 = vld [vmem:[%s646 + $0xc18] sm:$0xff]
                %751 = vst [vmem:[%s647 + $0x198] sm:$0xff] %v750
                %v752 = vld [vmem:[%s646 + $0xd00] sm:$0xff]
                %753 = vst [vmem:[%s647 + $0x1a0] sm:$0xff] %v752
                %v754 = vld [vmem:[%s646 + $0xd08] sm:$0xff]
                %755 = vst [vmem:[%s647 + $0x1a8] sm:$0xff] %v754
                %v756 = vld [vmem:[%s646 + $0xd10] sm:$0xff]
                %757 = vst [vmem:[%s647 + $0x1b0] sm:$0xff] %v756
                %v758 = vld [vmem:[%s646 + $0xd18] sm:$0xff]
                %759 = vst [vmem:[%s647 + $0x1b8] sm:$0xff] %v758
                %v760 = vld [vmem:[%s646 + $0xe00] sm:$0xff]
                %761 = vst [vmem:[%s647 + $0x1c0] sm:$0xff] %v760
                %v762 = vld [vmem:[%s646 + $0xe08] sm:$0xff]
                %763 = vst [vmem:[%s647 + $0x1c8] sm:$0xff] %v762
                %v764 = vld [vmem:[%s646 + $0xe10] sm:$0xff]
                %765 = vst [vmem:[%s647 + $0x1d0] sm:$0xff] %v764
                %v766 = vld [vmem:[%s646 + $0xe18] sm:$0xff]
                %767 = vst [vmem:[%s647 + $0x1d8] sm:$0xff] %v766
                %v768 = vld [vmem:[%s646 + $0xf00] sm:$0xff]
                %769 = vst [vmem:[%s647 + $0x1e0] sm:$0xff] %v768
                %v770 = vld [vmem:[%s646 + $0xf08] sm:$0xff]
                %771 = vst [vmem:[%s647 + $0x1e8] sm:$0xff] %v770
                %v772 = vld [vmem:[%s646 + $0xf10] sm:$0xff]
                %773 = vst [vmem:[%s647 + $0x1f0] sm:$0xff] %v772
                %v774 = vld [vmem:[%s646 + $0xf18] sm:$0xff]
                %775 = vst [vmem:[%s647 + $0x1f8] sm:$0xff] %v774
              $region109: #{fwd.1} parent=103 // loop_footer
                %s645 = sadd.s32 1, %s641
              $region110: #{fwd.1} parent=103 // loop_footer_branch
                %640 = sbr.rel target = $region106
              $region111: #{fwd.1} parent=103 // loop_exit
                _
            $region104: #{fwd.1} parent=99 // pred_fallthru
              _
            // Predicated region
            $region112: #{fwd.1} parent=99 // pred_check
              _
            $region113: #{fwd.1} parent=99 // pred_check_branch
              %777 = sbr.rel target = $region115
            $region114: #{fwd.1} parent=99 // pred_region
              _
            $region115: #{fwd.1} parent=99 // pred_fallthru
              _
          $region100: #{fwd.1} parent=95 // pred_fallthru
            _
          %778 = vnop
        $region96: #{fwd.1} parent=91 // pred_fallthru
          _
        // Predicated region
        $region116: #{fwd.1} parent=91 // pred_check
          %p779 = pneg %p371
        $region117: #{fwd.1} parent=91 // pred_check_branch
          %781 = sbr.rel (%p779) target = $region119
        $region118: #{fwd.1} parent=91 // pred_region
          %s782 = smul.u32 4, %s31
          %p783 = scmp.lt.s32.totalorder %s782, 31
          %s784 = scalar_select %p783, %s782, 31
          %s785 = scalar_lea.vmem %s15, %s784
          %s786 = smul.u32 4, %s31
        $region119: #{fwd.1} parent=91 // pred_fallthru
          _
        // Predicated region
        $region120: #{fwd.1} parent=91 // pred_check
          %p787 = pneg %p397
        $region121: #{fwd.1} parent=91 // pred_check_branch
          %789 = sbr.rel (%p787) target = $region123
        $region122: #{fwd.1} parent=91 // pred_region
          %s790 = smul.u32 64, %s31
          %p791 = scmp.lt.s32.totalorder %s790, 511
          %s792 = scalar_select %p791, %s790, 511
          %s793 = smul.addr %s792, 8
          %s794 = scalar_lea.vmem %s16, %s793
          %s795 = smul.u32 64, %s31
        $region123: #{fwd.1} parent=91 // pred_fallthru
          _
      $region92: #{fwd.1} parent=5 // pred_fallthru
        _
      %p796 = scmp.le.s32.totalorder 1, %s31
      %p797 = scmp.lt.s32.totalorder %s31, 9
      %p798 = pnand %p796, %p797
      %p799 = pneg %p798
      // Predicated region
      $region124: #{fwd.1} parent=5 // pred_check
        _
      $region125: #{fwd.1} parent=5 // pred_check_branch
        %801 = sbr.rel (%p798) target = $region127
      $region126: #{fwd.1} parent=5 // pred_region
        %s802 = ssub.s32 %s31, 1
        %s803 = sand.u32 %s338, 1
        %s804 = sand.u32 %s338, 1
        %s805 = smul.addr %s804, 512
        %s806 = scalar_lea.vmem [#allocation5], %s805
        // Predicated region
        $region128: #{fwd.1} parent=126 // pred_check
          %p807 = pneg %p351
        $region129: #{fwd.1} parent=126 // pred_check_branch
          %809 = sbr.rel (%p807) target = $region131
        $region130: #{fwd.1} parent=126 // pred_region
          _
        $region131: #{fwd.1} parent=126 // pred_fallthru
          _
        %p810 = pneg %p52
        %p811 = pneg %p49
        %p812 = pneg %p73
        %p813 = pneg %p70
        %p814 = pneg %p94
        %p815 = pneg %p91
        %p816 = pneg %p115
        %p817 = pneg %p112
        %p818 = pneg %p136
        %p819 = pneg %p133
        %p820 = pneg %p157
        %p821 = pneg %p154
        %p822 = pneg %p178
        %p823 = pneg %p175
        %p824 = pneg %p199
        %p825 = pneg %p196
        %p826 = pneg %p220
        %p827 = pneg %p217
        %p828 = pneg %p241
        %p829 = pneg %p238
        %p830 = pneg %p262
        %p831 = pneg %p259
        %p832 = pneg %p283
        %p833 = pneg %p280
        %p834 = pneg %p304
        %p835 = pneg %p301
        %p836 = pneg %p325
        %p837 = pneg %p322
        %s838 = sand.u32 %s338, 1
        %s839 = sand.u32 %s338, 1
        %s840 = smul.addr %s839, 512
        %s841 = scalar_lea.vmem [#allocation5], %s840
        %p842 = pneg %p351
        %p843 = pneg %p348
        %s844 = smul.u32 4, %s36
        %p845 = scmp.lt.s32.totalorder %s844, 31
        %s846 = scalar_select %p845, %s844, 31
        %s847 = scalar_lea.vmem %s15, %s846
        %p848 = pneg %p377
        %p849 = pneg %p374
        %s850 = smul.u32 64, %s36
        %p851 = scmp.lt.s32.totalorder %s850, 511
        %s852 = scalar_select %p851, %s850, 511
        %s853 = smul.addr %s852, 8
        %s854 = scalar_lea.vmem %s16, %s853
        %p855 = pneg %p403
        %p856 = pneg %p400
        %p857 = pneg %p424
        %p858 = pneg %p421
        %p859 = pneg %p445
        %p860 = pneg %p442
        %p861 = pneg %p466
        %p862 = pneg %p463
        %p863 = pneg %p487
        %p864 = pneg %p484
        %p865 = pneg %p508
        %p866 = pneg %p505
        %p867 = pneg %p529
        %p868 = pneg %p526
        %p869 = pneg %p550
        %p870 = pneg %p547
        %s871 = smul.u32 4, %s36
        %s872 = smul.u32 4, %s36
        %p873 = scmp.lt.s32.totalorder %s872, 31
        %s874 = scalar_select %p873, %s872, 31
        %s875 = scalar_lea.vmem %s15, %s874
        %s876 = smul.u32 4, %s36
        %s877 = smul.u32 64, %s36
        %p878 = scmp.lt.s32.totalorder %s877, 511
        %s879 = scalar_select %p878, %s877, 511
        %s880 = smul.addr %s879, 8
        %s881 = scalar_lea.vmem %s16, %s880
        %s882 = smul.u32 64, %s36
        %p883 = scmp.eq.s32.totalorder %s36, 0
        // Predicated region
        $region132: #{fwd.1} parent=126 // pred_check
          %p884 = pneg %p883
        $region133: #{fwd.1} parent=126 // pred_check_branch
          %886 = sbr.rel (%p884) target = $region135
        $region134: #{fwd.1} parent=126 // pred_region
          %v887 = vld [vmem:[%s0] sm:$0xff]
          %v888 = vld [vmem:[%s0 + $0x8] sm:$0x3f]
          %v889 = vld [vmem:[%s1] sm:$0xff]
          %v890 = vld [vmem:[%s1 + $0x8] sm:$0xff]
          %v891 = vld [vmem:[%s2] sm:$0x1]
          %v893 = vlaneseq
          %v894 = vshrl.u32 %v893, 7
          %v895 = vsub.s32 0, %v894
          %v896 = vrot.slane %v891, %v895
          %vm898 = vcmask 130048
          %v900 = vsel %vm898, %v887, 0
          %v903 = vsel %vm898, %v888, 0
          %905 = vmatprep.subr.mxu0 0.0
          %906 = vmatpush1.msra.mxu0 0.0
          %907 = vmatprep.subr.mxu0 0.0
          %908 = vmatpush1.msra.mxu0 0.0
          %909 = vmatprep.subr.mxu0 0.0
          %910 = vmatpush1.msra.mxu0 0.0
          %911 = vmatprep.subr.mxu0 0.0
          %912 = vmatpush1.msra.mxu0 0.0
          %913 = vmatprep.subr.mxu0 0.0
          %914 = vmatpush1.msra.mxu0 0.0
          %915 = vmatprep.subr.mxu0 0.0
          %916 = vmatpush1.msra.mxu0 0.0
          %917 = vmatprep.subr.mxu0 0.0
          %918 = vmatpush1.msra.mxu0 0.0
          %919 = vmatprep.subr.mxu0 0.0
          %920 = vmatpush1.msra.mxu0 0.0
          %921 = vmatprep.subr.mxu0 0.0
          %922 = vmatpush1.msra.mxu0 0.0
          %923 = vmatprep.subr.mxu0 0.0
          %924 = vmatpush1.msra.mxu0 0.0
          %925 = vmatprep.subr.mxu0 0.0
          %926 = vmatpush1.msra.mxu0 0.0
          %927 = vmatprep.subr.mxu0 0.0
          %928 = vmatpush1.msra.mxu0 0.0
          %929 = vmatprep.subr.mxu0 0.0
          %930 = vmatpush1.msra.mxu0 0.0
          %931 = vmatprep.subr.mxu0 0.0
          %932 = vmatpush1.msra.mxu0 0.0
          %933 = vmatprep.subr.mxu0 0.0
          %934 = vmatpush1.msra.mxu0 %v890
          %935 = vmatprep.subr.mxu0 0.0
          %936 = vmatpush1.msra.mxu0 %v889
          %937 = vmatprep.subr.mxu0 0.0
          %938 = vmatpush2.msra.mxu0 0.0
          %939 = vmatprep.subr.mxu0 0.0
          %940 = vmatpush2.msra.mxu0 0.0
          %941 = vmatprep.subr.mxu0 0.0
          %942 = vmatpush2.msra.mxu0 0.0
          %943 = vmatprep.subr.mxu0 0.0
          %944 = vmatpush2.msra.mxu0 0.0
          %945 = vmatprep.subr.mxu0 0.0
          %946 = vmatpush2.msra.mxu0 0.0
          %947 = vmatprep.subr.mxu0 0.0
          %948 = vmatpush2.msra.mxu0 0.0
          %949 = vmatprep.subr.mxu0 0.0
          %950 = vmatpush2.msra.mxu0 0.0
          %951 = vmatprep.subr.mxu0 0.0
          %952 = vmatpush2.msra.mxu0 0.0
          %953 = vmatprep.subr.mxu0 0.0
          %954 = vmatpush2.msra.mxu0 0.0
          %955 = vmatprep.subr.mxu0 0.0
          %956 = vmatpush2.msra.mxu0 0.0
          %957 = vmatprep.subr.mxu0 0.0
          %958 = vmatpush2.msra.mxu0 0.0
          %959 = vmatprep.subr.mxu0 0.0
          %960 = vmatpush2.msra.mxu0 0.0
          %961 = vmatprep.subr.mxu0 0.0
          %962 = vmatpush2.msra.mxu0 0.0
          %963 = vmatprep.subr.mxu0 0.0
          %964 = vmatpush2.msra.mxu0 0.0
          %965 = vmatprep.subr.mxu0 0.0
          %966 = vmatpush2.msra.mxu0 0.0
          %967 = vmatprep.subr.mxu0 0.0
          %968 = vmatpush2.msra.mxu0 0.0
          %969 = vmatprep.mubr.f32.mxu0 0.0
          %970 = vmatmul.mubr.f32.gmra.mxu0 %v900
          %v971 = vpop.f32.mrf.mxu0
          %v972 = vadd.f32 %v896, %v971
          %v973 = vpop.f32.mrf.mxu0
          %974 = vmatprep.mubr.f32.mxu0 0.0
          %975 = vmatmul.mubr.f32.gmra.mxu0 %v903
          %v976 = vpop.f32.mrf.mxu0
          %v977 = vadd.f32 %v896, %v976
          %v978 = vpop.f32.mrf.mxu0
          %979 = vdwg.mxu0
          %v980 = vld [vmem:[%s3] sm:$0xff]
          %v981 = vld [vmem:[%s3 + $0x8] sm:$0xff]
          %vm982 = vcmask 113664
          %v984 = vsel %vm982, %v980, 0
          %v987 = vsel %vm982, %v981, 0
          %vm989 = vcmask 1045504
          %v991 = vsel %vm989, %v977, 0
          %993 = vmatprep.subr.mxu0 0.0
          %994 = vmatpush1.msra.mxu0 0.0
          %995 = vmatprep.subr.mxu0 0.0
          %996 = vmatpush1.msra.mxu0 0.0
          %997 = vmatprep.subr.mxu0 0.0
          %998 = vmatpush1.msra.mxu0 0.0
          %999 = vmatprep.subr.mxu0 0.0
          %1000 = vmatpush1.msra.mxu0 0.0
          %1001 = vmatprep.subr.mxu0 0.0
          %1002 = vmatpush1.msra.mxu0 0.0
          %1003 = vmatprep.subr.mxu0 0.0
          %1004 = vmatpush1.msra.mxu0 0.0
          %1005 = vmatprep.subr.mxu0 0.0
          %1006 = vmatpush1.msra.mxu0 0.0
          %1007 = vmatprep.subr.mxu0 0.0
          %1008 = vmatpush1.msra.mxu0 0.0
          %1009 = vmatprep.subr.mxu0 0.0
          %1010 = vmatpush1.msra.mxu0 0.0
          %1011 = vmatprep.subr.mxu0 0.0
          %1012 = vmatpush1.msra.mxu0 0.0
          %1013 = vmatprep.subr.mxu0 0.0
          %1014 = vmatpush1.msra.mxu0 0.0
          %1015 = vmatprep.subr.mxu0 0.0
          %1016 = vmatpush1.msra.mxu0 0.0
          %1017 = vmatprep.subr.mxu0 0.0
          %1018 = vmatpush1.msra.mxu0 0.0
          %1019 = vmatprep.subr.mxu0 0.0
          %1020 = vmatpush1.msra.mxu0 0.0
          %1021 = vmatprep.subr.mxu0 0.0
          %1022 = vmatpush1.msra.mxu0 %v991
          %1023 = vmatprep.subr.mxu0 0.0
          %1024 = vmatpush1.msra.mxu0 %v972
          %1025 = vmatprep.subr.mxu0 0.0
          %1026 = vmatpush2.msra.mxu0 0.0
          %1027 = vmatprep.subr.mxu0 0.0
          %1028 = vmatpush2.msra.mxu0 0.0
          %1029 = vmatprep.subr.mxu0 0.0
          %1030 = vmatpush2.msra.mxu0 0.0
          %1031 = vmatprep.subr.mxu0 0.0
          %1032 = vmatpush2.msra.mxu0 0.0
          %1033 = vmatprep.subr.mxu0 0.0
          %1034 = vmatpush2.msra.mxu0 0.0
          %1035 = vmatprep.subr.mxu0 0.0
          %1036 = vmatpush2.msra.mxu0 0.0
          %1037 = vmatprep.subr.mxu0 0.0
          %1038 = vmatpush2.msra.mxu0 0.0
          %1039 = vmatprep.subr.mxu0 0.0
          %1040 = vmatpush2.msra.mxu0 0.0
          %1041 = vmatprep.subr.mxu0 0.0
          %1042 = vmatpush2.msra.mxu0 0.0
          %1043 = vmatprep.subr.mxu0 0.0
          %1044 = vmatpush2.msra.mxu0 0.0
          %1045 = vmatprep.subr.mxu0 0.0
          %1046 = vmatpush2.msra.mxu0 0.0
          %1047 = vmatprep.subr.mxu0 0.0
          %1048 = vmatpush2.msra.mxu0 0.0
          %1049 = vmatprep.subr.mxu0 0.0
          %1050 = vmatpush2.msra.mxu0 0.0
          %1051 = vmatprep.subr.mxu0 0.0
          %1052 = vmatpush2.msra.mxu0 0.0
          %1053 = vmatprep.subr.mxu0 0.0
          %1054 = vmatpush2.msra.mxu0 0.0
          %1055 = vmatprep.subr.mxu0 0.0
          %1056 = vmatpush2.msra.mxu0 0.0
          %1057 = vmatprep.mubr.f32.mxu0 0.0
          %1058 = vmatmul.mubr.f32.gmra.mxu0 %v984
          %v1059 = vpop.f32.mrf.mxu0
          %v1060 = vadd.f32 0.0, %v1059
          %v1061 = vpop.f32.mrf.mxu0
          %1062 = vmatprep.mubr.f32.mxu0 0.0
          %1063 = vmatmul.mubr.f32.gmra.mxu0 %v987
          %v1064 = vpop.f32.mrf.mxu0
          %v1065 = vadd.f32 0.0, %v1064
          %v1066 = vpop.f32.mrf.mxu0
          %1067 = vdwg.mxu0
          %v1068 = vld [vmem:[%s4] sm:$0xff]
          %v1069 = vld [vmem:[%s4 + $0x8] sm:$0xff]
          %v1070 = vld [vmem:[%s4 + $0x10] sm:$0xff]
          %v1071 = vld [vmem:[%s4 + $0x18] sm:$0xff]
          %v1072 = vld [vmem:[%s5] sm:$0xff]
          %v1073 = vld [vmem:[%s5 + $0x8] sm:$0xff]
          %vm1074 = vcmask 261120
          %v1076 = vsel %vm1074, %v1060, 0
          %v1079 = vsel %vm1074, %v1065, 0
          %1081 = vmatprep.subr.mxu0 0.0
          %1082 = vmatpush1.msra.mxu0 0.0
          %1083 = vmatprep.subr.mxu0 0.0
          %1084 = vmatpush1.msra.mxu0 0.0
          %1085 = vmatprep.subr.mxu0 0.0
          %1086 = vmatpush1.msra.mxu0 0.0
          %1087 = vmatprep.subr.mxu0 0.0
          %1088 = vmatpush1.msra.mxu0 0.0
          %1089 = vmatprep.subr.mxu0 0.0
          %1090 = vmatpush1.msra.mxu0 0.0
          %1091 = vmatprep.subr.mxu0 0.0
          %1092 = vmatpush1.msra.mxu0 0.0
          %1093 = vmatprep.subr.mxu0 0.0
          %1094 = vmatpush1.msra.mxu0 0.0
          %1095 = vmatprep.subr.mxu0 0.0
          %1096 = vmatpush1.msra.mxu0 0.0
          %1097 = vmatprep.subr.mxu0 0.0
          %1098 = vmatpush1.msra.mxu0 0.0
          %1099 = vmatprep.subr.mxu0 0.0
          %1100 = vmatpush1.msra.mxu0 0.0
          %1101 = vmatprep.subr.mxu0 0.0
          %1102 = vmatpush1.msra.mxu0 0.0
          %1103 = vmatprep.subr.mxu0 0.0
          %1104 = vmatpush1.msra.mxu0 0.0
          %1105 = vmatprep.subr.mxu0 0.0
          %1106 = vmatpush1.msra.mxu0 %v1071
          %1107 = vmatprep.subr.mxu0 0.0
          %1108 = vmatpush1.msra.mxu0 %v1070
          %1109 = vmatprep.subr.mxu0 0.0
          %1110 = vmatpush1.msra.mxu0 %v1069
          %1111 = vmatprep.subr.mxu0 0.0
          %1112 = vmatpush1.msra.mxu0 %v1068
          %1113 = vmatprep.subr.mxu0 0.0
          %1114 = vmatpush2.msra.mxu0 0.0
          %1115 = vmatprep.subr.mxu0 0.0
          %1116 = vmatpush2.msra.mxu0 0.0
          %1117 = vmatprep.subr.mxu0 0.0
          %1118 = vmatpush2.msra.mxu0 0.0
          %1119 = vmatprep.subr.mxu0 0.0
          %1120 = vmatpush2.msra.mxu0 0.0
          %1121 = vmatprep.subr.mxu0 0.0
          %1122 = vmatpush2.msra.mxu0 0.0
          %1123 = vmatprep.subr.mxu0 0.0
          %1124 = vmatpush2.msra.mxu0 0.0
          %1125 = vmatprep.subr.mxu0 0.0
          %1126 = vmatpush2.msra.mxu0 0.0
          %1127 = vmatprep.subr.mxu0 0.0
          %1128 = vmatpush2.msra.mxu0 0.0
          %1129 = vmatprep.subr.mxu0 0.0
          %1130 = vmatpush2.msra.mxu0 0.0
          %1131 = vmatprep.subr.mxu0 0.0
          %1132 = vmatpush2.msra.mxu0 0.0
          %1133 = vmatprep.subr.mxu0 0.0
          %1134 = vmatpush2.msra.mxu0 0.0
          %1135 = vmatprep.subr.mxu0 0.0
          %1136 = vmatpush2.msra.mxu0 0.0
          %1137 = vmatprep.subr.mxu0 0.0
          %1138 = vmatpush2.msra.mxu0 0.0
          %1139 = vmatprep.subr.mxu0 0.0
          %1140 = vmatpush2.msra.mxu0 0.0
          %1141 = vmatprep.subr.mxu0 0.0
          %1142 = vmatpush2.msra.mxu0 0.0
          %1143 = vmatprep.subr.mxu0 0.0
          %1144 = vmatpush2.msra.mxu0 0.0
          %1145 = vmatprep.mubr.f32.mxu0 0.0
          %1146 = vmatmul.mubr.f32.gmra.mxu0 %v1076
          %v1147 = vpop.f32.mrf.mxu0
          %v1148 = vadd.f32 %v1072, %v1147
          %v1149 = vpop.f32.mrf.mxu0
          %1150 = vmatprep.mubr.f32.mxu0 0.0
          %1151 = vmatmul.mubr.f32.gmra.mxu0 %v1079
          %v1152 = vpop.f32.mrf.mxu0
          %v1153 = vadd.f32 %v1073, %v1152
          %v1154 = vpop.f32.mrf.mxu0
          %1155 = vdwg.mxu0
          %v1156 = vsel %vm898, %v1148, -inf
          %v1157 = vsel %vm898, %v1153, -inf
          %v1158 = vmax.f32 %v1156, %v1157
          %v1159 = vrot.slane %v1158, 4
          %v1160 = vmax.f32 %v1158, %v1159
          %v1161 = vrot.slane %v1160, 2
          %v1162 = vmax.f32 %v1160, %v1161
          %v1163 = vrot.slane %v1162, 1
          %v1164 = vmax.f32 %v1162, %v1163
          %v1165 = vsub.f32 %v1148, %v1164
          %v1166 = vsub.f32 %v1153, %v1164
          %v1167 = vmul.f32 %v1165, 1.442695
          %v1168 = vpow.pop %v1167
          %v1169 = vmul.f32 %v1166, 1.442695
          %v1170 = vpow.pop %v1169
          %v1171 = vld [vmem:[%s8] sm:$0x3]
          %v1173 = vsel %vm898, %v1171, 0
          %1175 = vmatprep.subr.mxu0 0.0
          %1176 = vmatpush1.msra.mxu0 0.0
          %1177 = vmatprep.subr.mxu0 0.0
          %1178 = vmatpush1.msra.mxu0 0.0
          %1179 = vmatprep.subr.mxu0 0.0
          %1180 = vmatpush1.msra.mxu0 0.0
          %1181 = vmatprep.subr.mxu0 0.0
          %1182 = vmatpush1.msra.mxu0 0.0
          %1183 = vmatprep.subr.mxu0 0.0
          %1184 = vmatpush1.msra.mxu0 0.0
          %1185 = vmatprep.subr.mxu0 0.0
          %1186 = vmatpush1.msra.mxu0 0.0
          %1187 = vmatprep.subr.mxu0 0.0
          %1188 = vmatpush1.msra.mxu0 0.0
          %1189 = vmatprep.subr.mxu0 0.0
          %1190 = vmatpush1.msra.mxu0 0.0
          %1191 = vmatprep.subr.mxu0 0.0
          %1192 = vmatpush1.msra.mxu0 0.0
          %1193 = vmatprep.subr.mxu0 0.0
          %1194 = vmatpush1.msra.mxu0 0.0
          %1195 = vmatprep.subr.mxu0 0.0
          %1196 = vmatpush1.msra.mxu0 0.0
          %1197 = vmatprep.subr.mxu0 0.0
          %1198 = vmatpush1.msra.mxu0 0.0
          %1199 = vmatprep.subr.mxu0 0.0
          %1200 = vmatpush1.msra.mxu0 0.0
          %1201 = vmatprep.subr.mxu0 0.0
          %1202 = vmatpush1.msra.mxu0 0.0
          %1203 = vmatprep.subr.mxu0 0.0
          %1204 = vmatpush1.msra.mxu0 %v1170
          %1205 = vmatprep.subr.mxu0 0.0
          %1206 = vmatpush1.msra.mxu0 %v1168
          %1207 = vmatprep.subr.mxu0 0.0
          %1208 = vmatpush2.msra.mxu0 0.0
          %1209 = vmatprep.subr.mxu0 0.0
          %1210 = vmatpush2.msra.mxu0 0.0
          %1211 = vmatprep.subr.mxu0 0.0
          %1212 = vmatpush2.msra.mxu0 0.0
          %1213 = vmatprep.subr.mxu0 0.0
          %1214 = vmatpush2.msra.mxu0 0.0
          %1215 = vmatprep.subr.mxu0 0.0
          %1216 = vmatpush2.msra.mxu0 0.0
          %1217 = vmatprep.subr.mxu0 0.0
          %1218 = vmatpush2.msra.mxu0 0.0
          %1219 = vmatprep.subr.mxu0 0.0
          %1220 = vmatpush2.msra.mxu0 0.0
          %1221 = vmatprep.subr.mxu0 0.0
          %1222 = vmatpush2.msra.mxu0 0.0
          %1223 = vmatprep.subr.mxu0 0.0
          %1224 = vmatpush2.msra.mxu0 0.0
          %1225 = vmatprep.subr.mxu0 0.0
          %1226 = vmatpush2.msra.mxu0 0.0
          %1227 = vmatprep.subr.mxu0 0.0
          %1228 = vmatpush2.msra.mxu0 0.0
          %1229 = vmatprep.subr.mxu0 0.0
          %1230 = vmatpush2.msra.mxu0 0.0
          %1231 = vmatprep.subr.mxu0 0.0
          %1232 = vmatpush2.msra.mxu0 0.0
          %1233 = vmatprep.subr.mxu0 0.0
          %1234 = vmatpush2.msra.mxu0 0.0
          %1235 = vmatprep.subr.mxu0 0.0
          %1236 = vmatpush2.msra.mxu0 0.0
          %1237 = vmatprep.subr.mxu0 0.0
          %1238 = vmatpush2.msra.mxu0 0.0
          %1239 = vmatprep.mubr.f32.mxu0 0.0
          %1240 = vmatmul.mubr.f32.gmra.mxu0 %v1173
          %v1241 = vpop.f32.mrf.mxu0
          %v1242 = vadd.f32 0.0, %v1241
          %v1243 = vpop.f32.mrf.mxu0
          %1244 = vdwg.mxu0
          %v1245 = vld [vmem:[%s9] sm:$0xff]
          %v1246 = vld [vmem:[%s9 + $0x8] sm:$0xff]
          %vm1247 = vcmask 15360
          %v1249 = vsel %vm1247, %v1245, 0
          %v1252 = vsel %vm1247, %v1246, 0
          %vm1254 = vcmask 1041408
          %v1256 = vsel %vm1254, %v1242, 0
          %1258 = vmatprep.subr.mxu0 0.0
          %1259 = vmatpush1.msra.mxu0 0.0
          %1260 = vmatprep.subr.mxu0 0.0
          %1261 = vmatpush1.msra.mxu0 0.0
          %1262 = vmatprep.subr.mxu0 0.0
          %1263 = vmatpush1.msra.mxu0 0.0
          %1264 = vmatprep.subr.mxu0 0.0
          %1265 = vmatpush1.msra.mxu0 0.0
          %1266 = vmatprep.subr.mxu0 0.0
          %1267 = vmatpush1.msra.mxu0 0.0
          %1268 = vmatprep.subr.mxu0 0.0
          %1269 = vmatpush1.msra.mxu0 0.0
          %1270 = vmatprep.subr.mxu0 0.0
          %1271 = vmatpush1.msra.mxu0 0.0
          %1272 = vmatprep.subr.mxu0 0.0
          %1273 = vmatpush1.msra.mxu0 0.0
          %1274 = vmatprep.subr.mxu0 0.0
          %1275 = vmatpush1.msra.mxu0 0.0
          %1276 = vmatprep.subr.mxu0 0.0
          %1277 = vmatpush1.msra.mxu0 0.0
          %1278 = vmatprep.subr.mxu0 0.0
          %1279 = vmatpush1.msra.mxu0 0.0
          %1280 = vmatprep.subr.mxu0 0.0
          %1281 = vmatpush1.msra.mxu0 0.0
          %1282 = vmatprep.subr.mxu0 0.0
          %1283 = vmatpush1.msra.mxu0 0.0
          %1284 = vmatprep.subr.mxu0 0.0
          %1285 = vmatpush1.msra.mxu0 0.0
          %1286 = vmatprep.subr.mxu0 0.0
          %1287 = vmatpush1.msra.mxu0 0.0
          %1288 = vmatprep.subr.mxu0 0.0
          %1289 = vmatpush1.msra.mxu0 %v1256
          %1290 = vmatprep.subr.mxu0 0.0
          %1291 = vmatpush2.msra.mxu0 0.0
          %1292 = vmatprep.subr.mxu0 0.0
          %1293 = vmatpush2.msra.mxu0 0.0
          %1294 = vmatprep.subr.mxu0 0.0
          %1295 = vmatpush2.msra.mxu0 0.0
          %1296 = vmatprep.subr.mxu0 0.0
          %1297 = vmatpush2.msra.mxu0 0.0
          %1298 = vmatprep.subr.mxu0 0.0
          %1299 = vmatpush2.msra.mxu0 0.0
          %1300 = vmatprep.subr.mxu0 0.0
          %1301 = vmatpush2.msra.mxu0 0.0
          %1302 = vmatprep.subr.mxu0 0.0
          %1303 = vmatpush2.msra.mxu0 0.0
          %1304 = vmatprep.subr.mxu0 0.0
          %1305 = vmatpush2.msra.mxu0 0.0
          %1306 = vmatprep.subr.mxu0 0.0
          %1307 = vmatpush2.msra.mxu0 0.0
          %1308 = vmatprep.subr.mxu0 0.0
          %1309 = vmatpush2.msra.mxu0 0.0
          %1310 = vmatprep.subr.mxu0 0.0
          %1311 = vmatpush2.msra.mxu0 0.0
          %1312 = vmatprep.subr.mxu0 0.0
          %1313 = vmatpush2.msra.mxu0 0.0
          %1314 = vmatprep.subr.mxu0 0.0
          %1315 = vmatpush2.msra.mxu0 0.0
          %1316 = vmatprep.subr.mxu0 0.0
          %1317 = vmatpush2.msra.mxu0 0.0
          %1318 = vmatprep.subr.mxu0 0.0
          %1319 = vmatpush2.msra.mxu0 0.0
          %1320 = vmatprep.subr.mxu0 0.0
          %1321 = vmatpush2.msra.mxu0 0.0
          %1322 = vmatprep.mubr.f32.mxu0 0.0
          %1323 = vmatmul.mubr.f32.gmra.mxu0 %v1249
          %v1324 = vpop.f32.mrf.mxu0
          %v1325 = vadd.f32 0.0, %v1324
          %v1326 = vpop.f32.mrf.mxu0
          %1327 = vmatprep.mubr.f32.mxu0 0.0
          %1328 = vmatmul.mubr.f32.gmra.mxu0 %v1252
          %v1329 = vpop.f32.mrf.mxu0
          %v1330 = vadd.f32 0.0, %v1329
          %v1331 = vpop.f32.mrf.mxu0
          %1332 = vdwg.mxu0
          %v1333 = vrcp.pop %v1325
          %v1334 = vmul.f32 %v1168, %v1333
          %v1335 = vrcp.pop %v1330
          %v1336 = vmul.f32 %v1170, %v1335
          %1337 = vst.msk [vmem:[%s23] sm:$0xff] %vm898, %v1334
          %1338 = vst.msk [vmem:[%s23 + $0x8] sm:$0xff] %vm898, %v1336
          %v1339 = vld [vmem:[%s6] sm:$0xff]
          %v1340 = vld [vmem:[%s6 + $0x8] sm:$0xff]
          %v1342 = vsel %vm898, %v1334, 0
          %v1345 = vsel %vm898, %v1336, 0
          %1347 = vmatprep.subr.mxu0 0.0
          %1348 = vmatpush1.msra.mxu0 0.0
          %1349 = vmatprep.subr.mxu0 0.0
          %1350 = vmatpush1.msra.mxu0 0.0
          %1351 = vmatprep.subr.mxu0 0.0
          %1352 = vmatpush1.msra.mxu0 0.0
          %1353 = vmatprep.subr.mxu0 0.0
          %1354 = vmatpush1.msra.mxu0 0.0
          %1355 = vmatprep.subr.mxu0 0.0
          %1356 = vmatpush1.msra.mxu0 0.0
          %1357 = vmatprep.subr.mxu0 0.0
          %1358 = vmatpush1.msra.mxu0 0.0
          %1359 = vmatprep.subr.mxu0 0.0
          %1360 = vmatpush1.msra.mxu0 0.0
          %1361 = vmatprep.subr.mxu0 0.0
          %1362 = vmatpush1.msra.mxu0 0.0
          %1363 = vmatprep.subr.mxu0 0.0
          %1364 = vmatpush1.msra.mxu0 0.0
          %1365 = vmatprep.subr.mxu0 0.0
          %1366 = vmatpush1.msra.mxu0 0.0
          %1367 = vmatprep.subr.mxu0 0.0
          %1368 = vmatpush1.msra.mxu0 0.0
          %1369 = vmatprep.subr.mxu0 0.0
          %1370 = vmatpush1.msra.mxu0 0.0
          %1371 = vmatprep.subr.mxu0 0.0
          %1372 = vmatpush1.msra.mxu0 0.0
          %1373 = vmatprep.subr.mxu0 0.0
          %1374 = vmatpush1.msra.mxu0 0.0
          %1375 = vmatprep.subr.mxu0 0.0
          %1376 = vmatpush1.msra.mxu0 %v1340
          %1377 = vmatprep.subr.mxu0 0.0
          %1378 = vmatpush1.msra.mxu0 %v1339
          %1379 = vmatprep.subr.mxu0 0.0
          %1380 = vmatpush2.msra.mxu0 0.0
          %1381 = vmatprep.subr.mxu0 0.0
          %1382 = vmatpush2.msra.mxu0 0.0
          %1383 = vmatprep.subr.mxu0 0.0
          %1384 = vmatpush2.msra.mxu0 0.0
          %1385 = vmatprep.subr.mxu0 0.0
          %1386 = vmatpush2.msra.mxu0 0.0
          %1387 = vmatprep.subr.mxu0 0.0
          %1388 = vmatpush2.msra.mxu0 0.0
          %1389 = vmatprep.subr.mxu0 0.0
          %1390 = vmatpush2.msra.mxu0 0.0
          %1391 = vmatprep.subr.mxu0 0.0
          %1392 = vmatpush2.msra.mxu0 0.0
          %1393 = vmatprep.subr.mxu0 0.0
          %1394 = vmatpush2.msra.mxu0 0.0
          %1395 = vmatprep.subr.mxu0 0.0
          %1396 = vmatpush2.msra.mxu0 0.0
          %1397 = vmatprep.subr.mxu0 0.0
          %1398 = vmatpush2.msra.mxu0 0.0
          %1399 = vmatprep.subr.mxu0 0.0
          %1400 = vmatpush2.msra.mxu0 0.0
          %1401 = vmatprep.subr.mxu0 0.0
          %1402 = vmatpush2.msra.mxu0 0.0
          %1403 = vmatprep.subr.mxu0 0.0
          %1404 = vmatpush2.msra.mxu0 0.0
          %1405 = vmatprep.subr.mxu0 0.0
          %1406 = vmatpush2.msra.mxu0 0.0
          %1407 = vmatprep.subr.mxu0 0.0
          %1408 = vmatpush2.msra.mxu0 0.0
          %1409 = vmatprep.subr.mxu0 0.0
          %1410 = vmatpush2.msra.mxu0 0.0
          %1411 = vmatprep.mubr.f32.mxu0 0.0
          %1412 = vmatmul.mubr.f32.gmra.mxu0 %v1342
          %v1413 = vpop.f32.mrf.mxu0
          %v1414 = vadd.f32 0.0, %v1413
          %v1415 = vpop.f32.mrf.mxu0
          %1416 = vmatprep.mubr.f32.mxu0 0.0
          %1417 = vmatmul.mubr.f32.gmra.mxu0 %v1345
          %v1418 = vpop.f32.mrf.mxu0
          %v1419 = vadd.f32 0.0, %v1418
          %v1420 = vpop.f32.mrf.mxu0
          %1421 = vdwg.mxu0
          %v1422 = vld [vmem:[%s7] sm:$0xff]
          %v1423 = vld [vmem:[%s7 + $0x8] sm:$0xff]
          %v1424 = vld [vmem:[%s7 + $0x10] sm:$0xff]
          %v1425 = vld [vmem:[%s7 + $0x18] sm:$0xff]
          %1426 = vmatprep.subr.mxu0 0.0
          %1427 = vmatpush1.msra.mxu0 0.0
          %1428 = vmatprep.subr.mxu0 0.0
          %1429 = vmatpush1.msra.mxu0 0.0
          %1430 = vmatprep.subr.mxu0 0.0
          %1431 = vmatpush1.msra.mxu0 0.0
          %1432 = vmatprep.subr.mxu0 0.0
          %1433 = vmatpush1.msra.mxu0 0.0
          %1434 = vmatprep.subr.mxu0 0.0
          %1435 = vmatpush1.msra.mxu0 0.0
          %1436 = vmatprep.subr.mxu0 0.0
          %1437 = vmatpush1.msra.mxu0 0.0
          %1438 = vmatprep.subr.mxu0 0.0
          %1439 = vmatpush1.msra.mxu0 0.0
          %1440 = vmatprep.subr.mxu0 0.0
          %1441 = vmatpush1.msra.mxu0 0.0
          %1442 = vmatprep.subr.mxu0 0.0
          %1443 = vmatpush1.msra.mxu0 0.0
          %1444 = vmatprep.subr.mxu0 0.0
          %1445 = vmatpush1.msra.mxu0 0.0
          %1446 = vmatprep.subr.mxu0 0.0
          %1447 = vmatpush1.msra.mxu0 0.0
          %1448 = vmatprep.subr.mxu0 0.0
          %1449 = vmatpush1.msra.mxu0 0.0
          %1450 = vmatprep.subr.mxu0 0.0
          %1451 = vmatpush1.msra.mxu0 %v1425
          %1452 = vmatprep.subr.mxu0 0.0
          %1453 = vmatpush1.msra.mxu0 %v1424
          %1454 = vmatprep.subr.mxu0 0.0
          %1455 = vmatpush1.msra.mxu0 %v1423
          %1456 = vmatprep.subr.mxu0 0.0
          %1457 = vmatpush1.msra.mxu0 %v1422
          %1458 = vmatprep.subr.mxu0 0.0
          %1459 = vmatpush2.msra.mxu0 0.0
          %1460 = vmatprep.subr.mxu0 0.0
          %1461 = vmatpush2.msra.mxu0 0.0
          %1462 = vmatprep.subr.mxu0 0.0
          %1463 = vmatpush2.msra.mxu0 0.0
          %1464 = vmatprep.subr.mxu0 0.0
          %1465 = vmatpush2.msra.mxu0 0.0
          %1466 = vmatprep.subr.mxu0 0.0
          %1467 = vmatpush2.msra.mxu0 0.0
          %1468 = vmatprep.subr.mxu0 0.0
          %1469 = vmatpush2.msra.mxu0 0.0
          %1470 = vmatprep.subr.mxu0 0.0
          %1471 = vmatpush2.msra.mxu0 0.0
          %1472 = vmatprep.subr.mxu0 0.0
          %1473 = vmatpush2.msra.mxu0 0.0
          %1474 = vmatprep.subr.mxu0 0.0
          %1475 = vmatpush2.msra.mxu0 0.0
          %1476 = vmatprep.subr.mxu0 0.0
          %1477 = vmatpush2.msra.mxu0 0.0
          %1478 = vmatprep.subr.mxu0 0.0
          %1479 = vmatpush2.msra.mxu0 0.0
          %1480 = vmatprep.subr.mxu0 0.0
          %1481 = vmatpush2.msra.mxu0 0.0
          %1482 = vmatprep.subr.mxu0 0.0
          %1483 = vmatpush2.msra.mxu0 0.0
          %1484 = vmatprep.subr.mxu0 0.0
          %1485 = vmatpush2.msra.mxu0 0.0
          %1486 = vmatprep.subr.mxu0 0.0
          %1487 = vmatpush2.msra.mxu0 0.0
          %1488 = vmatprep.subr.mxu0 0.0
          %1489 = vmatpush2.msra.mxu0 0.0
          %1490 = vmatprep.mubr.f32.mxu0 0.0
          %1491 = vmatmul.mubr.f32.gmra.mxu0 %v1076
          %v1492 = vpop.f32.mrf.mxu0
          %v1493 = vadd.f32 0.0, %v1492
          %v1494 = vpop.f32.mrf.mxu0
          %1495 = vmatprep.mubr.f32.mxu0 0.0
          %1496 = vmatmul.mubr.f32.gmra.mxu0 %v1079
          %v1497 = vpop.f32.mrf.mxu0
          %v1498 = vadd.f32 0.0, %v1497
          %v1499 = vpop.f32.mrf.mxu0
          %1500 = vdwg.mxu0
          %v1501 = vld [vmem:[%s8] sm:$0x3]
          %v1502 = vmul.f32 %v1414, %v1493
          %v1503 = vmul.f32 %v1419, %v1498
          %v1505 = vsel %vm898, %v1501, 0
          %1507 = vmatprep.subr.mxu0 0.0
          %1508 = vmatpush1.msra.mxu0 0.0
          %1509 = vmatprep.subr.mxu0 0.0
          %1510 = vmatpush1.msra.mxu0 0.0
          %1511 = vmatprep.subr.mxu0 0.0
          %1512 = vmatpush1.msra.mxu0 0.0
          %1513 = vmatprep.subr.mxu0 0.0
          %1514 = vmatpush1.msra.mxu0 0.0
          %1515 = vmatprep.subr.mxu0 0.0
          %1516 = vmatpush1.msra.mxu0 0.0
          %1517 = vmatprep.subr.mxu0 0.0
          %1518 = vmatpush1.msra.mxu0 0.0
          %1519 = vmatprep.subr.mxu0 0.0
          %1520 = vmatpush1.msra.mxu0 0.0
          %1521 = vmatprep.subr.mxu0 0.0
          %1522 = vmatpush1.msra.mxu0 0.0
          %1523 = vmatprep.subr.mxu0 0.0
          %1524 = vmatpush1.msra.mxu0 0.0
          %1525 = vmatprep.subr.mxu0 0.0
          %1526 = vmatpush1.msra.mxu0 0.0
          %1527 = vmatprep.subr.mxu0 0.0
          %1528 = vmatpush1.msra.mxu0 0.0
          %1529 = vmatprep.subr.mxu0 0.0
          %1530 = vmatpush1.msra.mxu0 0.0
          %1531 = vmatprep.subr.mxu0 0.0
          %1532 = vmatpush1.msra.mxu0 0.0
          %1533 = vmatprep.subr.mxu0 0.0
          %1534 = vmatpush1.msra.mxu0 0.0
          %1535 = vmatprep.subr.mxu0 0.0
          %1536 = vmatpush1.msra.mxu0 %v1503
          %1537 = vmatprep.subr.mxu0 0.0
          %1538 = vmatpush1.msra.mxu0 %v1502
          %1539 = vmatprep.subr.mxu0 0.0
          %1540 = vmatpush2.msra.mxu0 0.0
          %1541 = vmatprep.subr.mxu0 0.0
          %1542 = vmatpush2.msra.mxu0 0.0
          %1543 = vmatprep.subr.mxu0 0.0
          %1544 = vmatpush2.msra.mxu0 0.0
          %1545 = vmatprep.subr.mxu0 0.0
          %1546 = vmatpush2.msra.mxu0 0.0
          %1547 = vmatprep.subr.mxu0 0.0
          %1548 = vmatpush2.msra.mxu0 0.0
          %1549 = vmatprep.subr.mxu0 0.0
          %1550 = vmatpush2.msra.mxu0 0.0
          %1551 = vmatprep.subr.mxu0 0.0
          %1552 = vmatpush2.msra.mxu0 0.0
          %1553 = vmatprep.subr.mxu0 0.0
          %1554 = vmatpush2.msra.mxu0 0.0
          %1555 = vmatprep.subr.mxu0 0.0
          %1556 = vmatpush2.msra.mxu0 0.0
          %1557 = vmatprep.subr.mxu0 0.0
          %1558 = vmatpush2.msra.mxu0 0.0
          %1559 = vmatprep.subr.mxu0 0.0
          %1560 = vmatpush2.msra.mxu0 0.0
          %1561 = vmatprep.subr.mxu0 0.0
          %1562 = vmatpush2.msra.mxu0 0.0
          %1563 = vmatprep.subr.mxu0 0.0
          %1564 = vmatpush2.msra.mxu0 0.0
          %1565 = vmatprep.subr.mxu0 0.0
          %1566 = vmatpush2.msra.mxu0 0.0
          %1567 = vmatprep.subr.mxu0 0.0
          %1568 = vmatpush2.msra.mxu0 0.0
          %1569 = vmatprep.subr.mxu0 0.0
          %1570 = vmatpush2.msra.mxu0 0.0
          %1571 = vmatprep.mubr.f32.mxu0 0.0
          %1572 = vmatmul.mubr.f32.gmra.mxu0 %v1505
          %v1573 = vpop.f32.mrf.mxu0
          %v1574 = vadd.f32 0.0, %v1573
          %v1575 = vpop.f32.mrf.mxu0
          %1576 = vdwg.mxu0
          %1577 = vst [vmem:[#allocation2] sm:$0x3] %v1574
          %v1578 = vld [vmem:[%s10] sm:$0xff]
          %v1579 = vld [vmem:[%s10 + $0x8] sm:$0xff]
          %v1581 = vsel %vm898, %v1578, 0
          %v1584 = vsel %vm898, %v1579, 0
          %1586 = vmatprep.subr.mxu0 0.0
          %1587 = vmatpush1.msra.mxu0 0.0
          %1588 = vmatprep.subr.mxu0 0.0
          %1589 = vmatpush1.msra.mxu0 0.0
          %1590 = vmatprep.subr.mxu0 0.0
          %1591 = vmatpush1.msra.mxu0 0.0
          %1592 = vmatprep.subr.mxu0 0.0
          %1593 = vmatpush1.msra.mxu0 0.0
          %1594 = vmatprep.subr.mxu0 0.0
          %1595 = vmatpush1.msra.mxu0 0.0
          %1596 = vmatprep.subr.mxu0 0.0
          %1597 = vmatpush1.msra.mxu0 0.0
          %1598 = vmatprep.subr.mxu0 0.0
          %1599 = vmatpush1.msra.mxu0 0.0
          %1600 = vmatprep.subr.mxu0 0.0
          %1601 = vmatpush1.msra.mxu0 0.0
          %1602 = vmatprep.subr.mxu0 0.0
          %1603 = vmatpush1.msra.mxu0 0.0
          %1604 = vmatprep.subr.mxu0 0.0
          %1605 = vmatpush1.msra.mxu0 0.0
          %1606 = vmatprep.subr.mxu0 0.0
          %1607 = vmatpush1.msra.mxu0 0.0
          %1608 = vmatprep.subr.mxu0 0.0
          %1609 = vmatpush1.msra.mxu0 0.0
          %1610 = vmatprep.subr.mxu0 0.0
          %1611 = vmatpush1.msra.mxu0 0.0
          %1612 = vmatprep.subr.mxu0 0.0
          %1613 = vmatpush1.msra.mxu0 0.0
          %1614 = vmatprep.subr.mxu0 0.0
          %1615 = vmatpush1.msra.mxu0 %v1065
          %1616 = vmatprep.subr.mxu0 0.0
          %1617 = vmatpush1.msra.mxu0 %v1060
          %1618 = vmatprep.subr.mxu0 0.0
          %1619 = vmatpush2.msra.mxu0 0.0
          %1620 = vmatprep.subr.mxu0 0.0
          %1621 = vmatpush2.msra.mxu0 0.0
          %1622 = vmatprep.subr.mxu0 0.0
          %1623 = vmatpush2.msra.mxu0 0.0
          %1624 = vmatprep.subr.mxu0 0.0
          %1625 = vmatpush2.msra.mxu0 0.0
          %1626 = vmatprep.subr.mxu0 0.0
          %1627 = vmatpush2.msra.mxu0 0.0
          %1628 = vmatprep.subr.mxu0 0.0
          %1629 = vmatpush2.msra.mxu0 0.0
          %1630 = vmatprep.subr.mxu0 0.0
          %1631 = vmatpush2.msra.mxu0 0.0
          %1632 = vmatprep.subr.mxu0 0.0
          %1633 = vmatpush2.msra.mxu0 0.0
          %1634 = vmatprep.subr.mxu0 0.0
          %1635 = vmatpush2.msra.mxu0 0.0
          %1636 = vmatprep.subr.mxu0 0.0
          %1637 = vmatpush2.msra.mxu0 0.0
          %1638 = vmatprep.subr.mxu0 0.0
          %1639 = vmatpush2.msra.mxu0 0.0
          %1640 = vmatprep.subr.mxu0 0.0
          %1641 = vmatpush2.msra.mxu0 0.0
          %1642 = vmatprep.subr.mxu0 0.0
          %1643 = vmatpush2.msra.mxu0 0.0
          %1644 = vmatprep.subr.mxu0 0.0
          %1645 = vmatpush2.msra.mxu0 0.0
          %1646 = vmatprep.subr.mxu0 0.0
          %1647 = vmatpush2.msra.mxu0 0.0
          %1648 = vmatprep.subr.mxu0 0.0
          %1649 = vmatpush2.msra.mxu0 0.0
          %1650 = vmatprep.mubr.f32.mxu0 0.0
          %1651 = vmatmul.mubr.f32.gmra.mxu0 %v1581
          %v1652 = vpop.f32.mrf.mxu0
          %v1653 = vadd.f32 0.0, %v1652
          %v1654 = vpop.f32.mrf.mxu0
          %1655 = vmatprep.mubr.f32.mxu0 0.0
          %1656 = vmatmul.mubr.f32.gmra.mxu0 %v1584
          %v1657 = vpop.f32.mrf.mxu0
          %v1658 = vadd.f32 0.0, %v1657
          %v1659 = vpop.f32.mrf.mxu0
          %1660 = vdwg.mxu0
          %v1661 = vld [vmem:[%s11] sm:$0xff]
          %v1662 = vld [vmem:[%s11 + $0x8] sm:$0xff]
          %v1663 = vld [vmem:[%s11 + $0x10] sm:$0xff]
          %v1664 = vld [vmem:[%s11 + $0x18] sm:$0xff]
          %v1665 = vld [vmem:[%s10 + $0x10] sm:$0xff]
          %v1666 = vld [vmem:[%s10 + $0x18] sm:$0xff]
          %v1668 = vsel %vm898, %v1665, 0
          %v1671 = vsel %vm898, %v1666, 0
          %1673 = vmatprep.subr.mxu0 0.0
          %1674 = vmatpush1.msra.mxu0 0.0
          %1675 = vmatprep.subr.mxu0 0.0
          %1676 = vmatpush1.msra.mxu0 0.0
          %1677 = vmatprep.subr.mxu0 0.0
          %1678 = vmatpush1.msra.mxu0 0.0
          %1679 = vmatprep.subr.mxu0 0.0
          %1680 = vmatpush1.msra.mxu0 0.0
          %1681 = vmatprep.subr.mxu0 0.0
          %1682 = vmatpush1.msra.mxu0 0.0
          %1683 = vmatprep.subr.mxu0 0.0
          %1684 = vmatpush1.msra.mxu0 0.0
          %1685 = vmatprep.subr.mxu0 0.0
          %1686 = vmatpush1.msra.mxu0 0.0
          %1687 = vmatprep.subr.mxu0 0.0
          %1688 = vmatpush1.msra.mxu0 0.0
          %1689 = vmatprep.subr.mxu0 0.0
          %1690 = vmatpush1.msra.mxu0 0.0
          %1691 = vmatprep.subr.mxu0 0.0
          %1692 = vmatpush1.msra.mxu0 0.0
          %1693 = vmatprep.subr.mxu0 0.0
          %1694 = vmatpush1.msra.mxu0 0.0
          %1695 = vmatprep.subr.mxu0 0.0
          %1696 = vmatpush1.msra.mxu0 0.0
          %1697 = vmatprep.subr.mxu0 0.0
          %1698 = vmatpush1.msra.mxu0 0.0
          %1699 = vmatprep.subr.mxu0 0.0
          %1700 = vmatpush1.msra.mxu0 0.0
          %1701 = vmatprep.subr.mxu0 0.0
          %1702 = vmatpush1.msra.mxu0 %v1065
          %1703 = vmatprep.subr.mxu0 0.0
          %1704 = vmatpush1.msra.mxu0 %v1060
          %1705 = vmatprep.subr.mxu0 0.0
          %1706 = vmatpush2.msra.mxu0 0.0
          %1707 = vmatprep.subr.mxu0 0.0
          %1708 = vmatpush2.msra.mxu0 0.0
          %1709 = vmatprep.subr.mxu0 0.0
          %1710 = vmatpush2.msra.mxu0 0.0
          %1711 = vmatprep.subr.mxu0 0.0
          %1712 = vmatpush2.msra.mxu0 0.0
          %1713 = vmatprep.subr.mxu0 0.0
          %1714 = vmatpush2.msra.mxu0 0.0
          %1715 = vmatprep.subr.mxu0 0.0
          %1716 = vmatpush2.msra.mxu0 0.0
          %1717 = vmatprep.subr.mxu0 0.0
          %1718 = vmatpush2.msra.mxu0 0.0
          %1719 = vmatprep.subr.mxu0 0.0
          %1720 = vmatpush2.msra.mxu0 0.0
          %1721 = vmatprep.subr.mxu0 0.0
          %1722 = vmatpush2.msra.mxu0 0.0
          %1723 = vmatprep.subr.mxu0 0.0
          %1724 = vmatpush2.msra.mxu0 0.0
          %1725 = vmatprep.subr.mxu0 0.0
          %1726 = vmatpush2.msra.mxu0 0.0
          %1727 = vmatprep.subr.mxu0 0.0
          %1728 = vmatpush2.msra.mxu0 0.0
          %1729 = vmatprep.subr.mxu0 0.0
          %1730 = vmatpush2.msra.mxu0 0.0
          %1731 = vmatprep.subr.mxu0 0.0
          %1732 = vmatpush2.msra.mxu0 0.0
          %1733 = vmatprep.subr.mxu0 0.0
          %1734 = vmatpush2.msra.mxu0 0.0
          %1735 = vmatprep.subr.mxu0 0.0
          %1736 = vmatpush2.msra.mxu0 0.0
          %1737 = vmatprep.mubr.f32.mxu0 0.0
          %1738 = vmatmul.mubr.f32.gmra.mxu0 %v1668
          %v1739 = vpop.f32.mrf.mxu0
          %v1740 = vadd.f32 0.0, %v1739
          %v1741 = vpop.f32.mrf.mxu0
          %1742 = vmatprep.mubr.f32.mxu0 0.0
          %1743 = vmatmul.mubr.f32.gmra.mxu0 %v1671
          %v1744 = vpop.f32.mrf.mxu0
          %v1745 = vadd.f32 0.0, %v1744
          %v1746 = vpop.f32.mrf.mxu0
          %1747 = vdwg.mxu0
          %v1748 = vld [vmem:[%s11 + $0x20] sm:$0xff]
          %v1749 = vld [vmem:[%s11 + $0x28] sm:$0xff]
          %v1750 = vld [vmem:[%s11 + $0x30] sm:$0xff]
          %v1751 = vld [vmem:[%s11 + $0x38] sm:$0xff]
          %v1753 = vsel %vm1074, %v1740, 0
          %v1756 = vsel %vm1074, %v1745, 0
          %1758 = vmatprep.subr.mxu0 0.0
          %1759 = vmatpush1.msra.mxu0 0.0
          %1760 = vmatprep.subr.mxu0 0.0
          %1761 = vmatpush1.msra.mxu0 0.0
          %1762 = vmatprep.subr.mxu0 0.0
          %1763 = vmatpush1.msra.mxu0 0.0
          %1764 = vmatprep.subr.mxu0 0.0
          %1765 = vmatpush1.msra.mxu0 0.0
          %1766 = vmatprep.subr.mxu0 0.0
          %1767 = vmatpush1.msra.mxu0 0.0
          %1768 = vmatprep.subr.mxu0 0.0
          %1769 = vmatpush1.msra.mxu0 0.0
          %1770 = vmatprep.subr.mxu0 0.0
          %1771 = vmatpush1.msra.mxu0 0.0
          %1772 = vmatprep.subr.mxu0 0.0
          %1773 = vmatpush1.msra.mxu0 0.0
          %1774 = vmatprep.subr.mxu0 0.0
          %1775 = vmatpush1.msra.mxu0 0.0
          %1776 = vmatprep.subr.mxu0 0.0
          %1777 = vmatpush1.msra.mxu0 0.0
          %1778 = vmatprep.subr.mxu0 0.0
          %1779 = vmatpush1.msra.mxu0 0.0
          %1780 = vmatprep.subr.mxu0 0.0
          %1781 = vmatpush1.msra.mxu0 0.0
          %1782 = vmatprep.subr.mxu0 0.0
          %1783 = vmatpush1.msra.mxu0 %v1751
          %1784 = vmatprep.subr.mxu0 0.0
          %1785 = vmatpush1.msra.mxu0 %v1750
          %1786 = vmatprep.subr.mxu0 0.0
          %1787 = vmatpush1.msra.mxu0 %v1749
          %1788 = vmatprep.subr.mxu0 0.0
          %1789 = vmatpush1.msra.mxu0 %v1748
          %1790 = vmatprep.subr.mxu0 0.0
          %1791 = vmatpush2.msra.mxu0 0.0
          %1792 = vmatprep.subr.mxu0 0.0
          %1793 = vmatpush2.msra.mxu0 0.0
          %1794 = vmatprep.subr.mxu0 0.0
          %1795 = vmatpush2.msra.mxu0 0.0
          %1796 = vmatprep.subr.mxu0 0.0
          %1797 = vmatpush2.msra.mxu0 0.0
          %1798 = vmatprep.subr.mxu0 0.0
          %1799 = vmatpush2.msra.mxu0 0.0
          %1800 = vmatprep.subr.mxu0 0.0
          %1801 = vmatpush2.msra.mxu0 0.0
          %1802 = vmatprep.subr.mxu0 0.0
          %1803 = vmatpush2.msra.mxu0 0.0
          %1804 = vmatprep.subr.mxu0 0.0
          %1805 = vmatpush2.msra.mxu0 0.0
          %1806 = vmatprep.subr.mxu0 0.0
          %1807 = vmatpush2.msra.mxu0 0.0
          %1808 = vmatprep.subr.mxu0 0.0
          %1809 = vmatpush2.msra.mxu0 0.0
          %1810 = vmatprep.subr.mxu0 0.0
          %1811 = vmatpush2.msra.mxu0 0.0
          %1812 = vmatprep.subr.mxu0 0.0
          %1813 = vmatpush2.msra.mxu0 0.0
          %1814 = vmatprep.subr.mxu0 0.0
          %1815 = vmatpush2.msra.mxu0 0.0
          %1816 = vmatprep.subr.mxu0 0.0
          %1817 = vmatpush2.msra.mxu0 0.0
          %1818 = vmatprep.subr.mxu0 0.0
          %1819 = vmatpush2.msra.mxu0 0.0
          %1820 = vmatprep.subr.mxu0 0.0
          %1821 = vmatpush2.msra.mxu0 0.0
          %1822 = vmatprep.mubr.f32.mxu0 0.0
          %1823 = vmatmul.mubr.f32.gmra.mxu0 %v1753
          %v1824 = vpop.f32.mrf.mxu0
          %v1825 = vadd.f32 0.0, %v1824
          %v1826 = vpop.f32.mrf.mxu0
          %1827 = vmatprep.mubr.f32.mxu0 0.0
          %1828 = vmatmul.mubr.f32.gmra.mxu0 %v1756
          %v1829 = vpop.f32.mrf.mxu0
          %v1830 = vadd.f32 0.0, %v1829
          %v1831 = vpop.f32.mrf.mxu0
          %1832 = vdwg.mxu0
          %v1834 = vsel %vm1074, %v1653, 0
          %v1837 = vsel %vm1074, %v1658, 0
          %1839 = vmatprep.subr.mxu0 0.0
          %1840 = vmatpush1.msra.mxu0 0.0
          %1841 = vmatprep.subr.mxu0 0.0
          %1842 = vmatpush1.msra.mxu0 0.0
          %1843 = vmatprep.subr.mxu0 0.0
          %1844 = vmatpush1.msra.mxu0 0.0
          %1845 = vmatprep.subr.mxu0 0.0
          %1846 = vmatpush1.msra.mxu0 0.0
          %1847 = vmatprep.subr.mxu0 0.0
          %1848 = vmatpush1.msra.mxu0 0.0
          %1849 = vmatprep.subr.mxu0 0.0
          %1850 = vmatpush1.msra.mxu0 0.0
          %1851 = vmatprep.subr.mxu0 0.0
          %1852 = vmatpush1.msra.mxu0 0.0
          %1853 = vmatprep.subr.mxu0 0.0
          %1854 = vmatpush1.msra.mxu0 0.0
          %1855 = vmatprep.subr.mxu0 0.0
          %1856 = vmatpush1.msra.mxu0 0.0
          %1857 = vmatprep.subr.mxu0 0.0
          %1858 = vmatpush1.msra.mxu0 0.0
          %1859 = vmatprep.subr.mxu0 0.0
          %1860 = vmatpush1.msra.mxu0 0.0
          %1861 = vmatprep.subr.mxu0 0.0
          %1862 = vmatpush1.msra.mxu0 0.0
          %1863 = vmatprep.subr.mxu0 0.0
          %1864 = vmatpush1.msra.mxu0 %v1664
          %1865 = vmatprep.subr.mxu0 0.0
          %1866 = vmatpush1.msra.mxu0 %v1663
          %1867 = vmatprep.subr.mxu0 0.0
          %1868 = vmatpush1.msra.mxu0 %v1662
          %1869 = vmatprep.subr.mxu0 0.0
          %1870 = vmatpush1.msra.mxu0 %v1661
          %1871 = vmatprep.subr.mxu0 0.0
          %1872 = vmatpush2.msra.mxu0 0.0
          %1873 = vmatprep.subr.mxu0 0.0
          %1874 = vmatpush2.msra.mxu0 0.0
          %1875 = vmatprep.subr.mxu0 0.0
          %1876 = vmatpush2.msra.mxu0 0.0
          %1877 = vmatprep.subr.mxu0 0.0
          %1878 = vmatpush2.msra.mxu0 0.0
          %1879 = vmatprep.subr.mxu0 0.0
          %1880 = vmatpush2.msra.mxu0 0.0
          %1881 = vmatprep.subr.mxu0 0.0
          %1882 = vmatpush2.msra.mxu0 0.0
          %1883 = vmatprep.subr.mxu0 0.0
          %1884 = vmatpush2.msra.mxu0 0.0
          %1885 = vmatprep.subr.mxu0 0.0
          %1886 = vmatpush2.msra.mxu0 0.0
          %1887 = vmatprep.subr.mxu0 0.0
          %1888 = vmatpush2.msra.mxu0 0.0
          %1889 = vmatprep.subr.mxu0 0.0
          %1890 = vmatpush2.msra.mxu0 0.0
          %1891 = vmatprep.subr.mxu0 0.0
          %1892 = vmatpush2.msra.mxu0 0.0
          %1893 = vmatprep.subr.mxu0 0.0
          %1894 = vmatpush2.msra.mxu0 0.0
          %1895 = vmatprep.subr.mxu0 0.0
          %1896 = vmatpush2.msra.mxu0 0.0
          %1897 = vmatprep.subr.mxu0 0.0
          %1898 = vmatpush2.msra.mxu0 0.0
          %1899 = vmatprep.subr.mxu0 0.0
          %1900 = vmatpush2.msra.mxu0 0.0
          %1901 = vmatprep.subr.mxu0 0.0
          %1902 = vmatpush2.msra.mxu0 0.0
          %1903 = vmatprep.mubr.f32.mxu0 0.0
          %1904 = vmatmul.mubr.f32.gmra.mxu0 %v1834
          %v1905 = vpop.f32.mrf.mxu0
          %v1906 = vadd.f32 %v1825, %v1905
          %v1907 = vpop.f32.mrf.mxu0
          %1908 = vmatprep.mubr.f32.mxu0 0.0
          %1909 = vmatmul.mubr.f32.gmra.mxu0 %v1837
          %v1910 = vpop.f32.mrf.mxu0
          %v1911 = vadd.f32 %v1830, %v1910
          %v1912 = vpop.f32.mrf.mxu0
          %1913 = vdwg.mxu0
          %v1914 = vld [vmem:[%s10 + $0x20] sm:$0xff]
          %v1915 = vld [vmem:[%s10 + $0x28] sm:$0xff]
          %v1917 = vsel %vm898, %v1914, 0
          %v1920 = vsel %vm898, %v1915, 0
          %1922 = vmatprep.subr.mxu0 0.0
          %1923 = vmatpush1.msra.mxu0 0.0
          %1924 = vmatprep.subr.mxu0 0.0
          %1925 = vmatpush1.msra.mxu0 0.0
          %1926 = vmatprep.subr.mxu0 0.0
          %1927 = vmatpush1.msra.mxu0 0.0
          %1928 = vmatprep.subr.mxu0 0.0
          %1929 = vmatpush1.msra.mxu0 0.0
          %1930 = vmatprep.subr.mxu0 0.0
          %1931 = vmatpush1.msra.mxu0 0.0
          %1932 = vmatprep.subr.mxu0 0.0
          %1933 = vmatpush1.msra.mxu0 0.0
          %1934 = vmatprep.subr.mxu0 0.0
          %1935 = vmatpush1.msra.mxu0 0.0
          %1936 = vmatprep.subr.mxu0 0.0
          %1937 = vmatpush1.msra.mxu0 0.0
          %1938 = vmatprep.subr.mxu0 0.0
          %1939 = vmatpush1.msra.mxu0 0.0
          %1940 = vmatprep.subr.mxu0 0.0
          %1941 = vmatpush1.msra.mxu0 0.0
          %1942 = vmatprep.subr.mxu0 0.0
          %1943 = vmatpush1.msra.mxu0 0.0
          %1944 = vmatprep.subr.mxu0 0.0
          %1945 = vmatpush1.msra.mxu0 0.0
          %1946 = vmatprep.subr.mxu0 0.0
          %1947 = vmatpush1.msra.mxu0 0.0
          %1948 = vmatprep.subr.mxu0 0.0
          %1949 = vmatpush1.msra.mxu0 0.0
          %1950 = vmatprep.subr.mxu0 0.0
          %1951 = vmatpush1.msra.mxu0 %v1065
          %1952 = vmatprep.subr.mxu0 0.0
          %1953 = vmatpush1.msra.mxu0 %v1060
          %1954 = vmatprep.subr.mxu0 0.0
          %1955 = vmatpush2.msra.mxu0 0.0
          %1956 = vmatprep.subr.mxu0 0.0
          %1957 = vmatpush2.msra.mxu0 0.0
          %1958 = vmatprep.subr.mxu0 0.0
          %1959 = vmatpush2.msra.mxu0 0.0
          %1960 = vmatprep.subr.mxu0 0.0
          %1961 = vmatpush2.msra.mxu0 0.0
          %1962 = vmatprep.subr.mxu0 0.0
          %1963 = vmatpush2.msra.mxu0 0.0
          %1964 = vmatprep.subr.mxu0 0.0
          %1965 = vmatpush2.msra.mxu0 0.0
          %1966 = vmatprep.subr.mxu0 0.0
          %1967 = vmatpush2.msra.mxu0 0.0
          %1968 = vmatprep.subr.mxu0 0.0
          %1969 = vmatpush2.msra.mxu0 0.0
          %1970 = vmatprep.subr.mxu0 0.0
          %1971 = vmatpush2.msra.mxu0 0.0
          %1972 = vmatprep.subr.mxu0 0.0
          %1973 = vmatpush2.msra.mxu0 0.0
          %1974 = vmatprep.subr.mxu0 0.0
          %1975 = vmatpush2.msra.mxu0 0.0
          %1976 = vmatprep.subr.mxu0 0.0
          %1977 = vmatpush2.msra.mxu0 0.0
          %1978 = vmatprep.subr.mxu0 0.0
          %1979 = vmatpush2.msra.mxu0 0.0
          %1980 = vmatprep.subr.mxu0 0.0
          %1981 = vmatpush2.msra.mxu0 0.0
          %1982 = vmatprep.subr.mxu0 0.0
          %1983 = vmatpush2.msra.mxu0 0.0
          %1984 = vmatprep.subr.mxu0 0.0
          %1985 = vmatpush2.msra.mxu0 0.0
          %1986 = vmatprep.mubr.f32.mxu0 0.0
          %1987 = vmatmul.mubr.f32.gmra.mxu0 %v1917
          %v1988 = vpop.f32.mrf.mxu0
          %v1989 = vadd.f32 0.0, %v1988
          %v1990 = vpop.f32.mrf.mxu0
          %1991 = vmatprep.mubr.f32.mxu0 0.0
          %1992 = vmatmul.mubr.f32.gmra.mxu0 %v1920
          %v1993 = vpop.f32.mrf.mxu0
          %v1994 = vadd.f32 0.0, %v1993
          %v1995 = vpop.f32.mrf.mxu0
          %1996 = vdwg.mxu0
          %v1997 = vld [vmem:[%s11 + $0x40] sm:$0xff]
          %v1998 = vld [vmem:[%s11 + $0x48] sm:$0xff]
          %v1999 = vld [vmem:[%s11 + $0x50] sm:$0xff]
          %v2000 = vld [vmem:[%s11 + $0x58] sm:$0xff]
          %v2002 = vsel %vm1074, %v1989, 0
          %v2005 = vsel %vm1074, %v1994, 0
          %2007 = vmatprep.subr.mxu0 0.0
          %2008 = vmatpush1.msra.mxu0 0.0
          %2009 = vmatprep.subr.mxu0 0.0
          %2010 = vmatpush1.msra.mxu0 0.0
          %2011 = vmatprep.subr.mxu0 0.0
          %2012 = vmatpush1.msra.mxu0 0.0
          %2013 = vmatprep.subr.mxu0 0.0
          %2014 = vmatpush1.msra.mxu0 0.0
          %2015 = vmatprep.subr.mxu0 0.0
          %2016 = vmatpush1.msra.mxu0 0.0
          %2017 = vmatprep.subr.mxu0 0.0
          %2018 = vmatpush1.msra.mxu0 0.0
          %2019 = vmatprep.subr.mxu0 0.0
          %2020 = vmatpush1.msra.mxu0 0.0
          %2021 = vmatprep.subr.mxu0 0.0
          %2022 = vmatpush1.msra.mxu0 0.0
          %2023 = vmatprep.subr.mxu0 0.0
          %2024 = vmatpush1.msra.mxu0 0.0
          %2025 = vmatprep.subr.mxu0 0.0
          %2026 = vmatpush1.msra.mxu0 0.0
          %2027 = vmatprep.subr.mxu0 0.0
          %2028 = vmatpush1.msra.mxu0 0.0
          %2029 = vmatprep.subr.mxu0 0.0
          %2030 = vmatpush1.msra.mxu0 0.0
          %2031 = vmatprep.subr.mxu0 0.0
          %2032 = vmatpush1.msra.mxu0 %v2000
          %2033 = vmatprep.subr.mxu0 0.0
          %2034 = vmatpush1.msra.mxu0 %v1999
          %2035 = vmatprep.subr.mxu0 0.0
          %2036 = vmatpush1.msra.mxu0 %v1998
          %2037 = vmatprep.subr.mxu0 0.0
          %2038 = vmatpush1.msra.mxu0 %v1997
          %2039 = vmatprep.subr.mxu0 0.0
          %2040 = vmatpush2.msra.mxu0 0.0
          %2041 = vmatprep.subr.mxu0 0.0
          %2042 = vmatpush2.msra.mxu0 0.0
          %2043 = vmatprep.subr.mxu0 0.0
          %2044 = vmatpush2.msra.mxu0 0.0
          %2045 = vmatprep.subr.mxu0 0.0
          %2046 = vmatpush2.msra.mxu0 0.0
          %2047 = vmatprep.subr.mxu0 0.0
          %2048 = vmatpush2.msra.mxu0 0.0
          %2049 = vmatprep.subr.mxu0 0.0
          %2050 = vmatpush2.msra.mxu0 0.0
          %2051 = vmatprep.subr.mxu0 0.0
          %2052 = vmatpush2.msra.mxu0 0.0
          %2053 = vmatprep.subr.mxu0 0.0
          %2054 = vmatpush2.msra.mxu0 0.0
          %2055 = vmatprep.subr.mxu0 0.0
          %2056 = vmatpush2.msra.mxu0 0.0
          %2057 = vmatprep.subr.mxu0 0.0
          %2058 = vmatpush2.msra.mxu0 0.0
          %2059 = vmatprep.subr.mxu0 0.0
          %2060 = vmatpush2.msra.mxu0 0.0
          %2061 = vmatprep.subr.mxu0 0.0
          %2062 = vmatpush2.msra.mxu0 0.0
          %2063 = vmatprep.subr.mxu0 0.0
          %2064 = vmatpush2.msra.mxu0 0.0
          %2065 = vmatprep.subr.mxu0 0.0
          %2066 = vmatpush2.msra.mxu0 0.0
          %2067 = vmatprep.subr.mxu0 0.0
          %2068 = vmatpush2.msra.mxu0 0.0
          %2069 = vmatprep.subr.mxu0 0.0
          %2070 = vmatpush2.msra.mxu0 0.0
          %2071 = vmatprep.mubr.f32.mxu0 0.0
          %2072 = vmatmul.mubr.f32.gmra.mxu0 %v2002
          %v2073 = vpop.f32.mrf.mxu0
          %v2074 = vadd.f32 0.0, %v2073
          %v2075 = vpop.f32.mrf.mxu0
          %2076 = vmatprep.mubr.f32.mxu0 0.0
          %2077 = vmatmul.mubr.f32.gmra.mxu0 %v2005
          %v2078 = vpop.f32.mrf.mxu0
          %v2079 = vadd.f32 0.0, %v2078
          %v2080 = vpop.f32.mrf.mxu0
          %2081 = vdwg.mxu0
          %v2082 = vadd.f32 %v1906, %v2074
          %v2083 = vadd.f32 %v1911, %v2079
          %v2084 = vld [vmem:[%s10 + $0x30] sm:$0xff]
          %v2085 = vld [vmem:[%s10 + $0x38] sm:$0xff]
          %v2087 = vsel %vm898, %v2084, 0
          %v2090 = vsel %vm898, %v2085, 0
          %2092 = vmatprep.subr.mxu0 0.0
          %2093 = vmatpush1.msra.mxu0 0.0
          %2094 = vmatprep.subr.mxu0 0.0
          %2095 = vmatpush1.msra.mxu0 0.0
          %2096 = vmatprep.subr.mxu0 0.0
          %2097 = vmatpush1.msra.mxu0 0.0
          %2098 = vmatprep.subr.mxu0 0.0
          %2099 = vmatpush1.msra.mxu0 0.0
          %2100 = vmatprep.subr.mxu0 0.0
          %2101 = vmatpush1.msra.mxu0 0.0
          %2102 = vmatprep.subr.mxu0 0.0
          %2103 = vmatpush1.msra.mxu0 0.0
          %2104 = vmatprep.subr.mxu0 0.0
          %2105 = vmatpush1.msra.mxu0 0.0
          %2106 = vmatprep.subr.mxu0 0.0
          %2107 = vmatpush1.msra.mxu0 0.0
          %2108 = vmatprep.subr.mxu0 0.0
          %2109 = vmatpush1.msra.mxu0 0.0
          %2110 = vmatprep.subr.mxu0 0.0
          %2111 = vmatpush1.msra.mxu0 0.0
          %2112 = vmatprep.subr.mxu0 0.0
          %2113 = vmatpush1.msra.mxu0 0.0
          %2114 = vmatprep.subr.mxu0 0.0
          %2115 = vmatpush1.msra.mxu0 0.0
          %2116 = vmatprep.subr.mxu0 0.0
          %2117 = vmatpush1.msra.mxu0 0.0
          %2118 = vmatprep.subr.mxu0 0.0
          %2119 = vmatpush1.msra.mxu0 0.0
          %2120 = vmatprep.subr.mxu0 0.0
          %2121 = vmatpush1.msra.mxu0 %v1065
          %2122 = vmatprep.subr.mxu0 0.0
          %2123 = vmatpush1.msra.mxu0 %v1060
          %2124 = vmatprep.subr.mxu0 0.0
          %2125 = vmatpush2.msra.mxu0 0.0
          %2126 = vmatprep.subr.mxu0 0.0
          %2127 = vmatpush2.msra.mxu0 0.0
          %2128 = vmatprep.subr.mxu0 0.0
          %2129 = vmatpush2.msra.mxu0 0.0
          %2130 = vmatprep.subr.mxu0 0.0
          %2131 = vmatpush2.msra.mxu0 0.0
          %2132 = vmatprep.subr.mxu0 0.0
          %2133 = vmatpush2.msra.mxu0 0.0
          %2134 = vmatprep.subr.mxu0 0.0
          %2135 = vmatpush2.msra.mxu0 0.0
          %2136 = vmatprep.subr.mxu0 0.0
          %2137 = vmatpush2.msra.mxu0 0.0
          %2138 = vmatprep.subr.mxu0 0.0
          %2139 = vmatpush2.msra.mxu0 0.0
          %2140 = vmatprep.subr.mxu0 0.0
          %2141 = vmatpush2.msra.mxu0 0.0
          %2142 = vmatprep.subr.mxu0 0.0
          %2143 = vmatpush2.msra.mxu0 0.0
          %2144 = vmatprep.subr.mxu0 0.0
          %2145 = vmatpush2.msra.mxu0 0.0
          %2146 = vmatprep.subr.mxu0 0.0
          %2147 = vmatpush2.msra.mxu0 0.0
          %2148 = vmatprep.subr.mxu0 0.0
          %2149 = vmatpush2.msra.mxu0 0.0
          %2150 = vmatprep.subr.mxu0 0.0
          %2151 = vmatpush2.msra.mxu0 0.0
          %2152 = vmatprep.subr.mxu0 0.0
          %2153 = vmatpush2.msra.mxu0 0.0
          %2154 = vmatprep.subr.mxu0 0.0
          %2155 = vmatpush2.msra.mxu0 0.0
          %2156 = vmatprep.mubr.f32.mxu0 0.0
          %2157 = vmatmul.mubr.f32.gmra.mxu0 %v2087
          %v2158 = vpop.f32.mrf.mxu0
          %v2159 = vadd.f32 0.0, %v2158
          %v2160 = vpop.f32.mrf.mxu0
          %2161 = vmatprep.mubr.f32.mxu0 0.0
          %2162 = vmatmul.mubr.f32.gmra.mxu0 %v2090
          %v2163 = vpop.f32.mrf.mxu0
          %v2164 = vadd.f32 0.0, %v2163
          %v2165 = vpop.f32.mrf.mxu0
          %2166 = vdwg.mxu0
          %v2167 = vld [vmem:[%s11 + $0x60] sm:$0xff]
          %v2168 = vld [vmem:[%s11 + $0x68] sm:$0xff]
          %v2169 = vld [vmem:[%s11 + $0x70] sm:$0xff]
          %v2170 = vld [vmem:[%s11 + $0x78] sm:$0xff]
          %v2172 = vsel %vm1074, %v2159, 0
          %v2175 = vsel %vm1074, %v2164, 0
          %2177 = vmatprep.subr.mxu0 0.0
          %2178 = vmatpush1.msra.mxu0 0.0
          %2179 = vmatprep.subr.mxu0 0.0
          %2180 = vmatpush1.msra.mxu0 0.0
          %2181 = vmatprep.subr.mxu0 0.0
          %2182 = vmatpush1.msra.mxu0 0.0
          %2183 = vmatprep.subr.mxu0 0.0
          %2184 = vmatpush1.msra.mxu0 0.0
          %2185 = vmatprep.subr.mxu0 0.0
          %2186 = vmatpush1.msra.mxu0 0.0
          %2187 = vmatprep.subr.mxu0 0.0
          %2188 = vmatpush1.msra.mxu0 0.0
          %2189 = vmatprep.subr.mxu0 0.0
          %2190 = vmatpush1.msra.mxu0 0.0
          %2191 = vmatprep.subr.mxu0 0.0
          %2192 = vmatpush1.msra.mxu0 0.0
          %2193 = vmatprep.subr.mxu0 0.0
          %2194 = vmatpush1.msra.mxu0 0.0
          %2195 = vmatprep.subr.mxu0 0.0
          %2196 = vmatpush1.msra.mxu0 0.0
          %2197 = vmatprep.subr.mxu0 0.0
          %2198 = vmatpush1.msra.mxu0 0.0
          %2199 = vmatprep.subr.mxu0 0.0
          %2200 = vmatpush1.msra.mxu0 0.0
          %2201 = vmatprep.subr.mxu0 0.0
          %2202 = vmatpush1.msra.mxu0 %v2170
          %2203 = vmatprep.subr.mxu0 0.0
          %2204 = vmatpush1.msra.mxu0 %v2169
          %2205 = vmatprep.subr.mxu0 0.0
          %2206 = vmatpush1.msra.mxu0 %v2168
          %2207 = vmatprep.subr.mxu0 0.0
          %2208 = vmatpush1.msra.mxu0 %v2167
          %2209 = vmatprep.subr.mxu0 0.0
          %2210 = vmatpush2.msra.mxu0 0.0
          %2211 = vmatprep.subr.mxu0 0.0
          %2212 = vmatpush2.msra.mxu0 0.0
          %2213 = vmatprep.subr.mxu0 0.0
          %2214 = vmatpush2.msra.mxu0 0.0
          %2215 = vmatprep.subr.mxu0 0.0
          %2216 = vmatpush2.msra.mxu0 0.0
          %2217 = vmatprep.subr.mxu0 0.0
          %2218 = vmatpush2.msra.mxu0 0.0
          %2219 = vmatprep.subr.mxu0 0.0
          %2220 = vmatpush2.msra.mxu0 0.0
          %2221 = vmatprep.subr.mxu0 0.0
          %2222 = vmatpush2.msra.mxu0 0.0
          %2223 = vmatprep.subr.mxu0 0.0
          %2224 = vmatpush2.msra.mxu0 0.0
          %2225 = vmatprep.subr.mxu0 0.0
          %2226 = vmatpush2.msra.mxu0 0.0
          %2227 = vmatprep.subr.mxu0 0.0
          %2228 = vmatpush2.msra.mxu0 0.0
          %2229 = vmatprep.subr.mxu0 0.0
          %2230 = vmatpush2.msra.mxu0 0.0
          %2231 = vmatprep.subr.mxu0 0.0
          %2232 = vmatpush2.msra.mxu0 0.0
          %2233 = vmatprep.subr.mxu0 0.0
          %2234 = vmatpush2.msra.mxu0 0.0
          %2235 = vmatprep.subr.mxu0 0.0
          %2236 = vmatpush2.msra.mxu0 0.0
          %2237 = vmatprep.subr.mxu0 0.0
          %2238 = vmatpush2.msra.mxu0 0.0
          %2239 = vmatprep.subr.mxu0 0.0
          %2240 = vmatpush2.msra.mxu0 0.0
          %2241 = vmatprep.mubr.f32.mxu0 0.0
          %2242 = vmatmul.mubr.f32.gmra.mxu0 %v2172
          %v2243 = vpop.f32.mrf.mxu0
          %v2244 = vadd.f32 0.0, %v2243
          %v2245 = vpop.f32.mrf.mxu0
          %2246 = vmatprep.mubr.f32.mxu0 0.0
          %2247 = vmatmul.mubr.f32.gmra.mxu0 %v2175
          %v2248 = vpop.f32.mrf.mxu0
          %v2249 = vadd.f32 0.0, %v2248
          %v2250 = vpop.f32.mrf.mxu0
          %2251 = vdwg.mxu0
          %v2252 = vadd.f32 %v2082, %v2244
          %v2253 = vadd.f32 %v2083, %v2249
          %v2254 = vld [vmem:[%s10 + $0x40] sm:$0xff]
          %v2255 = vld [vmem:[%s10 + $0x48] sm:$0xff]
          %v2257 = vsel %vm898, %v2254, 0
          %v2260 = vsel %vm898, %v2255, 0
          %2262 = vmatprep.subr.mxu0 0.0
          %2263 = vmatpush1.msra.mxu0 0.0
          %2264 = vmatprep.subr.mxu0 0.0
          %2265 = vmatpush1.msra.mxu0 0.0
          %2266 = vmatprep.subr.mxu0 0.0
          %2267 = vmatpush1.msra.mxu0 0.0
          %2268 = vmatprep.subr.mxu0 0.0
          %2269 = vmatpush1.msra.mxu0 0.0
          %2270 = vmatprep.subr.mxu0 0.0
          %2271 = vmatpush1.msra.mxu0 0.0
          %2272 = vmatprep.subr.mxu0 0.0
          %2273 = vmatpush1.msra.mxu0 0.0
          %2274 = vmatprep.subr.mxu0 0.0
          %2275 = vmatpush1.msra.mxu0 0.0
          %2276 = vmatprep.subr.mxu0 0.0
          %2277 = vmatpush1.msra.mxu0 0.0
          %2278 = vmatprep.subr.mxu0 0.0
          %2279 = vmatpush1.msra.mxu0 0.0
          %2280 = vmatprep.subr.mxu0 0.0
          %2281 = vmatpush1.msra.mxu0 0.0
          %2282 = vmatprep.subr.mxu0 0.0
          %2283 = vmatpush1.msra.mxu0 0.0
          %2284 = vmatprep.subr.mxu0 0.0
          %2285 = vmatpush1.msra.mxu0 0.0
          %2286 = vmatprep.subr.mxu0 0.0
          %2287 = vmatpush1.msra.mxu0 0.0
          %2288 = vmatprep.subr.mxu0 0.0
          %2289 = vmatpush1.msra.mxu0 0.0
          %2290 = vmatprep.subr.mxu0 0.0
          %2291 = vmatpush1.msra.mxu0 %v1065
          %2292 = vmatprep.subr.mxu0 0.0
          %2293 = vmatpush1.msra.mxu0 %v1060
          %2294 = vmatprep.subr.mxu0 0.0
          %2295 = vmatpush2.msra.mxu0 0.0
          %2296 = vmatprep.subr.mxu0 0.0
          %2297 = vmatpush2.msra.mxu0 0.0
          %2298 = vmatprep.subr.mxu0 0.0
          %2299 = vmatpush2.msra.mxu0 0.0
          %2300 = vmatprep.subr.mxu0 0.0
          %2301 = vmatpush2.msra.mxu0 0.0
          %2302 = vmatprep.subr.mxu0 0.0
          %2303 = vmatpush2.msra.mxu0 0.0
          %2304 = vmatprep.subr.mxu0 0.0
          %2305 = vmatpush2.msra.mxu0 0.0
          %2306 = vmatprep.subr.mxu0 0.0
          %2307 = vmatpush2.msra.mxu0 0.0
          %2308 = vmatprep.subr.mxu0 0.0
          %2309 = vmatpush2.msra.mxu0 0.0
          %2310 = vmatprep.subr.mxu0 0.0
          %2311 = vmatpush2.msra.mxu0 0.0
          %2312 = vmatprep.subr.mxu0 0.0
          %2313 = vmatpush2.msra.mxu0 0.0
          %2314 = vmatprep.subr.mxu0 0.0
          %2315 = vmatpush2.msra.mxu0 0.0
          %2316 = vmatprep.subr.mxu0 0.0
          %2317 = vmatpush2.msra.mxu0 0.0
          %2318 = vmatprep.subr.mxu0 0.0
          %2319 = vmatpush2.msra.mxu0 0.0
          %2320 = vmatprep.subr.mxu0 0.0
          %2321 = vmatpush2.msra.mxu0 0.0
          %2322 = vmatprep.subr.mxu0 0.0
          %2323 = vmatpush2.msra.mxu0 0.0
          %2324 = vmatprep.subr.mxu0 0.0
          %2325 = vmatpush2.msra.mxu0 0.0
          %2326 = vmatprep.mubr.f32.mxu0 0.0
          %2327 = vmatmul.mubr.f32.gmra.mxu0 %v2257
          %v2328 = vpop.f32.mrf.mxu0
          %v2329 = vadd.f32 0.0, %v2328
          %v2330 = vpop.f32.mrf.mxu0
          %2331 = vmatprep.mubr.f32.mxu0 0.0
          %2332 = vmatmul.mubr.f32.gmra.mxu0 %v2260
          %v2333 = vpop.f32.mrf.mxu0
          %v2334 = vadd.f32 0.0, %v2333
          %v2335 = vpop.f32.mrf.mxu0
          %2336 = vdwg.mxu0
          %v2337 = vld [vmem:[%s11 + $0x80] sm:$0xff]
          %v2338 = vld [vmem:[%s11 + $0x88] sm:$0xff]
          %v2339 = vld [vmem:[%s11 + $0x90] sm:$0xff]
          %v2340 = vld [vmem:[%s11 + $0x98] sm:$0xff]
          %v2342 = vsel %vm1074, %v2329, 0
          %v2345 = vsel %vm1074, %v2334, 0
          %2347 = vmatprep.subr.mxu0 0.0
          %2348 = vmatpush1.msra.mxu0 0.0
          %2349 = vmatprep.subr.mxu0 0.0
          %2350 = vmatpush1.msra.mxu0 0.0
          %2351 = vmatprep.subr.mxu0 0.0
          %2352 = vmatpush1.msra.mxu0 0.0
          %2353 = vmatprep.subr.mxu0 0.0
          %2354 = vmatpush1.msra.mxu0 0.0
          %2355 = vmatprep.subr.mxu0 0.0
          %2356 = vmatpush1.msra.mxu0 0.0
          %2357 = vmatprep.subr.mxu0 0.0
          %2358 = vmatpush1.msra.mxu0 0.0
          %2359 = vmatprep.subr.mxu0 0.0
          %2360 = vmatpush1.msra.mxu0 0.0
          %2361 = vmatprep.subr.mxu0 0.0
          %2362 = vmatpush1.msra.mxu0 0.0
          %2363 = vmatprep.subr.mxu0 0.0
          %2364 = vmatpush1.msra.mxu0 0.0
          %2365 = vmatprep.subr.mxu0 0.0
          %2366 = vmatpush1.msra.mxu0 0.0
          %2367 = vmatprep.subr.mxu0 0.0
          %2368 = vmatpush1.msra.mxu0 0.0
          %2369 = vmatprep.subr.mxu0 0.0
          %2370 = vmatpush1.msra.mxu0 0.0
          %2371 = vmatprep.subr.mxu0 0.0
          %2372 = vmatpush1.msra.mxu0 %v2340
          %2373 = vmatprep.subr.mxu0 0.0
          %2374 = vmatpush1.msra.mxu0 %v2339
          %2375 = vmatprep.subr.mxu0 0.0
          %2376 = vmatpush1.msra.mxu0 %v2338
          %2377 = vmatprep.subr.mxu0 0.0
          %2378 = vmatpush1.msra.mxu0 %v2337
          %2379 = vmatprep.subr.mxu0 0.0
          %2380 = vmatpush2.msra.mxu0 0.0
          %2381 = vmatprep.subr.mxu0 0.0
          %2382 = vmatpush2.msra.mxu0 0.0
          %2383 = vmatprep.subr.mxu0 0.0
          %2384 = vmatpush2.msra.mxu0 0.0
          %2385 = vmatprep.subr.mxu0 0.0
          %2386 = vmatpush2.msra.mxu0 0.0
          %2387 = vmatprep.subr.mxu0 0.0
          %2388 = vmatpush2.msra.mxu0 0.0
          %2389 = vmatprep.subr.mxu0 0.0
          %2390 = vmatpush2.msra.mxu0 0.0
          %2391 = vmatprep.subr.mxu0 0.0
          %2392 = vmatpush2.msra.mxu0 0.0
          %2393 = vmatprep.subr.mxu0 0.0
          %2394 = vmatpush2.msra.mxu0 0.0
          %2395 = vmatprep.subr.mxu0 0.0
          %2396 = vmatpush2.msra.mxu0 0.0
          %2397 = vmatprep.subr.mxu0 0.0
          %2398 = vmatpush2.msra.mxu0 0.0
          %2399 = vmatprep.subr.mxu0 0.0
          %2400 = vmatpush2.msra.mxu0 0.0
          %2401 = vmatprep.subr.mxu0 0.0
          %2402 = vmatpush2.msra.mxu0 0.0
          %2403 = vmatprep.subr.mxu0 0.0
          %2404 = vmatpush2.msra.mxu0 0.0
          %2405 = vmatprep.subr.mxu0 0.0
          %2406 = vmatpush2.msra.mxu0 0.0
          %2407 = vmatprep.subr.mxu0 0.0
          %2408 = vmatpush2.msra.mxu0 0.0
          %2409 = vmatprep.subr.mxu0 0.0
          %2410 = vmatpush2.msra.mxu0 0.0
          %2411 = vmatprep.mubr.f32.mxu0 0.0
          %2412 = vmatmul.mubr.f32.gmra.mxu0 %v2342
          %v2413 = vpop.f32.mrf.mxu0
          %v2414 = vadd.f32 0.0, %v2413
          %v2415 = vpop.f32.mrf.mxu0
          %2416 = vmatprep.mubr.f32.mxu0 0.0
          %2417 = vmatmul.mubr.f32.gmra.mxu0 %v2345
          %v2418 = vpop.f32.mrf.mxu0
          %v2419 = vadd.f32 0.0, %v2418
          %v2420 = vpop.f32.mrf.mxu0
          %2421 = vdwg.mxu0
          %v2422 = vadd.f32 %v2252, %v2414
          %v2423 = vadd.f32 %v2253, %v2419
          %v2424 = vld [vmem:[%s12] sm:$0x1]
          %v2426 = vlaneseq
          %v2427 = vshrl.u32 %v2426, 7
          %v2428 = vsub.s32 0, %v2427
          %v2429 = vrot.slane %v2424, %v2428
          %v2431 = vmul.f32 %v2422, %v2429
          %v2432 = vmul.f32 %v2423, %v2429
          %v2433 = vld [vmem:[%s13] sm:$0x1]
          %v2435 = vlaneseq
          %v2436 = vshrl.u32 %v2435, 7
          %v2437 = vsub.s32 0, %v2436
          %v2438 = vrot.slane %v2433, %v2437
          %v2440 = vadd.f32 %v2431, %v2438
          %v2441 = vadd.f32 %v2432, %v2438
          %v2442 = vmax.f32 %v2440, 0.0
          %v2443 = vmax.f32 %v2441, 0.0
          %v2444 = vld [vmem:[%s8] sm:$0x3]
          %v2446 = vsel %vm898, %v2444, 0
          %2448 = vmatprep.subr.mxu0 0.0
          %2449 = vmatpush1.msra.mxu0 0.0
          %2450 = vmatprep.subr.mxu0 0.0
          %2451 = vmatpush1.msra.mxu0 0.0
          %2452 = vmatprep.subr.mxu0 0.0
          %2453 = vmatpush1.msra.mxu0 0.0
          %2454 = vmatprep.subr.mxu0 0.0
          %2455 = vmatpush1.msra.mxu0 0.0
          %2456 = vmatprep.subr.mxu0 0.0
          %2457 = vmatpush1.msra.mxu0 0.0
          %2458 = vmatprep.subr.mxu0 0.0
          %2459 = vmatpush1.msra.mxu0 0.0
          %2460 = vmatprep.subr.mxu0 0.0
          %2461 = vmatpush1.msra.mxu0 0.0
          %2462 = vmatprep.subr.mxu0 0.0
          %2463 = vmatpush1.msra.mxu0 0.0
          %2464 = vmatprep.subr.mxu0 0.0
          %2465 = vmatpush1.msra.mxu0 0.0
          %2466 = vmatprep.subr.mxu0 0.0
          %2467 = vmatpush1.msra.mxu0 0.0
          %2468 = vmatprep.subr.mxu0 0.0
          %2469 = vmatpush1.msra.mxu0 0.0
          %2470 = vmatprep.subr.mxu0 0.0
          %2471 = vmatpush1.msra.mxu0 0.0
          %2472 = vmatprep.subr.mxu0 0.0
          %2473 = vmatpush1.msra.mxu0 0.0
          %2474 = vmatprep.subr.mxu0 0.0
          %2475 = vmatpush1.msra.mxu0 0.0
          %2476 = vmatprep.subr.mxu0 0.0
          %2477 = vmatpush1.msra.mxu0 %v2443
          %2478 = vmatprep.subr.mxu0 0.0
          %2479 = vmatpush1.msra.mxu0 %v2442
          %2480 = vmatprep.subr.mxu0 0.0
          %2481 = vmatpush2.msra.mxu0 0.0
          %2482 = vmatprep.subr.mxu0 0.0
          %2483 = vmatpush2.msra.mxu0 0.0
          %2484 = vmatprep.subr.mxu0 0.0
          %2485 = vmatpush2.msra.mxu0 0.0
          %2486 = vmatprep.subr.mxu0 0.0
          %2487 = vmatpush2.msra.mxu0 0.0
          %2488 = vmatprep.subr.mxu0 0.0
          %2489 = vmatpush2.msra.mxu0 0.0
          %2490 = vmatprep.subr.mxu0 0.0
          %2491 = vmatpush2.msra.mxu0 0.0
          %2492 = vmatprep.subr.mxu0 0.0
          %2493 = vmatpush2.msra.mxu0 0.0
          %2494 = vmatprep.subr.mxu0 0.0
          %2495 = vmatpush2.msra.mxu0 0.0
          %2496 = vmatprep.subr.mxu0 0.0
          %2497 = vmatpush2.msra.mxu0 0.0
          %2498 = vmatprep.subr.mxu0 0.0
          %2499 = vmatpush2.msra.mxu0 0.0
          %2500 = vmatprep.subr.mxu0 0.0
          %2501 = vmatpush2.msra.mxu0 0.0
          %2502 = vmatprep.subr.mxu0 0.0
          %2503 = vmatpush2.msra.mxu0 0.0
          %2504 = vmatprep.subr.mxu0 0.0
          %2505 = vmatpush2.msra.mxu0 0.0
          %2506 = vmatprep.subr.mxu0 0.0
          %2507 = vmatpush2.msra.mxu0 0.0
          %2508 = vmatprep.subr.mxu0 0.0
          %2509 = vmatpush2.msra.mxu0 0.0
          %2510 = vmatprep.subr.mxu0 0.0
          %2511 = vmatpush2.msra.mxu0 0.0
          %2512 = vmatprep.mubr.f32.mxu0 0.0
          %2513 = vmatmul.mubr.f32.gmra.mxu0 %v2446
          %v2514 = vpop.f32.mrf.mxu0
          %v2515 = vadd.f32 0.0, %v2514
          %v2516 = vpop.f32.mrf.mxu0
          %2517 = vdwg.mxu0
          %v2518 = vmul.f32 %v2515, 0.125
          %vm2519 = vcmask 254976
          %2520 = vst.msk [vmem:[#allocation3] sm:$0x3] %vm2519, %v2518
          %2521 = vst.msk [vmem:[#allocation4] sm:$0x3] %vm2519, 0.0
        $region135: #{fwd.1} parent=126 // pred_fallthru
          _
        %v2522 = vld [vmem:[#allocation2] sm:$0x3]
        %v2523 = vld [vmem:[%s806] sm:$0xff]
        %v2524 = vld [vmem:[%s806 + $0x8] sm:$0xff]
        %v2525 = vld [vmem:[%s806 + $0x10] sm:$0xff]
        %v2526 = vld [vmem:[%s806 + $0x18] sm:$0xff]
        %v2527 = vld [vmem:[%s806 + $0x20] sm:$0xff]
        %v2528 = vld [vmem:[%s806 + $0x28] sm:$0xff]
        %v2529 = vld [vmem:[%s806 + $0x30] sm:$0xff]
        %v2530 = vld [vmem:[%s806 + $0x38] sm:$0xff]
        %v2531 = vld [vmem:[%s806 + $0x40] sm:$0xff]
        %v2532 = vld [vmem:[%s806 + $0x48] sm:$0xff]
        %v2533 = vld [vmem:[%s806 + $0x50] sm:$0xff]
        %v2534 = vld [vmem:[%s806 + $0x58] sm:$0xff]
        %v2535 = vld [vmem:[%s806 + $0x60] sm:$0xff]
        %v2536 = vld [vmem:[%s806 + $0x68] sm:$0xff]
        %v2537 = vld [vmem:[%s806 + $0x70] sm:$0xff]
        %v2538 = vld [vmem:[%s806 + $0x78] sm:$0xff]
        %v2539 = vld [vmem:[%s806 + $0x80] sm:$0xff]
        %v2540 = vld [vmem:[%s806 + $0x88] sm:$0xff]
        %v2541 = vld [vmem:[%s806 + $0x90] sm:$0xff]
        %v2542 = vld [vmem:[%s806 + $0x98] sm:$0xff]
        %v2543 = vld [vmem:[%s806 + $0xa0] sm:$0xff]
        %v2544 = vld [vmem:[%s806 + $0xa8] sm:$0xff]
        %v2545 = vld [vmem:[%s806 + $0xb0] sm:$0xff]
        %v2546 = vld [vmem:[%s806 + $0xb8] sm:$0xff]
        %v2547 = vld [vmem:[%s806 + $0xc0] sm:$0xff]
        %v2548 = vld [vmem:[%s806 + $0xc8] sm:$0xff]
        %v2549 = vld [vmem:[%s806 + $0xd0] sm:$0xff]
        %v2550 = vld [vmem:[%s806 + $0xd8] sm:$0xff]
        %v2551 = vld [vmem:[%s806 + $0xe0] sm:$0xff]
        %v2552 = vld [vmem:[%s806 + $0xe8] sm:$0xff]
        %v2553 = vld [vmem:[%s806 + $0xf0] sm:$0xff]
        %v2554 = vld [vmem:[%s806 + $0xf8] sm:$0xff]
        %v2555 = vld [vmem:[%s806 + $0x100] sm:$0xff]
        %v2556 = vld [vmem:[%s806 + $0x108] sm:$0xff]
        %v2557 = vld [vmem:[%s806 + $0x110] sm:$0xff]
        %v2558 = vld [vmem:[%s806 + $0x118] sm:$0xff]
        %v2559 = vld [vmem:[%s806 + $0x120] sm:$0xff]
        %v2560 = vld [vmem:[%s806 + $0x128] sm:$0xff]
        %v2561 = vld [vmem:[%s806 + $0x130] sm:$0xff]
        %v2562 = vld [vmem:[%s806 + $0x138] sm:$0xff]
        %v2563 = vld [vmem:[%s806 + $0x140] sm:$0xff]
        %v2564 = vld [vmem:[%s806 + $0x148] sm:$0xff]
        %v2565 = vld [vmem:[%s806 + $0x150] sm:$0xff]
        %v2566 = vld [vmem:[%s806 + $0x158] sm:$0xff]
        %v2567 = vld [vmem:[%s806 + $0x160] sm:$0xff]
        %v2568 = vld [vmem:[%s806 + $0x168] sm:$0xff]
        %v2569 = vld [vmem:[%s806 + $0x170] sm:$0xff]
        %v2570 = vld [vmem:[%s806 + $0x178] sm:$0xff]
        %v2571 = vld [vmem:[%s806 + $0x180] sm:$0xff]
        %v2572 = vld [vmem:[%s806 + $0x188] sm:$0xff]
        %v2573 = vld [vmem:[%s806 + $0x190] sm:$0xff]
        %v2574 = vld [vmem:[%s806 + $0x198] sm:$0xff]
        %v2575 = vld [vmem:[%s806 + $0x1a0] sm:$0xff]
        %v2576 = vld [vmem:[%s806 + $0x1a8] sm:$0xff]
        %v2577 = vld [vmem:[%s806 + $0x1b0] sm:$0xff]
        %v2578 = vld [vmem:[%s806 + $0x1b8] sm:$0xff]
        %v2579 = vld [vmem:[%s806 + $0x1c0] sm:$0xff]
        %v2580 = vld [vmem:[%s806 + $0x1c8] sm:$0xff]
        %v2581 = vld [vmem:[%s806 + $0x1d0] sm:$0xff]
        %v2582 = vld [vmem:[%s806 + $0x1d8] sm:$0xff]
        %v2583 = vld [vmem:[%s806 + $0x1e0] sm:$0xff]
        %v2584 = vld [vmem:[%s806 + $0x1e8] sm:$0xff]
        %v2585 = vld [vmem:[%s806 + $0x1f0] sm:$0xff]
        %v2586 = vld [vmem:[%s806 + $0x1f8] sm:$0xff]
        %v2587 = vld [vmem:[%s875] sm:$0xf]
        %v2589 = vlaneseq
        %v2590 = vshrl.u32 %v2589, 7
        %v2591 = vsub.s32 0, %v2590
        %v2592 = vrot.slane %v2587, %v2591
        %v2593 = vlaneseq
        %v2594 = vshrl.u32 %v2593, 7
        %v2595 = vsub.s32 1, %v2594
        %v2596 = vrot.slane %v2587, %v2595
        %v2597 = vlaneseq
        %v2598 = vshrl.u32 %v2597, 7
        %v2599 = vsub.s32 2, %v2598
        %v2600 = vrot.slane %v2587, %v2599
        %v2601 = vlaneseq
        %v2602 = vshrl.u32 %v2601, 7
        %v2603 = vsub.s32 3, %v2602
        %v2604 = vrot.slane %v2587, %v2603
        %2609 = vmatprep.subr.mxu0 %v2584
        %2610 = vmatpush1.msra.mxu0 %v2583
        %2611 = vmatprep.subr.mxu0 %v2580
        %2612 = vmatpush1.msra.mxu0 %v2579
        %2613 = vmatprep.subr.mxu0 %v2576
        %2614 = vmatpush1.msra.mxu0 %v2575
        %2615 = vmatprep.subr.mxu0 %v2572
        %2616 = vmatpush1.msra.mxu0 %v2571
        %2617 = vmatprep.subr.mxu0 %v2568
        %2618 = vmatpush1.msra.mxu0 %v2567
        %2619 = vmatprep.subr.mxu0 %v2564
        %2620 = vmatpush1.msra.mxu0 %v2563
        %2621 = vmatprep.subr.mxu0 %v2560
        %2622 = vmatpush1.msra.mxu0 %v2559
        %2623 = vmatprep.subr.mxu0 %v2556
        %2624 = vmatpush1.msra.mxu0 %v2555
        %2625 = vmatprep.subr.mxu0 %v2552
        %2626 = vmatpush1.msra.mxu0 %v2551
        %2627 = vmatprep.subr.mxu0 %v2548
        %2628 = vmatpush1.msra.mxu0 %v2547
        %2629 = vmatprep.subr.mxu0 %v2544
        %2630 = vmatpush1.msra.mxu0 %v2543
        %2631 = vmatprep.subr.mxu0 %v2540
        %2632 = vmatpush1.msra.mxu0 %v2539
        %2633 = vmatprep.subr.mxu0 %v2536
        %2634 = vmatpush1.msra.mxu0 %v2535
        %2635 = vmatprep.subr.mxu0 %v2532
        %2636 = vmatpush1.msra.mxu0 %v2531
        %2637 = vmatprep.subr.mxu0 %v2528
        %2638 = vmatpush1.msra.mxu0 %v2527
        %2639 = vmatprep.subr.mxu0 %v2524
        %2640 = vmatpush1.msra.mxu0 %v2523
        %2641 = vmatprep.subr.mxu0 0.0
        %2642 = vmatpush2.msra.mxu0 0.0
        %2643 = vmatprep.subr.mxu0 0.0
        %2644 = vmatpush2.msra.mxu0 0.0
        %2645 = vmatprep.subr.mxu0 0.0
        %2646 = vmatpush2.msra.mxu0 0.0
        %2647 = vmatprep.subr.mxu0 0.0
        %2648 = vmatpush2.msra.mxu0 0.0
        %2649 = vmatprep.subr.mxu0 0.0
        %2650 = vmatpush2.msra.mxu0 0.0
        %2651 = vmatprep.subr.mxu0 0.0
        %2652 = vmatpush2.msra.mxu0 0.0
        %2653 = vmatprep.subr.mxu0 0.0
        %2654 = vmatpush2.msra.mxu0 0.0
        %2655 = vmatprep.subr.mxu0 0.0
        %2656 = vmatpush2.msra.mxu0 0.0
        %2657 = vmatprep.subr.mxu0 0.0
        %2658 = vmatpush2.msra.mxu0 0.0
        %2659 = vmatprep.subr.mxu0 0.0
        %2660 = vmatpush2.msra.mxu0 0.0
        %2661 = vmatprep.subr.mxu0 0.0
        %2662 = vmatpush2.msra.mxu0 0.0
        %2663 = vmatprep.subr.mxu0 0.0
        %2664 = vmatpush2.msra.mxu0 0.0
        %2665 = vmatprep.subr.mxu0 0.0
        %2666 = vmatpush2.msra.mxu0 0.0
        %2667 = vmatprep.subr.mxu0 0.0
        %2668 = vmatpush2.msra.mxu0 0.0
        %2669 = vmatprep.subr.mxu0 0.0
        %2670 = vmatpush2.msra.mxu0 0.0
        %2671 = vmatprep.subr.mxu0 0.0
        %2672 = vmatpush2.msra.mxu0 0.0
        %2673 = vmatprep.mubr.f32.mxu0 0.0
        %2674 = vmatmul.mubr.f32.gmra.mxu0 %v2522
        %v2675 = vpop.f32.mrf.mxu0
        %v2676 = vadd.f32 %v2592, %v2675
        %v2677 = vpop.f32.mrf.mxu0
        %v2678 = vadd.f32 %v2596, %v2677
        %2679 = vdwg.mxu0
        %2680 = vmatprep.subr.mxu0 %v2586
        %2681 = vmatpush1.msra.mxu0 %v2585
        %2682 = vmatprep.subr.mxu0 %v2582
        %2683 = vmatpush1.msra.mxu0 %v2581
        %2684 = vmatprep.subr.mxu0 %v2578
        %2685 = vmatpush1.msra.mxu0 %v2577
        %2686 = vmatprep.subr.mxu0 %v2574
        %2687 = vmatpush1.msra.mxu0 %v2573
        %2688 = vmatprep.subr.mxu0 %v2570
        %2689 = vmatpush1.msra.mxu0 %v2569
        %2690 = vmatprep.subr.mxu0 %v2566
        %2691 = vmatpush1.msra.mxu0 %v2565
        %2692 = vmatprep.subr.mxu0 %v2562
        %2693 = vmatpush1.msra.mxu0 %v2561
        %2694 = vmatprep.subr.mxu0 %v2558
        %2695 = vmatpush1.msra.mxu0 %v2557
        %2696 = vmatprep.subr.mxu0 %v2554
        %2697 = vmatpush1.msra.mxu0 %v2553
        %2698 = vmatprep.subr.mxu0 %v2550
        %2699 = vmatpush1.msra.mxu0 %v2549
        %2700 = vmatprep.subr.mxu0 %v2546
        %2701 = vmatpush1.msra.mxu0 %v2545
        %2702 = vmatprep.subr.mxu0 %v2542
        %2703 = vmatpush1.msra.mxu0 %v2541
        %2704 = vmatprep.subr.mxu0 %v2538
        %2705 = vmatpush1.msra.mxu0 %v2537
        %2706 = vmatprep.subr.mxu0 %v2534
        %2707 = vmatpush1.msra.mxu0 %v2533
        %2708 = vmatprep.subr.mxu0 %v2530
        %2709 = vmatpush1.msra.mxu0 %v2529
        %2710 = vmatprep.subr.mxu0 %v2526
        %2711 = vmatpush1.msra.mxu0 %v2525
        %2712 = vmatprep.subr.mxu0 0.0
        %2713 = vmatpush2.msra.mxu0 0.0
        %2714 = vmatprep.subr.mxu0 0.0
        %2715 = vmatpush2.msra.mxu0 0.0
        %2716 = vmatprep.subr.mxu0 0.0
        %2717 = vmatpush2.msra.mxu0 0.0
        %2718 = vmatprep.subr.mxu0 0.0
        %2719 = vmatpush2.msra.mxu0 0.0
        %2720 = vmatprep.subr.mxu0 0.0
        %2721 = vmatpush2.msra.mxu0 0.0
        %2722 = vmatprep.subr.mxu0 0.0
        %2723 = vmatpush2.msra.mxu0 0.0
        %2724 = vmatprep.subr.mxu0 0.0
        %2725 = vmatpush2.msra.mxu0 0.0
        %2726 = vmatprep.subr.mxu0 0.0
        %2727 = vmatpush2.msra.mxu0 0.0
        %2728 = vmatprep.subr.mxu0 0.0
        %2729 = vmatpush2.msra.mxu0 0.0
        %2730 = vmatprep.subr.mxu0 0.0
        %2731 = vmatpush2.msra.mxu0 0.0
        %2732 = vmatprep.subr.mxu0 0.0
        %2733 = vmatpush2.msra.mxu0 0.0
        %2734 = vmatprep.subr.mxu0 0.0
        %2735 = vmatpush2.msra.mxu0 0.0
        %2736 = vmatprep.subr.mxu0 0.0
        %2737 = vmatpush2.msra.mxu0 0.0
        %2738 = vmatprep.subr.mxu0 0.0
        %2739 = vmatpush2.msra.mxu0 0.0
        %2740 = vmatprep.subr.mxu0 0.0
        %2741 = vmatpush2.msra.mxu0 0.0
        %2742 = vmatprep.subr.mxu0 0.0
        %2743 = vmatpush2.msra.mxu0 0.0
        %2744 = vmatprep.mubr.f32.mxu0 0.0
        %2745 = vmatmul.mubr.f32.gmra.mxu0 %v2522
        %v2746 = vpop.f32.mrf.mxu0
        %v2747 = vadd.f32 %v2600, %v2746
        %v2748 = vpop.f32.mrf.mxu0
        %v2749 = vadd.f32 %v2604, %v2748
        %2750 = vdwg.mxu0
        %v2751 = vmax.f32 %v2676, 0.0
        %v2752 = vmax.f32 %v2678, 0.0
        %v2753 = vmax.f32 %v2747, 0.0
        %v2754 = vmax.f32 %v2749, 0.0
        %v2755 = vld [vmem:[#allocation4] sm:$0x3]
        %v2756 = vld [vmem:[%s881] sm:$0xff]
        %v2757 = vld [vmem:[%s881 + $0x8] sm:$0xff]
        %v2758 = vld [vmem:[%s881 + $0x10] sm:$0xff]
        %v2759 = vld [vmem:[%s881 + $0x18] sm:$0xff]
        %v2760 = vld [vmem:[%s881 + $0x20] sm:$0xff]
        %v2761 = vld [vmem:[%s881 + $0x28] sm:$0xff]
        %v2762 = vld [vmem:[%s881 + $0x30] sm:$0xff]
        %v2763 = vld [vmem:[%s881 + $0x38] sm:$0xff]
        %v2764 = vld [vmem:[%s881 + $0x40] sm:$0xff]
        %v2765 = vld [vmem:[%s881 + $0x48] sm:$0xff]
        %v2766 = vld [vmem:[%s881 + $0x50] sm:$0xff]
        %v2767 = vld [vmem:[%s881 + $0x58] sm:$0xff]
        %v2768 = vld [vmem:[%s881 + $0x60] sm:$0xff]
        %v2769 = vld [vmem:[%s881 + $0x68] sm:$0xff]
        %v2770 = vld [vmem:[%s881 + $0x70] sm:$0xff]
        %v2771 = vld [vmem:[%s881 + $0x78] sm:$0xff]
        %v2772 = vld [vmem:[%s881 + $0x80] sm:$0xff]
        %v2773 = vld [vmem:[%s881 + $0x88] sm:$0xff]
        %v2774 = vld [vmem:[%s881 + $0x90] sm:$0xff]
        %v2775 = vld [vmem:[%s881 + $0x98] sm:$0xff]
        %v2776 = vld [vmem:[%s881 + $0xa0] sm:$0xff]
        %v2777 = vld [vmem:[%s881 + $0xa8] sm:$0xff]
        %v2778 = vld [vmem:[%s881 + $0xb0] sm:$0xff]
        %v2779 = vld [vmem:[%s881 + $0xb8] sm:$0xff]
        %v2780 = vld [vmem:[%s881 + $0xc0] sm:$0xff]
        %v2781 = vld [vmem:[%s881 + $0xc8] sm:$0xff]
        %v2782 = vld [vmem:[%s881 + $0xd0] sm:$0xff]
        %v2783 = vld [vmem:[%s881 + $0xd8] sm:$0xff]
        %v2784 = vld [vmem:[%s881 + $0xe0] sm:$0xff]
        %v2785 = vld [vmem:[%s881 + $0xe8] sm:$0xff]
        %v2786 = vld [vmem:[%s881 + $0xf0] sm:$0xff]
        %v2787 = vld [vmem:[%s881 + $0xf8] sm:$0xff]
        %v2788 = vld [vmem:[%s881 + $0x100] sm:$0xff]
        %v2789 = vld [vmem:[%s881 + $0x108] sm:$0xff]
        %v2790 = vld [vmem:[%s881 + $0x110] sm:$0xff]
        %v2791 = vld [vmem:[%s881 + $0x118] sm:$0xff]
        %v2792 = vld [vmem:[%s881 + $0x120] sm:$0xff]
        %v2793 = vld [vmem:[%s881 + $0x128] sm:$0xff]
        %v2794 = vld [vmem:[%s881 + $0x130] sm:$0xff]
        %v2795 = vld [vmem:[%s881 + $0x138] sm:$0xff]
        %v2796 = vld [vmem:[%s881 + $0x140] sm:$0xff]
        %v2797 = vld [vmem:[%s881 + $0x148] sm:$0xff]
        %v2798 = vld [vmem:[%s881 + $0x150] sm:$0xff]
        %v2799 = vld [vmem:[%s881 + $0x158] sm:$0xff]
        %v2800 = vld [vmem:[%s881 + $0x160] sm:$0xff]
        %v2801 = vld [vmem:[%s881 + $0x168] sm:$0xff]
        %v2802 = vld [vmem:[%s881 + $0x170] sm:$0xff]
        %v2803 = vld [vmem:[%s881 + $0x178] sm:$0xff]
        %v2804 = vld [vmem:[%s881 + $0x180] sm:$0xff]
        %v2805 = vld [vmem:[%s881 + $0x188] sm:$0xff]
        %v2806 = vld [vmem:[%s881 + $0x190] sm:$0xff]
        %v2807 = vld [vmem:[%s881 + $0x198] sm:$0xff]
        %v2808 = vld [vmem:[%s881 + $0x1a0] sm:$0xff]
        %v2809 = vld [vmem:[%s881 + $0x1a8] sm:$0xff]
        %v2810 = vld [vmem:[%s881 + $0x1b0] sm:$0xff]
        %v2811 = vld [vmem:[%s881 + $0x1b8] sm:$0xff]
        %v2812 = vld [vmem:[%s881 + $0x1c0] sm:$0xff]
        %v2813 = vld [vmem:[%s881 + $0x1c8] sm:$0xff]
        %v2814 = vld [vmem:[%s881 + $0x1d0] sm:$0xff]
        %v2815 = vld [vmem:[%s881 + $0x1d8] sm:$0xff]
        %v2816 = vld [vmem:[%s881 + $0x1e0] sm:$0xff]
        %v2817 = vld [vmem:[%s881 + $0x1e8] sm:$0xff]
        %v2818 = vld [vmem:[%s881 + $0x1f0] sm:$0xff]
        %v2819 = vld [vmem:[%s881 + $0x1f8] sm:$0xff]
        %2820 = vmatprep.subr.mxu0 0.0
        %2821 = vmatpush1.msra.mxu0 %v2771
        %2822 = vmatprep.subr.mxu0 0.0
        %2823 = vmatpush1.msra.mxu0 %v2770
        %2824 = vmatprep.subr.mxu0 0.0
        %2825 = vmatpush1.msra.mxu0 %v2769
        %2826 = vmatprep.subr.mxu0 0.0
        %2827 = vmatpush1.msra.mxu0 %v2768
        %2828 = vmatprep.subr.mxu0 0.0
        %2829 = vmatpush1.msra.mxu0 %v2767
        %2830 = vmatprep.subr.mxu0 0.0
        %2831 = vmatpush1.msra.mxu0 %v2766
        %2832 = vmatprep.subr.mxu0 0.0
        %2833 = vmatpush1.msra.mxu0 %v2765
        %2834 = vmatprep.subr.mxu0 0.0
        %2835 = vmatpush1.msra.mxu0 %v2764
        %2836 = vmatprep.subr.mxu0 0.0
        %2837 = vmatpush1.msra.mxu0 %v2763
        %2838 = vmatprep.subr.mxu0 0.0
        %2839 = vmatpush1.msra.mxu0 %v2762
        %2840 = vmatprep.subr.mxu0 0.0
        %2841 = vmatpush1.msra.mxu0 %v2761
        %2842 = vmatprep.subr.mxu0 0.0
        %2843 = vmatpush1.msra.mxu0 %v2760
        %2844 = vmatprep.subr.mxu0 0.0
        %2845 = vmatpush1.msra.mxu0 %v2759
        %2846 = vmatprep.subr.mxu0 0.0
        %2847 = vmatpush1.msra.mxu0 %v2758
        %2848 = vmatprep.subr.mxu0 0.0
        %2849 = vmatpush1.msra.mxu0 %v2757
        %2850 = vmatprep.subr.mxu0 0.0
        %2851 = vmatpush1.msra.mxu0 %v2756
        %2852 = vmatprep.subr.mxu0 0.0
        %2853 = vmatpush2.msra.mxu0 %v2787
        %2854 = vmatprep.subr.mxu0 0.0
        %2855 = vmatpush2.msra.mxu0 %v2786
        %2856 = vmatprep.subr.mxu0 0.0
        %2857 = vmatpush2.msra.mxu0 %v2785
        %2858 = vmatprep.subr.mxu0 0.0
        %2859 = vmatpush2.msra.mxu0 %v2784
        %2860 = vmatprep.subr.mxu0 0.0
        %2861 = vmatpush2.msra.mxu0 %v2783
        %2862 = vmatprep.subr.mxu0 0.0
        %2863 = vmatpush2.msra.mxu0 %v2782
        %2864 = vmatprep.subr.mxu0 0.0
        %2865 = vmatpush2.msra.mxu0 %v2781
        %2866 = vmatprep.subr.mxu0 0.0
        %2867 = vmatpush2.msra.mxu0 %v2780
        %2868 = vmatprep.subr.mxu0 0.0
        %2869 = vmatpush2.msra.mxu0 %v2779
        %2870 = vmatprep.subr.mxu0 0.0
        %2871 = vmatpush2.msra.mxu0 %v2778
        %2872 = vmatprep.subr.mxu0 0.0
        %2873 = vmatpush2.msra.mxu0 %v2777
        %2874 = vmatprep.subr.mxu0 0.0
        %2875 = vmatpush2.msra.mxu0 %v2776
        %2876 = vmatprep.subr.mxu0 0.0
        %2877 = vmatpush2.msra.mxu0 %v2775
        %2878 = vmatprep.subr.mxu0 0.0
        %2879 = vmatpush2.msra.mxu0 %v2774
        %2880 = vmatprep.subr.mxu0 0.0
        %2881 = vmatpush2.msra.mxu0 %v2773
        %2882 = vmatprep.subr.mxu0 0.0
        %2883 = vmatpush2.msra.mxu0 %v2772
        %2884 = vmatprep.mubr.f32.mxu0 %v2752
        %2885 = vmatmul.mubr.f32.gmra.mxu0 %v2751
        %v2886 = vpop.f32.mrf.mxu0
        %v2887 = vadd.f32 0.0, %v2886
        %v2888 = vpop.f32.mrf.mxu0
        %2889 = vdwg.mxu0
        %2890 = vmatprep.subr.mxu0 0.0
        %2891 = vmatpush1.msra.mxu0 %v2803
        %2892 = vmatprep.subr.mxu0 0.0
        %2893 = vmatpush1.msra.mxu0 %v2802
        %2894 = vmatprep.subr.mxu0 0.0
        %2895 = vmatpush1.msra.mxu0 %v2801
        %2896 = vmatprep.subr.mxu0 0.0
        %2897 = vmatpush1.msra.mxu0 %v2800
        %2898 = vmatprep.subr.mxu0 0.0
        %2899 = vmatpush1.msra.mxu0 %v2799
        %2900 = vmatprep.subr.mxu0 0.0
        %2901 = vmatpush1.msra.mxu0 %v2798
        %2902 = vmatprep.subr.mxu0 0.0
        %2903 = vmatpush1.msra.mxu0 %v2797
        %2904 = vmatprep.subr.mxu0 0.0
        %2905 = vmatpush1.msra.mxu0 %v2796
        %2906 = vmatprep.subr.mxu0 0.0
        %2907 = vmatpush1.msra.mxu0 %v2795
        %2908 = vmatprep.subr.mxu0 0.0
        %2909 = vmatpush1.msra.mxu0 %v2794
        %2910 = vmatprep.subr.mxu0 0.0
        %2911 = vmatpush1.msra.mxu0 %v2793
        %2912 = vmatprep.subr.mxu0 0.0
        %2913 = vmatpush1.msra.mxu0 %v2792
        %2914 = vmatprep.subr.mxu0 0.0
        %2915 = vmatpush1.msra.mxu0 %v2791
        %2916 = vmatprep.subr.mxu0 0.0
        %2917 = vmatpush1.msra.mxu0 %v2790
        %2918 = vmatprep.subr.mxu0 0.0
        %2919 = vmatpush1.msra.mxu0 %v2789
        %2920 = vmatprep.subr.mxu0 0.0
        %2921 = vmatpush1.msra.mxu0 %v2788
        %2922 = vmatprep.subr.mxu0 0.0
        %2923 = vmatpush2.msra.mxu0 %v2819
        %2924 = vmatprep.subr.mxu0 0.0
        %2925 = vmatpush2.msra.mxu0 %v2818
        %2926 = vmatprep.subr.mxu0 0.0
        %2927 = vmatpush2.msra.mxu0 %v2817
        %2928 = vmatprep.subr.mxu0 0.0
        %2929 = vmatpush2.msra.mxu0 %v2816
        %2930 = vmatprep.subr.mxu0 0.0
        %2931 = vmatpush2.msra.mxu0 %v2815
        %2932 = vmatprep.subr.mxu0 0.0
        %2933 = vmatpush2.msra.mxu0 %v2814
        %2934 = vmatprep.subr.mxu0 0.0
        %2935 = vmatpush2.msra.mxu0 %v2813
        %2936 = vmatprep.subr.mxu0 0.0
        %2937 = vmatpush2.msra.mxu0 %v2812
        %2938 = vmatprep.subr.mxu0 0.0
        %2939 = vmatpush2.msra.mxu0 %v2811
        %2940 = vmatprep.subr.mxu0 0.0
        %2941 = vmatpush2.msra.mxu0 %v2810
        %2942 = vmatprep.subr.mxu0 0.0
        %2943 = vmatpush2.msra.mxu0 %v2809
        %2944 = vmatprep.subr.mxu0 0.0
        %2945 = vmatpush2.msra.mxu0 %v2808
        %2946 = vmatprep.subr.mxu0 0.0
        %2947 = vmatpush2.msra.mxu0 %v2807
        %2948 = vmatprep.subr.mxu0 0.0
        %2949 = vmatpush2.msra.mxu0 %v2806
        %2950 = vmatprep.subr.mxu0 0.0
        %2951 = vmatpush2.msra.mxu0 %v2805
        %2952 = vmatprep.subr.mxu0 0.0
        %2953 = vmatpush2.msra.mxu0 %v2804
        %2954 = vmatprep.mubr.f32.mxu0 %v2754
        %2955 = vmatmul.mubr.f32.gmra.mxu0 %v2753
        %v2956 = vpop.f32.mrf.mxu0
        %v2957 = vadd.f32 %v2887, %v2956
        %v2958 = vpop.f32.mrf.mxu0
        %2959 = vdwg.mxu0
        %v2960 = vadd.f32 %v2755, %v2957
        %vm2961 = vcmask 254976
        %2962 = vst.msk [vmem:[#allocation4] sm:$0x3] %vm2961, %v2960
        %p2963 = scmp.eq.s32.totalorder %s36, 7
        // Predicated region
        $region136: #{fwd.1} parent=126 // pred_check
          %p2964 = pneg %p2963
        $region137: #{fwd.1} parent=126 // pred_check_branch
          %2966 = sbr.rel (%p2964) target = $region139
        $region138: #{fwd.1} parent=126 // pred_region
          %v2967 = vld [vmem:[#allocation4] sm:$0x3]
          %v2968 = vld [vmem:[%s17] sm:$0x1]
          %v2970 = vlaneseq
          %v2971 = vshrl.u32 %v2970, 7
          %v2972 = vsub.s32 0, %v2971
          %v2973 = vrot.slane %v2968, %v2972
          %v2975 = vadd.f32 %v2967, %v2973
          %v2976 = vld [vmem:[#allocation3] sm:$0x3]
          %v2977 = vadd.f32 %v2975, %v2976
          %v2978 = vld [vmem:[%s18] sm:$0xff]
          %v2979 = vld [vmem:[%s18 + $0x8] sm:$0xff]
          %v2980 = vld [vmem:[%s18 + $0x10] sm:$0xff]
          %v2981 = vld [vmem:[%s18 + $0x18] sm:$0xff]
          %v2982 = vld [vmem:[%s18 + $0x20] sm:$0xff]
          %v2983 = vld [vmem:[%s18 + $0x28] sm:$0xff]
          %v2984 = vld [vmem:[%s18 + $0x30] sm:$0xff]
          %v2985 = vld [vmem:[%s18 + $0x38] sm:$0xff]
          %v2986 = vld [vmem:[%s18 + $0x40] sm:$0xff]
          %v2987 = vld [vmem:[%s18 + $0x48] sm:$0xff]
          %v2988 = vld [vmem:[%s18 + $0x50] sm:$0xff]
          %v2989 = vld [vmem:[%s18 + $0x58] sm:$0xff]
          %v2990 = vld [vmem:[%s18 + $0x60] sm:$0xff]
          %v2991 = vld [vmem:[%s18 + $0x68] sm:$0xff]
          %v2992 = vld [vmem:[%s18 + $0x70] sm:$0xff]
          %v2993 = vld [vmem:[%s18 + $0x78] sm:$0xff]
          %v2994 = vld [vmem:[%s19] sm:$0xf]
          %v2996 = vlaneseq
          %v2997 = vshrl.u32 %v2996, 7
          %v2998 = vsub.s32 0, %v2997
          %v2999 = vrot.slane %v2994, %v2998
          %v3000 = vlaneseq
          %v3001 = vshrl.u32 %v3000, 7
          %v3002 = vsub.s32 1, %v3001
          %v3003 = vrot.slane %v2994, %v3002
          %v3004 = vlaneseq
          %v3005 = vshrl.u32 %v3004, 7
          %v3006 = vsub.s32 2, %v3005
          %v3007 = vrot.slane %v2994, %v3006
          %v3008 = vlaneseq
          %v3009 = vshrl.u32 %v3008, 7
          %v3010 = vsub.s32 3, %v3009
          %v3011 = vrot.slane %v2994, %v3010
          %vm3016 = vcmask 261120
          %v3018 = vsel %vm3016, %v2977, 0
          %3020 = vmatprep.subr.mxu0 0.0
          %3021 = vmatpush1.msra.mxu0 0.0
          %3022 = vmatprep.subr.mxu0 0.0
          %3023 = vmatpush1.msra.mxu0 0.0
          %3024 = vmatprep.subr.mxu0 0.0
          %3025 = vmatpush1.msra.mxu0 0.0
          %3026 = vmatprep.subr.mxu0 0.0
          %3027 = vmatpush1.msra.mxu0 0.0
          %3028 = vmatprep.subr.mxu0 0.0
          %3029 = vmatpush1.msra.mxu0 0.0
          %3030 = vmatprep.subr.mxu0 0.0
          %3031 = vmatpush1.msra.mxu0 0.0
          %3032 = vmatprep.subr.mxu0 0.0
          %3033 = vmatpush1.msra.mxu0 0.0
          %3034 = vmatprep.subr.mxu0 0.0
          %3035 = vmatpush1.msra.mxu0 0.0
          %3036 = vmatprep.subr.mxu0 0.0
          %3037 = vmatpush1.msra.mxu0 0.0
          %3038 = vmatprep.subr.mxu0 0.0
          %3039 = vmatpush1.msra.mxu0 0.0
          %3040 = vmatprep.subr.mxu0 0.0
          %3041 = vmatpush1.msra.mxu0 0.0
          %3042 = vmatprep.subr.mxu0 0.0
          %3043 = vmatpush1.msra.mxu0 0.0
          %3044 = vmatprep.subr.mxu0 %v2991
          %3045 = vmatpush1.msra.mxu0 %v2990
          %3046 = vmatprep.subr.mxu0 %v2987
          %3047 = vmatpush1.msra.mxu0 %v2986
          %3048 = vmatprep.subr.mxu0 %v2983
          %3049 = vmatpush1.msra.mxu0 %v2982
          %3050 = vmatprep.subr.mxu0 %v2979
          %3051 = vmatpush1.msra.mxu0 %v2978
          %3052 = vmatprep.subr.mxu0 0.0
          %3053 = vmatpush2.msra.mxu0 0.0
          %3054 = vmatprep.subr.mxu0 0.0
          %3055 = vmatpush2.msra.mxu0 0.0
          %3056 = vmatprep.subr.mxu0 0.0
          %3057 = vmatpush2.msra.mxu0 0.0
          %3058 = vmatprep.subr.mxu0 0.0
          %3059 = vmatpush2.msra.mxu0 0.0
          %3060 = vmatprep.subr.mxu0 0.0
          %3061 = vmatpush2.msra.mxu0 0.0
          %3062 = vmatprep.subr.mxu0 0.0
          %3063 = vmatpush2.msra.mxu0 0.0
          %3064 = vmatprep.subr.mxu0 0.0
          %3065 = vmatpush2.msra.mxu0 0.0
          %3066 = vmatprep.subr.mxu0 0.0
          %3067 = vmatpush2.msra.mxu0 0.0
          %3068 = vmatprep.subr.mxu0 0.0
          %3069 = vmatpush2.msra.mxu0 0.0
          %3070 = vmatprep.subr.mxu0 0.0
          %3071 = vmatpush2.msra.mxu0 0.0
          %3072 = vmatprep.subr.mxu0 0.0
          %3073 = vmatpush2.msra.mxu0 0.0
          %3074 = vmatprep.subr.mxu0 0.0
          %3075 = vmatpush2.msra.mxu0 0.0
          %3076 = vmatprep.subr.mxu0 0.0
          %3077 = vmatpush2.msra.mxu0 0.0
          %3078 = vmatprep.subr.mxu0 0.0
          %3079 = vmatpush2.msra.mxu0 0.0
          %3080 = vmatprep.subr.mxu0 0.0
          %3081 = vmatpush2.msra.mxu0 0.0
          %3082 = vmatprep.subr.mxu0 0.0
          %3083 = vmatpush2.msra.mxu0 0.0
          %3084 = vmatprep.mubr.f32.mxu0 0.0
          %3085 = vmatmul.mubr.f32.gmra.mxu0 %v3018
          %v3086 = vpop.f32.mrf.mxu0
          %v3087 = vadd.f32 %v2999, %v3086
          %v3088 = vpop.f32.mrf.mxu0
          %v3089 = vadd.f32 %v3003, %v3088
          %3090 = vdwg.mxu0
          %3091 = vmatprep.subr.mxu0 0.0
          %3092 = vmatpush1.msra.mxu0 0.0
          %3093 = vmatprep.subr.mxu0 0.0
          %3094 = vmatpush1.msra.mxu0 0.0
          %3095 = vmatprep.subr.mxu0 0.0
          %3096 = vmatpush1.msra.mxu0 0.0
          %3097 = vmatprep.subr.mxu0 0.0
          %3098 = vmatpush1.msra.mxu0 0.0
          %3099 = vmatprep.subr.mxu0 0.0
          %3100 = vmatpush1.msra.mxu0 0.0
          %3101 = vmatprep.subr.mxu0 0.0
          %3102 = vmatpush1.msra.mxu0 0.0
          %3103 = vmatprep.subr.mxu0 0.0
          %3104 = vmatpush1.msra.mxu0 0.0
          %3105 = vmatprep.subr.mxu0 0.0
          %3106 = vmatpush1.msra.mxu0 0.0
          %3107 = vmatprep.subr.mxu0 0.0
          %3108 = vmatpush1.msra.mxu0 0.0
          %3109 = vmatprep.subr.mxu0 0.0
          %3110 = vmatpush1.msra.mxu0 0.0
          %3111 = vmatprep.subr.mxu0 0.0
          %3112 = vmatpush1.msra.mxu0 0.0
          %3113 = vmatprep.subr.mxu0 0.0
          %3114 = vmatpush1.msra.mxu0 0.0
          %3115 = vmatprep.subr.mxu0 %v2993
          %3116 = vmatpush1.msra.mxu0 %v2992
          %3117 = vmatprep.subr.mxu0 %v2989
          %3118 = vmatpush1.msra.mxu0 %v2988
          %3119 = vmatprep.subr.mxu0 %v2985
          %3120 = vmatpush1.msra.mxu0 %v2984
          %3121 = vmatprep.subr.mxu0 %v2981
          %3122 = vmatpush1.msra.mxu0 %v2980
          %3123 = vmatprep.subr.mxu0 0.0
          %3124 = vmatpush2.msra.mxu0 0.0
          %3125 = vmatprep.subr.mxu0 0.0
          %3126 = vmatpush2.msra.mxu0 0.0
          %3127 = vmatprep.subr.mxu0 0.0
          %3128 = vmatpush2.msra.mxu0 0.0
          %3129 = vmatprep.subr.mxu0 0.0
          %3130 = vmatpush2.msra.mxu0 0.0
          %3131 = vmatprep.subr.mxu0 0.0
          %3132 = vmatpush2.msra.mxu0 0.0
          %3133 = vmatprep.subr.mxu0 0.0
          %3134 = vmatpush2.msra.mxu0 0.0
          %3135 = vmatprep.subr.mxu0 0.0
          %3136 = vmatpush2.msra.mxu0 0.0
          %3137 = vmatprep.subr.mxu0 0.0
          %3138 = vmatpush2.msra.mxu0 0.0
          %3139 = vmatprep.subr.mxu0 0.0
          %3140 = vmatpush2.msra.mxu0 0.0
          %3141 = vmatprep.subr.mxu0 0.0
          %3142 = vmatpush2.msra.mxu0 0.0
          %3143 = vmatprep.subr.mxu0 0.0
          %3144 = vmatpush2.msra.mxu0 0.0
          %3145 = vmatprep.subr.mxu0 0.0
          %3146 = vmatpush2.msra.mxu0 0.0
          %3147 = vmatprep.subr.mxu0 0.0
          %3148 = vmatpush2.msra.mxu0 0.0
          %3149 = vmatprep.subr.mxu0 0.0
          %3150 = vmatpush2.msra.mxu0 0.0
          %3151 = vmatprep.subr.mxu0 0.0
          %3152 = vmatpush2.msra.mxu0 0.0
          %3153 = vmatprep.subr.mxu0 0.0
          %3154 = vmatpush2.msra.mxu0 0.0
          %3155 = vmatprep.mubr.f32.mxu0 0.0
          %3156 = vmatmul.mubr.f32.gmra.mxu0 %v3018
          %v3157 = vpop.f32.mrf.mxu0
          %v3158 = vadd.f32 %v3007, %v3157
          %v3159 = vpop.f32.mrf.mxu0
          %v3160 = vadd.f32 %v3011, %v3159
          %3161 = vdwg.mxu0
          %v3162 = vmax.f32 %v3087, 0.0
          %v3163 = vmax.f32 %v3089, 0.0
          %v3164 = vmax.f32 %v3158, 0.0
          %v3165 = vmax.f32 %v3160, 0.0
          %v3166 = vld [vmem:[%s20] sm:$0xff]
          %v3167 = vld [vmem:[%s20 + $0x8] sm:$0xff]
          %v3168 = vld [vmem:[%s20 + $0x10] sm:$0xff]
          %v3169 = vld [vmem:[%s20 + $0x18] sm:$0xff]
          %v3170 = vld [vmem:[%s20 + $0x20] sm:$0xff]
          %v3171 = vld [vmem:[%s20 + $0x28] sm:$0xff]
          %v3172 = vld [vmem:[%s20 + $0x30] sm:$0xff]
          %v3173 = vld [vmem:[%s20 + $0x38] sm:$0xff]
          %v3174 = vld [vmem:[%s20 + $0x40] sm:$0xff]
          %v3175 = vld [vmem:[%s20 + $0x48] sm:$0xff]
          %v3176 = vld [vmem:[%s20 + $0x50] sm:$0xff]
          %v3177 = vld [vmem:[%s20 + $0x58] sm:$0xff]
          %v3178 = vld [vmem:[%s20 + $0x60] sm:$0xff]
          %v3179 = vld [vmem:[%s20 + $0x68] sm:$0xff]
          %v3180 = vld [vmem:[%s20 + $0x70] sm:$0xff]
          %v3181 = vld [vmem:[%s20 + $0x78] sm:$0xff]
          %v3182 = vld [vmem:[%s20 + $0x80] sm:$0xff]
          %v3183 = vld [vmem:[%s20 + $0x88] sm:$0xff]
          %v3184 = vld [vmem:[%s20 + $0x90] sm:$0xff]
          %v3185 = vld [vmem:[%s20 + $0x98] sm:$0xff]
          %v3186 = vld [vmem:[%s20 + $0xa0] sm:$0xff]
          %v3187 = vld [vmem:[%s20 + $0xa8] sm:$0xff]
          %v3188 = vld [vmem:[%s20 + $0xb0] sm:$0xff]
          %v3189 = vld [vmem:[%s20 + $0xb8] sm:$0xff]
          %v3190 = vld [vmem:[%s20 + $0xc0] sm:$0xff]
          %v3191 = vld [vmem:[%s20 + $0xc8] sm:$0xff]
          %v3192 = vld [vmem:[%s20 + $0xd0] sm:$0xff]
          %v3193 = vld [vmem:[%s20 + $0xd8] sm:$0xff]
          %v3194 = vld [vmem:[%s20 + $0xe0] sm:$0xff]
          %v3195 = vld [vmem:[%s20 + $0xe8] sm:$0xff]
          %v3196 = vld [vmem:[%s20 + $0xf0] sm:$0xff]
          %v3197 = vld [vmem:[%s20 + $0xf8] sm:$0xff]
          %v3198 = vld [vmem:[%s20 + $0x100] sm:$0xff]
          %v3199 = vld [vmem:[%s20 + $0x108] sm:$0xff]
          %v3200 = vld [vmem:[%s20 + $0x110] sm:$0xff]
          %v3201 = vld [vmem:[%s20 + $0x118] sm:$0xff]
          %v3202 = vld [vmem:[%s20 + $0x120] sm:$0xff]
          %v3203 = vld [vmem:[%s20 + $0x128] sm:$0xff]
          %v3204 = vld [vmem:[%s20 + $0x130] sm:$0xff]
          %v3205 = vld [vmem:[%s20 + $0x138] sm:$0xff]
          %v3206 = vld [vmem:[%s20 + $0x140] sm:$0xff]
          %v3207 = vld [vmem:[%s20 + $0x148] sm:$0xff]
          %v3208 = vld [vmem:[%s20 + $0x150] sm:$0xff]
          %v3209 = vld [vmem:[%s20 + $0x158] sm:$0xff]
          %v3210 = vld [vmem:[%s20 + $0x160] sm:$0xff]
          %v3211 = vld [vmem:[%s20 + $0x168] sm:$0xff]
          %v3212 = vld [vmem:[%s20 + $0x170] sm:$0xff]
          %v3213 = vld [vmem:[%s20 + $0x178] sm:$0xff]
          %v3214 = vld [vmem:[%s20 + $0x180] sm:$0xff]
          %v3215 = vld [vmem:[%s20 + $0x188] sm:$0xff]
          %v3216 = vld [vmem:[%s20 + $0x190] sm:$0xff]
          %v3217 = vld [vmem:[%s20 + $0x198] sm:$0xff]
          %v3218 = vld [vmem:[%s20 + $0x1a0] sm:$0xff]
          %v3219 = vld [vmem:[%s20 + $0x1a8] sm:$0xff]
          %v3220 = vld [vmem:[%s20 + $0x1b0] sm:$0xff]
          %v3221 = vld [vmem:[%s20 + $0x1b8] sm:$0xff]
          %v3222 = vld [vmem:[%s20 + $0x1c0] sm:$0xff]
          %v3223 = vld [vmem:[%s20 + $0x1c8] sm:$0xff]
          %v3224 = vld [vmem:[%s20 + $0x1d0] sm:$0xff]
          %v3225 = vld [vmem:[%s20 + $0x1d8] sm:$0xff]
          %v3226 = vld [vmem:[%s20 + $0x1e0] sm:$0xff]
          %v3227 = vld [vmem:[%s20 + $0x1e8] sm:$0xff]
          %v3228 = vld [vmem:[%s20 + $0x1f0] sm:$0xff]
          %v3229 = vld [vmem:[%s20 + $0x1f8] sm:$0xff]
          %v3230 = vld [vmem:[%s21] sm:$0x1]
          %v3232 = vlaneseq
          %v3233 = vshrl.u32 %v3232, 7
          %v3234 = vsub.s32 0, %v3233
          %v3235 = vrot.slane %v3230, %v3234
          %3237 = vmatprep.subr.mxu0 0.0
          %3238 = vmatpush1.msra.mxu0 %v3181
          %3239 = vmatprep.subr.mxu0 0.0
          %3240 = vmatpush1.msra.mxu0 %v3180
          %3241 = vmatprep.subr.mxu0 0.0
          %3242 = vmatpush1.msra.mxu0 %v3179
          %3243 = vmatprep.subr.mxu0 0.0
          %3244 = vmatpush1.msra.mxu0 %v3178
          %3245 = vmatprep.subr.mxu0 0.0
          %3246 = vmatpush1.msra.mxu0 %v3177
          %3247 = vmatprep.subr.mxu0 0.0
          %3248 = vmatpush1.msra.mxu0 %v3176
          %3249 = vmatprep.subr.mxu0 0.0
          %3250 = vmatpush1.msra.mxu0 %v3175
          %3251 = vmatprep.subr.mxu0 0.0
          %3252 = vmatpush1.msra.mxu0 %v3174
          %3253 = vmatprep.subr.mxu0 0.0
          %3254 = vmatpush1.msra.mxu0 %v3173
          %3255 = vmatprep.subr.mxu0 0.0
          %3256 = vmatpush1.msra.mxu0 %v3172
          %3257 = vmatprep.subr.mxu0 0.0
          %3258 = vmatpush1.msra.mxu0 %v3171
          %3259 = vmatprep.subr.mxu0 0.0
          %3260 = vmatpush1.msra.mxu0 %v3170
          %3261 = vmatprep.subr.mxu0 0.0
          %3262 = vmatpush1.msra.mxu0 %v3169
          %3263 = vmatprep.subr.mxu0 0.0
          %3264 = vmatpush1.msra.mxu0 %v3168
          %3265 = vmatprep.subr.mxu0 0.0
          %3266 = vmatpush1.msra.mxu0 %v3167
          %3267 = vmatprep.subr.mxu0 0.0
          %3268 = vmatpush1.msra.mxu0 %v3166
          %3269 = vmatprep.subr.mxu0 0.0
          %3270 = vmatpush2.msra.mxu0 %v3197
          %3271 = vmatprep.subr.mxu0 0.0
          %3272 = vmatpush2.msra.mxu0 %v3196
          %3273 = vmatprep.subr.mxu0 0.0
          %3274 = vmatpush2.msra.mxu0 %v3195
          %3275 = vmatprep.subr.mxu0 0.0
          %3276 = vmatpush2.msra.mxu0 %v3194
          %3277 = vmatprep.subr.mxu0 0.0
          %3278 = vmatpush2.msra.mxu0 %v3193
          %3279 = vmatprep.subr.mxu0 0.0
          %3280 = vmatpush2.msra.mxu0 %v3192
          %3281 = vmatprep.subr.mxu0 0.0
          %3282 = vmatpush2.msra.mxu0 %v3191
          %3283 = vmatprep.subr.mxu0 0.0
          %3284 = vmatpush2.msra.mxu0 %v3190
          %3285 = vmatprep.subr.mxu0 0.0
          %3286 = vmatpush2.msra.mxu0 %v3189
          %3287 = vmatprep.subr.mxu0 0.0
          %3288 = vmatpush2.msra.mxu0 %v3188
          %3289 = vmatprep.subr.mxu0 0.0
          %3290 = vmatpush2.msra.mxu0 %v3187
          %3291 = vmatprep.subr.mxu0 0.0
          %3292 = vmatpush2.msra.mxu0 %v3186
          %3293 = vmatprep.subr.mxu0 0.0
          %3294 = vmatpush2.msra.mxu0 %v3185
          %3295 = vmatprep.subr.mxu0 0.0
          %3296 = vmatpush2.msra.mxu0 %v3184
          %3297 = vmatprep.subr.mxu0 0.0
          %3298 = vmatpush2.msra.mxu0 %v3183
          %3299 = vmatprep.subr.mxu0 0.0
          %3300 = vmatpush2.msra.mxu0 %v3182
          %3301 = vmatprep.mubr.f32.mxu0 %v3163
          %3302 = vmatmul.mubr.f32.gmra.mxu0 %v3162
          %v3303 = vpop.f32.mrf.mxu0
          %v3304 = vadd.f32 %v3235, %v3303
          %v3305 = vpop.f32.mrf.mxu0
          %3306 = vdwg.mxu0
          %3307 = vmatprep.subr.mxu0 0.0
          %3308 = vmatpush1.msra.mxu0 %v3213
          %3309 = vmatprep.subr.mxu0 0.0
          %3310 = vmatpush1.msra.mxu0 %v3212
          %3311 = vmatprep.subr.mxu0 0.0
          %3312 = vmatpush1.msra.mxu0 %v3211
          %3313 = vmatprep.subr.mxu0 0.0
          %3314 = vmatpush1.msra.mxu0 %v3210
          %3315 = vmatprep.subr.mxu0 0.0
          %3316 = vmatpush1.msra.mxu0 %v3209
          %3317 = vmatprep.subr.mxu0 0.0
          %3318 = vmatpush1.msra.mxu0 %v3208
          %3319 = vmatprep.subr.mxu0 0.0
          %3320 = vmatpush1.msra.mxu0 %v3207
          %3321 = vmatprep.subr.mxu0 0.0
          %3322 = vmatpush1.msra.mxu0 %v3206
          %3323 = vmatprep.subr.mxu0 0.0
          %3324 = vmatpush1.msra.mxu0 %v3205
          %3325 = vmatprep.subr.mxu0 0.0
          %3326 = vmatpush1.msra.mxu0 %v3204
          %3327 = vmatprep.subr.mxu0 0.0
          %3328 = vmatpush1.msra.mxu0 %v3203
          %3329 = vmatprep.subr.mxu0 0.0
          %3330 = vmatpush1.msra.mxu0 %v3202
          %3331 = vmatprep.subr.mxu0 0.0
          %3332 = vmatpush1.msra.mxu0 %v3201
          %3333 = vmatprep.subr.mxu0 0.0
          %3334 = vmatpush1.msra.mxu0 %v3200
          %3335 = vmatprep.subr.mxu0 0.0
          %3336 = vmatpush1.msra.mxu0 %v3199
          %3337 = vmatprep.subr.mxu0 0.0
          %3338 = vmatpush1.msra.mxu0 %v3198
          %3339 = vmatprep.subr.mxu0 0.0
          %3340 = vmatpush2.msra.mxu0 %v3229
          %3341 = vmatprep.subr.mxu0 0.0
          %3342 = vmatpush2.msra.mxu0 %v3228
          %3343 = vmatprep.subr.mxu0 0.0
          %3344 = vmatpush2.msra.mxu0 %v3227
          %3345 = vmatprep.subr.mxu0 0.0
          %3346 = vmatpush2.msra.mxu0 %v3226
          %3347 = vmatprep.subr.mxu0 0.0
          %3348 = vmatpush2.msra.mxu0 %v3225
          %3349 = vmatprep.subr.mxu0 0.0
          %3350 = vmatpush2.msra.mxu0 %v3224
          %3351 = vmatprep.subr.mxu0 0.0
          %3352 = vmatpush2.msra.mxu0 %v3223
          %3353 = vmatprep.subr.mxu0 0.0
          %3354 = vmatpush2.msra.mxu0 %v3222
          %3355 = vmatprep.subr.mxu0 0.0
          %3356 = vmatpush2.msra.mxu0 %v3221
          %3357 = vmatprep.subr.mxu0 0.0
          %3358 = vmatpush2.msra.mxu0 %v3220
          %3359 = vmatprep.subr.mxu0 0.0
          %3360 = vmatpush2.msra.mxu0 %v3219
          %3361 = vmatprep.subr.mxu0 0.0
          %3362 = vmatpush2.msra.mxu0 %v3218
          %3363 = vmatprep.subr.mxu0 0.0
          %3364 = vmatpush2.msra.mxu0 %v3217
          %3365 = vmatprep.subr.mxu0 0.0
          %3366 = vmatpush2.msra.mxu0 %v3216
          %3367 = vmatprep.subr.mxu0 0.0
          %3368 = vmatpush2.msra.mxu0 %v3215
          %3369 = vmatprep.subr.mxu0 0.0
          %3370 = vmatpush2.msra.mxu0 %v3214
          %3371 = vmatprep.mubr.f32.mxu0 %v3165
          %3372 = vmatmul.mubr.f32.gmra.mxu0 %v3164
          %v3373 = vpop.f32.mrf.mxu0
          %v3374 = vadd.f32 %v3304, %v3373
          %v3375 = vpop.f32.mrf.mxu0
          %3376 = vdwg.mxu0
          %vm3377 = vcmask 25600
          %3378 = vst.msk [vmem:[#allocation6] sm:$0x3] %vm3377, %v3374
        $region139: #{fwd.1} parent=126 // pred_fallthru
          _
        // Predicated region
        $region140: #{fwd.1} parent=126 // pred_check
          %p3379 = pneg %p526
        $region141: #{fwd.1} parent=126 // pred_check_branch
          %3381 = sbr.rel (%p3379) target = $region143
        $region142: #{fwd.1} parent=126 // pred_region
          %s3383 = ssub.s32 32, 32
          %3384 = vsyncadd [#allocation7], %s3383
          %s3386 = sshll.u32 [#allocation6], 4
          %s3387 = int_to_ptr.vmem [resolvable:$true] %s3386
          %3389 = dma.vmem_to_hbm [thread:$0]  %s3387, 32, %s22, [#allocation7]
        $region143: #{fwd.1} parent=126 // pred_fallthru
          _
        // Predicated region
        $region144: #{fwd.1} parent=126 // pred_check
          %p3390 = pneg %p547
        $region145: #{fwd.1} parent=126 // pred_check_branch
          %3392 = sbr.rel (%p3390) target = $region147
        $region146: #{fwd.1} parent=126 // pred_region
          _
        $region147: #{fwd.1} parent=126 // pred_fallthru
          _
        // Predicated region
        $region148: #{fwd.1} parent=126 // pred_check
          %p3393 = pneg %p526
        $region149: #{fwd.1} parent=126 // pred_check_branch
          %3395 = sbr.rel (%p3393) target = $region151
        $region150: #{fwd.1} parent=126 // pred_region
          %3396 = dma.done [#allocation7], 32
        $region151: #{fwd.1} parent=126 // pred_fallthru
          _
        // Predicated region
        $region152: #{fwd.1} parent=126 // pred_check
          %p3397 = pneg %p547
        $region153: #{fwd.1} parent=126 // pred_check_branch
          %3399 = sbr.rel (%p3397) target = $region155
        $region154: #{fwd.1} parent=126 // pred_region
          _
        $region155: #{fwd.1} parent=126 // pred_fallthru
          _
      $region127: #{fwd.1} parent=5 // pred_fallthru
        _
      %p3400 = scmp.le.s32.totalorder 2, %s31
      // Predicated region
      $region156: #{fwd.1} parent=5 // pred_check
        %p3401 = pneg %p3400
      $region157: #{fwd.1} parent=5 // pred_check_branch
        %3403 = sbr.rel (%p3401) target = $region159
      $region158: #{fwd.1} parent=5 // pred_region
        %s3404 = ssub.s32 %s31, 2
      $region159: #{fwd.1} parent=5 // pred_fallthru
        _
    $region6: #{fwd.1} parent=1 // loop_footer
      %s35 = sadd.s32 1, %s31
    $region7: #{fwd.1} parent=1 // loop_footer_branch
      %30 = sbr.rel target = $region3
    $region8: #{fwd.1} parent=1 // loop_exit
      _
    %3405 = vsyncpa [#allocation7], 1
    %s3406 = scalar_lea.sflag [#allocation7], 1
    %3407 = vsyncpa %s3406, 1

</llo_original>
